<compile_context>
chip_gen: v7x
topology: tpu7x:2x2x1
jax: 0.10.0
libtpu: 0.0.40
codegen_flags: <defaults>
</compile_context>

<pallas_src>
import math

import jax
import jax.numpy as jnp
import numpy as np
from jax.experimental import pallas as pl
from jax.experimental.pallas import tpu as pltpu


def _layernorm(x, g, b, eps=1e-5):
    mu = jnp.mean(x, axis=-1, keepdims=True)
    var = jnp.mean((x - mu) ** 2, axis=-1, keepdims=True)
    return (x - mu) / jnp.sqrt(var + eps) * g + b


_GELU_C = math.sqrt(2.0 / math.pi)


def _gelu_tanh(x):
    # tanh-approx GELU: tanh lowers to the EUP slot (otherwise idle), freeing the VALU.
    return 0.5 * x * (1.0 + jnp.tanh(_GELU_C * (x + 0.044715 * x * x * x)))


# ---------------- fused forward kernel (single invocation, everything in VMEM) ----------------
def make_fused_kernel(B, S, H, NH, layer_dims):
    T = B * S

    def kernel(hs4_ref, wqkv_ref, bqkv_ref,
               wo_ref, bo_ref, hm_ref, hmt_ref, ga_ref, ba_ref,
               w1_ref, b1_ref, w2_ref, b2_ref, gf_ref, bf_ref,
               pool_ref, gp_ref, bp_ref,
               cw1_ref, cb1_ref, cw2_ref, cb2_ref, cw3_ref, cb3_ref, cw4_ref, cb4_ref,
               fw_ref, fb_ref, out_ref):
        # --- Stage 1: mean over stacked last-4 hidden layers + fused QKV projection ---
        x = (hs4_ref[0] + hs4_ref[1] + hs4_ref[2] + hs4_ref[3]) * 0.25          # (T, H) f32
        qkv = jnp.dot(x.astype(jnp.bfloat16), wqkv_ref[...],
                      preferred_element_type=jnp.float32) + bqkv_ref[...]        # (T, 3H)

        # --- Stage 2: multi-head self-attention (mix over axis 0 = B; S acts as batch) ---
        q3 = qkv[:, :H].reshape(B, S, H)          # q already scaled (folded into wq/bq)
        k3 = qkv[:, H:2 * H].reshape(B, S, H)
        v3 = qkv[:, 2 * H:].reshape(B, S, H)

        # One batched score matmul for all B*B (l, m) pairs; hm is (H, 128) lane-padded so
        # the output is lane-dense (no masked stores, full MXU N).
        # TODO(synk): this spends H MACs per score where only head_dim are nonzero; fine at
        # B=2,S=8 (MXU idle) but switch to a per-head contraction if B/S grow.
        NHP = hm_ref.shape[1]
        prod = (q3[:, None, :, :] * k3[None, :, :, :]).reshape(B * B * S, H)
        scores = jnp.dot(prod.astype(jnp.bfloat16), hm_ref[...],
                         preferred_element_type=jnp.float32)
        s4 = scores.reshape(B, B, S, NHP)         # (l, m, s, h)

        # Softmax over the source axis m (axis 1); m is tiny and untiled, reduce by unrolled
        # elementwise ops on (B, S, NHP) slices of the single stacked array.
        mx = s4[:, 0]
        for m in range(1, B):
            mx = jnp.maximum(mx, s4[:, m])
        e = jnp.exp(s4 - mx[:, None])
        den = e[:, 0]
        for m in range(1, B):
            den = den + e[:, m]
        w = e * pl.reciprocal(den, approx=True)[:, None]                         # (B,B,S,NHP)

        # Broadcast per-head weights back to H lanes (zero rows of hmt kill padded heads),
        # then weighted sum over m.
        wf4 = jnp.dot(w.reshape(B * B * S, NHP).astype(jnp.bfloat16), hmt_ref[...],
                      preferred_element_type=jnp.float32).reshape(B, B, S, H)
        attn3 = wf4[:, 0] * v3[0]
        for m in range(1, B):
            attn3 = attn3 + wf4[:, m] * v3[m]
        attn = attn3.reshape(T, H)

        attn = jnp.dot(attn.astype(jnp.bfloat16), wo_ref[...],
                       preferred_element_type=jnp.float32) + bo_ref[...]
        y = _layernorm(x + attn, ga_ref[...], ba_ref[...])                       # (T, H)

        # --- Stage 3: FeedForward block + residual + LayerNorm ---
        h = jnp.dot(y.astype(jnp.bfloat16), w1_ref[...],
                    preferred_element_type=jnp.float32) + b1_ref[...]
        h = _gelu_tanh(h)
        h = jnp.dot(h.astype(jnp.bfloat16), w2_ref[...],
                    preferred_element_type=jnp.float32) + b2_ref[...]
        z = _layernorm(y + h, gf_ref[...], bf_ref[...])                          # (T, H)

        # --- Stage 4: mean-pool (matmul vs averaging matrix) + LN + classifier MLP + sigmoid ---
        pooled = jnp.dot(pool_ref[...], z.astype(jnp.bfloat16),
                         preferred_element_type=jnp.float32)                     # (B, H)
        xc = _layernorm(pooled, gp_ref[...], bp_ref[...])
        layers = ((cw1_ref, cb1_ref), (cw2_ref, cb2_ref), (cw3_ref, cb3_ref), (cw4_ref, cb4_ref))
        for (w_r, b_r), (din, dout) in zip(layers, layer_dims):
            residual = xc
            yy = jnp.dot(xc.astype(jnp.bfloat16), w_r[...],
                         preferred_element_type=jnp.float32) + b_r[...]
            yy = jnp.maximum(yy, 0.0)                                            # ReLU
            if din == dout:                                                      # LOGICAL dims
                yy = yy + residual
            xc = yy
        logits = jnp.dot(xc.astype(jnp.bfloat16), fw_ref[...],
                         preferred_element_type=jnp.float32) + fb_ref[...]
        out_ref[...] = pl.reciprocal(1.0 + jnp.exp(-logits), approx=True)        # sigmoid (EUP)

    return kernel


# ---------------------------------------------------------------------------------------------
def init_params(key, H, NH, A):
    ks = jax.random.split(key, 16)

    def xavier(k, fan_in, fan_out):
        limit = math.sqrt(6.0 / (fan_in + fan_out))
        return jax.random.uniform(k, (fan_in, fan_out), jnp.float32, -limit, limit)

    p = {}
    p["wq"], p["wk"], p["wv"] = (xavier(ks[i], H, H) for i in range(3))
    p["bq"] = jnp.zeros((1, H), jnp.float32)
    p["bk"] = jnp.zeros((1, H), jnp.float32)
    p["bv"] = jnp.zeros((1, H), jnp.float32)
    p["wo"], p["bo"] = xavier(ks[3], H, H), jnp.zeros((1, H), jnp.float32)
    p["ga"], p["ba"] = jnp.ones((1, H), jnp.float32), jnp.zeros((1, H), jnp.float32)
    p["w1"], p["b1"] = xavier(ks[4], H, 4 * H), jnp.zeros((1, 4 * H), jnp.float32)
    p["w2"], p["b2"] = xavier(ks[5], 4 * H, H), jnp.zeros((1, H), jnp.float32)
    p["gf"], p["bf"] = jnp.ones((1, H), jnp.float32), jnp.zeros((1, H), jnp.float32)
    p["gp"], p["bp"] = jnp.ones((1, H), jnp.float32), jnp.zeros((1, H), jnp.float32)
    dims = [(H, 512), (512, 256), (256, 128), (128, 64)]
    for i, (fi, fo) in enumerate(dims, start=1):
        p[f"cw{i}"] = xavier(ks[5 + i], fi, fo)
        p[f"cb{i}"] = jnp.zeros((1, fo), jnp.float32)
    p["fw"], p["fb"] = xavier(ks[10], 64, A), jnp.zeros((1, A), jnp.float32)
    return p


def prepare_kernel_params(p, *, B, S, H, NH, A):
    """One-time host-side parameter transform: fold the q-scale, fuse QKV, build lane-padded
    head-membership and pooling matrices, pad the classifier tail to 128 lanes, and cast
    matmul weights to bf16 (full-rate MXU, halves weight VMEM)."""
    head_dim = H // NH
    scale = 1.0 / math.sqrt(head_dim)
    bf16 = jnp.bfloat16
    kp = {}
    kp["wqkv"] = jnp.concatenate([p["wq"] * scale, p["wk"], p["wv"]], axis=1).astype(bf16)
    kp["bqkv"] = jnp.concatenate([p["bq"] * scale, p["bk"], p["bv"]], axis=1)
    kp["wo"], kp["bo"] = p["wo"].astype(bf16), p["bo"]
    # head-membership padded to 128 lanes: columns NH..127 are zero (and the corresponding
    # zero rows of hmt kill any contribution from the padded heads after softmax)
    NHP = 128
    hm = (jnp.arange(H)[:, None] // head_dim == jnp.arange(NHP)[None, :]).astype(jnp.float32)
    kp["hm"], kp["hmt"] = hm.astype(bf16), hm.T.astype(bf16)
    kp["ga"], kp["ba"] = p["ga"], p["ba"]
    kp["w1"], kp["b1"] = p["w1"].astype(bf16), p["b1"]
    kp["w2"], kp["b2"] = p["w2"].astype(bf16), p["b2"]
    kp["gf"], kp["bf"] = p["gf"], p["bf"]
    kp["pool"] = (jnp.repeat(jnp.eye(B, dtype=jnp.float32), S, axis=1) / S).astype(bf16)  # (B, B*S)
    kp["gp"], kp["bp"] = p["gp"], p["bp"]
    for i in range(1, 4):
        kp[f"cw{i}"], kp[f"cb{i}"] = p[f"cw{i}"].astype(bf16), p[f"cb{i}"]
    # pad the 128->64 layer and the 64->A final layer out to 128 lanes; wrapper slices logits to A
    pad_last = 128
    a_pad = max(128, ((A + 127) // 128) * 128)
    cw4 = jnp.zeros((p["cw4"].shape[0], pad_last), jnp.float32).at[:, :p["cw4"].shape[1]].set(p["cw4"])
    cb4 = jnp.zeros((1, pad_last), jnp.float32).at[:, :p["cb4"].shape[1]].set(p["cb4"])
    fw = jnp.zeros((pad_last, a_pad), jnp.float32).at[:p["fw"].shape[0], :A].set(p["fw"])
    fb = jnp.zeros((1, a_pad), jnp.float32).at[:, :A].set(p["fb"])
    kp["cw4"], kp["cb4"] = cw4.astype(bf16), cb4
    kp["fw"], kp["fb"] = fw.astype(bf16), fb
    kp["a_pad"] = a_pad
    kp["layer_dims"] = ((H, 512), (512, 256), (256, 128), (128, 64))
    return kp


def _compiler_params(arrays, out_shapes):
    # honest vmem limit: operand footprint + small intermediate headroom, clamped so it stays
    # legal on every gen (v7x has only 64 MiB of VMEM per TensorCore).
    total = sum(int(np.prod(a.shape)) * np.dtype(a.dtype).itemsize
                for a in tuple(arrays) + tuple(out_shapes))
    limit = int(min(2 * total + (4 << 20), 48 << 20))
    return pltpu.CompilerParams(vmem_limit_bytes=limit)


def aspect_classifier_forward(hs4_lth, kp, *, B, S, H, NH, A):
    """hs4_lth: [4, B*S, H] stacked last-4 BERT hidden states; kp: prepare_kernel_params() output."""
    f32 = jnp.float32
    vmem_full = pl.BlockSpec(memory_space=pltpu.MemorySpace.VMEM)

    ins = (hs4_lth, kp["wqkv"], kp["bqkv"],
           kp["wo"], kp["bo"], kp["hm"], kp["hmt"], kp["ga"], kp["ba"],
           kp["w1"], kp["b1"], kp["w2"], kp["b2"], kp["gf"], kp["bf"],
           kp["pool"], kp["gp"], kp["bp"],
           kp["cw1"], kp["cb1"], kp["cw2"], kp["cb2"], kp["cw3"], kp["cb3"],
           kp["cw4"], kp["cb4"], kp["fw"], kp["fb"])
    out_shape = jax.ShapeDtypeStruct((B, kp["a_pad"]), f32)

    probs_padded = pl.pallas_call(
        make_fused_kernel(B, S, H, NH, kp["layer_dims"]),
        in_specs=[vmem_full] * len(ins),
        out_specs=vmem_full,
        out_shape=out_shape,
        compiler_params=_compiler_params(ins, (out_shape,)),
    )(*ins)
    return probs_padded[:, :A]


def reference_forward(hs4_b4sh, params, *, B, S, H, NH, A):
    """Pure-JAX reference mirroring the PyTorch forward (eval mode, f32, exact GELU/softmax)."""
    head_dim = H // NH
    x = jnp.mean(hs4_b4sh, axis=1)                                    # (B, S, H)
    q = (x @ params["wq"] + params["bq"]) * (head_dim ** -0.5)
    k = x @ params["wk"] + params["bk"]
    v = x @ params["wv"] + params["bv"]
    q = q.reshape(B, S, NH, head_dim)
    k = k.reshape(B, S, NH, head_dim)
    v = v.reshape(B, S, NH, head_dim)
    sc = jnp.einsum("lnhd,mnhd->nhlm", q, k)
    w = jax.nn.softmax(sc, axis=-1)
    attn = jnp.einsum("nhlm,mnhd->lnhd", w, v).reshape(B, S, H)
    attn = attn @ params["wo"] + params["bo"]
    x = _layernorm(x + attn, params["ga"], params["ba"])
    h = x @ params["w1"] + params["b1"]
    h = 0.5 * h * (1.0 + jax.lax.erf(h / jnp.sqrt(2.0)))              # exact GELU
    h = h @ params["w2"] + params["b2"]
    x = _layernorm(x + h, params["gf"], params["bf"])
    pooled = _layernorm(jnp.mean(x, axis=1), params["gp"], params["bp"])
    zz = pooled
    for i in range(1, 5):
        residual = zz
        yy = jnp.maximum(zz @ params[f"cw{i}"] + params[f"cb{i}"], 0.0)
        if yy.shape == residual.shape:
            yy = yy + residual
        zz = yy
    return jax.nn.sigmoid(zz @ params["fw"] + params["fb"])


if __name__ == "__main__":
    # batch, seq, hidden (scaled down from 768 but lane-aligned), heads, aspects
    B, S, H, NH, A = 2, 8, 128, 8, 8
    key = jax.random.PRNGKey(0)
    k_hs, k_p = jax.random.split(key)

    # TODO(synk): BertModel.from_pretrained (checkpoint load + transformer stack) has no in-script
    # equivalent; the kernel consumes synthetic "last four hidden states" of shape (B, 4, S, H).
    hs4 = jax.random.normal(k_hs, (B, 4, S, H), jnp.float32)
    params = init_params(k_p, H, NH, A)
    kparams = prepare_kernel_params(params, B=B, S=S, H=H, NH=NH, A=A)

    # glue: (B, 4, S, H) -> (4, B*S, H) kernel layout (layer, token, hidden)
    hs4_kernel = jnp.transpose(hs4, (1, 0, 2, 3)).reshape(4, B * S, H)

    out = aspect_classifier_forward(hs4_kernel, kparams, B=B, S=S, H=H, NH=NH, A=A)
    out = jax.block_until_ready(out)

    ref = reference_forward(hs4, params, B=B, S=S, H=H, NH=NH, A=A)
    np.testing.assert_allclose(np.asarray(out), np.asarray(ref), rtol=5e-2, atol=5e-2)
    print("KERNEL_OK")
</pallas_src>

<mosaic_0001>
module attributes {stable_mosaic.version = 11 : i64} {
  func.func @kernel(%arg0: memref<4x16x128xf32, #tpu.memory_space<vmem>>, %arg1: memref<128x384xbf16, #tpu.memory_space<vmem>>, %arg2: memref<1x384xf32, #tpu.memory_space<vmem>>, %arg3: memref<128x128xbf16, #tpu.memory_space<vmem>>, %arg4: memref<1x128xf32, #tpu.memory_space<vmem>>, %arg5: memref<128x128xbf16, #tpu.memory_space<vmem>>, %arg6: memref<128x128xbf16, #tpu.memory_space<vmem>>, %arg7: memref<1x128xf32, #tpu.memory_space<vmem>>, %arg8: memref<1x128xf32, #tpu.memory_space<vmem>>, %arg9: memref<128x512xbf16, #tpu.memory_space<vmem>>, %arg10: memref<1x512xf32, #tpu.memory_space<vmem>>, %arg11: memref<512x128xbf16, #tpu.memory_space<vmem>>, %arg12: memref<1x128xf32, #tpu.memory_space<vmem>>, %arg13: memref<1x128xf32, #tpu.memory_space<vmem>>, %arg14: memref<1x128xf32, #tpu.memory_space<vmem>>, %arg15: memref<2x16xbf16, #tpu.memory_space<vmem>>, %arg16: memref<1x128xf32, #tpu.memory_space<vmem>>, %arg17: memref<1x128xf32, #tpu.memory_space<vmem>>, %arg18: memref<128x512xbf16, #tpu.memory_space<vmem>>, %arg19: memref<1x512xf32, #tpu.memory_space<vmem>>, %arg20: memref<512x256xbf16, #tpu.memory_space<vmem>>, %arg21: memref<1x256xf32, #tpu.memory_space<vmem>>, %arg22: memref<256x128xbf16, #tpu.memory_space<vmem>>, %arg23: memref<1x128xf32, #tpu.memory_space<vmem>>, %arg24: memref<128x128xbf16, #tpu.memory_space<vmem>>, %arg25: memref<1x128xf32, #tpu.memory_space<vmem>>, %arg26: memref<128x128xbf16, #tpu.memory_space<vmem>>, %arg27: memref<1x128xf32, #tpu.memory_space<vmem>>, %arg28: memref<2x128xf32, #tpu.memory_space<vmem>>) attributes {dimension_semantics = [], scalar_prefetch = 0 : i64, scratch_operands = 0 : i64, tpu.core_type = #tpu.core_type<tc>} {
    %c0 = arith.constant 0 : index
    %c0_0 = arith.constant 0 : index
    %c0_1 = arith.constant 0 : index
    %0 = vector.load %arg0[%c0, %c0_0, %c0_1] : memref<4x16x128xf32, #tpu.memory_space<vmem>>, vector<1x16x128xf32>
    %1 = vector.shape_cast %0 : vector<1x16x128xf32> to vector<16x128xf32>
    %c1 = arith.constant 1 : index
    %c0_2 = arith.constant 0 : index
    %c0_3 = arith.constant 0 : index
    %2 = vector.load %arg0[%c1, %c0_2, %c0_3] : memref<4x16x128xf32, #tpu.memory_space<vmem>>, vector<1x16x128xf32>
    %3 = vector.shape_cast %2 : vector<1x16x128xf32> to vector<16x128xf32>
    %4 = arith.addf %1, %3 : vector<16x128xf32>
    %c2 = arith.constant 2 : index
    %c0_4 = arith.constant 0 : index
    %c0_5 = arith.constant 0 : index
    %5 = vector.load %arg0[%c2, %c0_4, %c0_5] : memref<4x16x128xf32, #tpu.memory_space<vmem>>, vector<1x16x128xf32>
    %6 = vector.shape_cast %5 : vector<1x16x128xf32> to vector<16x128xf32>
    %7 = arith.addf %4, %6 : vector<16x128xf32>
    %c3 = arith.constant 3 : index
    %c0_6 = arith.constant 0 : index
    %c0_7 = arith.constant 0 : index
    %8 = vector.load %arg0[%c3, %c0_6, %c0_7] : memref<4x16x128xf32, #tpu.memory_space<vmem>>, vector<1x16x128xf32>
    %9 = vector.shape_cast %8 : vector<1x16x128xf32> to vector<16x128xf32>
    %10 = arith.addf %7, %9 : vector<16x128xf32>
    %cst = arith.constant 2.500000e-01 : f32
    %11 = vector.broadcast %cst : f32 to vector<16x128xf32>
    %12 = arith.mulf %10, %11 : vector<16x128xf32>
    %13 = arith.truncf %12 : vector<16x128xf32> to vector<16x128xbf16>
    %c0_8 = arith.constant 0 : index
    %c0_9 = arith.constant 0 : index
    %14 = vector.load %arg1[%c0_8, %c0_9] : memref<128x384xbf16, #tpu.memory_space<vmem>>, vector<128x384xbf16>
    %cst_10 = arith.constant dense<0.000000e+00> : vector<16x384xf32>
    %15 = tpu.matmul %13, %14, %cst_10 {dimension_numbers = #tpu.dot_dimension_numbers<[1], [0], [0], [1], [0, 0, 1, 1], [], []>} : vector<16x128xbf16>, vector<128x384xbf16>, vector<16x384xf32> -> vector<16x384xf32>
    %c0_11 = arith.constant 0 : index
    %c0_12 = arith.constant 0 : index
    %16 = vector.load %arg2[%c0_11, %c0_12] : memref<1x384xf32, #tpu.memory_space<vmem>>, vector<1x384xf32>
    %17 = vector.broadcast %16 : vector<1x384xf32> to vector<16x384xf32>
    %18 = arith.addf %15, %17 : vector<16x384xf32>
    %19 = vector.extract_strided_slice %18 {offsets = [0, 0], sizes = [16, 128], strides = [1, 1]} : vector<16x384xf32> to vector<16x128xf32>
    %20 = vector.shape_cast %19 : vector<16x128xf32> to vector<2x8x128xf32>
    %21 = vector.extract_strided_slice %18 {offsets = [0, 128], sizes = [16, 128], strides = [1, 1]} : vector<16x384xf32> to vector<16x128xf32>
    %22 = vector.shape_cast %21 : vector<16x128xf32> to vector<2x8x128xf32>
    %23 = vector.extract_strided_slice %18 {offsets = [0, 256], sizes = [16, 128], strides = [1, 1]} : vector<16x384xf32> to vector<16x128xf32>
    %24 = vector.shape_cast %23 : vector<16x128xf32> to vector<2x8x128xf32>
    %25 = vector.shape_cast %20 : vector<2x8x128xf32> to vector<2x1x8x128xf32>
    %26 = vector.shape_cast %22 : vector<2x8x128xf32> to vector<1x2x8x128xf32>
    %27 = vector.broadcast %25 : vector<2x1x8x128xf32> to vector<2x2x8x128xf32>
    %28 = vector.broadcast %26 : vector<1x2x8x128xf32> to vector<2x2x8x128xf32>
    %29 = arith.mulf %27, %28 : vector<2x2x8x128xf32>
    %30 = vector.shape_cast %29 : vector<2x2x8x128xf32> to vector<32x128xf32>
    %31 = arith.truncf %30 : vector<32x128xf32> to vector<32x128xbf16>
    %c0_13 = arith.constant 0 : index
    %c0_14 = arith.constant 0 : index
    %32 = vector.load %arg5[%c0_13, %c0_14] : memref<128x128xbf16, #tpu.memory_space<vmem>>, vector<128x128xbf16>
    %cst_15 = arith.constant dense<0.000000e+00> : vector<32x128xf32>
    %33 = tpu.matmul %31, %32, %cst_15 {dimension_numbers = #tpu.dot_dimension_numbers<[1], [0], [0], [1], [0, 0, 1, 1], [], []>} : vector<32x128xbf16>, vector<128x128xbf16>, vector<32x128xf32> -> vector<32x128xf32>
    %34 = vector.shape_cast %33 : vector<32x128xf32> to vector<2x2x8x128xf32>
    %35 = vector.extract_strided_slice %34 {offsets = [0, 0, 0, 0], sizes = [2, 1, 8, 128], strides = [1, 1, 1, 1]} : vector<2x2x8x128xf32> to vector<2x1x8x128xf32>
    %36 = vector.shape_cast %35 : vector<2x1x8x128xf32> to vector<2x8x128xf32>
    %37 = vector.extract_strided_slice %34 {offsets = [0, 1, 0, 0], sizes = [2, 1, 8, 128], strides = [1, 1, 1, 1]} : vector<2x2x8x128xf32> to vector<2x1x8x128xf32>
    %38 = vector.shape_cast %37 : vector<2x1x8x128xf32> to vector<2x8x128xf32>
    %39 = arith.maximumf %36, %38 : vector<2x8x128xf32>
    %40 = vector.shape_cast %39 : vector<2x8x128xf32> to vector<2x1x8x128xf32>
    %41 = vector.broadcast %40 : vector<2x1x8x128xf32> to vector<2x2x8x128xf32>
    %42 = arith.subf %34, %41 : vector<2x2x8x128xf32>
    %43 = math.exp %42 : vector<2x2x8x128xf32>
    %44 = vector.extract_strided_slice %43 {offsets = [0, 0, 0, 0], sizes = [2, 1, 8, 128], strides = [1, 1, 1, 1]} : vector<2x2x8x128xf32> to vector<2x1x8x128xf32>
    %45 = vector.shape_cast %44 : vector<2x1x8x128xf32> to vector<2x8x128xf32>
    %46 = vector.extract_strided_slice %43 {offsets = [0, 1, 0, 0], sizes = [2, 1, 8, 128], strides = [1, 1, 1, 1]} : vector<2x2x8x128xf32> to vector<2x1x8x128xf32>
    %47 = vector.shape_cast %46 : vector<2x1x8x128xf32> to vector<2x8x128xf32>
    %48 = arith.addf %45, %47 : vector<2x8x128xf32>
    %49 = tpu.reciprocal %48 {approx = true} : vector<2x8x128xf32> -> vector<2x8x128xf32>
    %50 = vector.shape_cast %49 : vector<2x8x128xf32> to vector<2x1x8x128xf32>
    %51 = vector.broadcast %50 : vector<2x1x8x128xf32> to vector<2x2x8x128xf32>
    %52 = arith.mulf %43, %51 : vector<2x2x8x128xf32>
    %53 = vector.shape_cast %52 : vector<2x2x8x128xf32> to vector<32x128xf32>
    %54 = arith.truncf %53 : vector<32x128xf32> to vector<32x128xbf16>
    %c0_16 = arith.constant 0 : index
    %c0_17 = arith.constant 0 : index
    %55 = vector.load %arg6[%c0_16, %c0_17] : memref<128x128xbf16, #tpu.memory_space<vmem>>, vector<128x128xbf16>
    %cst_18 = arith.constant dense<0.000000e+00> : vector<32x128xf32>
    %56 = tpu.matmul %54, %55, %cst_18 {dimension_numbers = #tpu.dot_dimension_numbers<[1], [0], [0], [1], [0, 0, 1, 1], [], []>} : vector<32x128xbf16>, vector<128x128xbf16>, vector<32x128xf32> -> vector<32x128xf32>
    %57 = vector.shape_cast %56 : vector<32x128xf32> to vector<2x2x8x128xf32>
    %58 = vector.extract_strided_slice %57 {offsets = [0, 0, 0, 0], sizes = [2, 1, 8, 128], strides = [1, 1, 1, 1]} : vector<2x2x8x128xf32> to vector<2x1x8x128xf32>
    %59 = vector.shape_cast %58 : vector<2x1x8x128xf32> to vector<2x8x128xf32>
    %60 = vector.extract_strided_slice %24 {offsets = [0, 0, 0], sizes = [1, 8, 128], strides = [1, 1, 1]} : vector<2x8x128xf32> to vector<1x8x128xf32>
    %61 = vector.shape_cast %60 : vector<1x8x128xf32> to vector<8x128xf32>
    %62 = vector.shape_cast %61 : vector<8x128xf32> to vector<1x8x128xf32>
    %63 = vector.broadcast %62 : vector<1x8x128xf32> to vector<2x8x128xf32>
    %64 = arith.mulf %59, %63 : vector<2x8x128xf32>
    %65 = vector.extract_strided_slice %57 {offsets = [0, 1, 0, 0], sizes = [2, 1, 8, 128], strides = [1, 1, 1, 1]} : vector<2x2x8x128xf32> to vector<2x1x8x128xf32>
    %66 = vector.shape_cast %65 : vector<2x1x8x128xf32> to vector<2x8x128xf32>
    %67 = vector.extract_strided_slice %24 {offsets = [1, 0, 0], sizes = [1, 8, 128], strides = [1, 1, 1]} : vector<2x8x128xf32> to vector<1x8x128xf32>
    %68 = vector.shape_cast %67 : vector<1x8x128xf32> to vector<8x128xf32>
    %69 = vector.shape_cast %68 : vector<8x128xf32> to vector<1x8x128xf32>
    %70 = vector.broadcast %69 : vector<1x8x128xf32> to vector<2x8x128xf32>
    %71 = arith.mulf %66, %70 : vector<2x8x128xf32>
    %72 = arith.addf %64, %71 : vector<2x8x128xf32>
    %73 = vector.shape_cast %72 : vector<2x8x128xf32> to vector<16x128xf32>
    %74 = arith.truncf %73 : vector<16x128xf32> to vector<16x128xbf16>
    %c0_19 = arith.constant 0 : index
    %c0_20 = arith.constant 0 : index
    %75 = vector.load %arg3[%c0_19, %c0_20] : memref<128x128xbf16, #tpu.memory_space<vmem>>, vector<128x128xbf16>
    %cst_21 = arith.constant dense<0.000000e+00> : vector<16x128xf32>
    %76 = tpu.matmul %74, %75, %cst_21 {dimension_numbers = #tpu.dot_dimension_numbers<[1], [0], [0], [1], [0, 0, 1, 1], [], []>} : vector<16x128xbf16>, vector<128x128xbf16>, vector<16x128xf32> -> vector<16x128xf32>
    %c0_22 = arith.constant 0 : index
    %c0_23 = arith.constant 0 : index
    %77 = vector.load %arg4[%c0_22, %c0_23] : memref<1x128xf32, #tpu.memory_space<vmem>>, vector<1x128xf32>
    %78 = vector.broadcast %77 : vector<1x128xf32> to vector<16x128xf32>
    %79 = arith.addf %76, %78 : vector<16x128xf32>
    %80 = arith.addf %12, %79 : vector<16x128xf32>
    %c0_24 = arith.constant 0 : index
    %c0_25 = arith.constant 0 : index
    %81 = vector.load %arg7[%c0_24, %c0_25] : memref<1x128xf32, #tpu.memory_space<vmem>>, vector<1x128xf32>
    %c0_26 = arith.constant 0 : index
    %c0_27 = arith.constant 0 : index
    %82 = vector.load %arg8[%c0_26, %c0_27] : memref<1x128xf32, #tpu.memory_space<vmem>>, vector<1x128xf32>
    %cst_28 = arith.constant dense<0.000000e+00> : vector<16xf32>
    %83 = vector.multi_reduction <add>, %80, %cst_28 [1] : vector<16x128xf32> to vector<16xf32>
    %84 = vector.shape_cast %83 : vector<16xf32> to vector<16x1xf32>
    %cst_29 = arith.constant 1.280000e+02 : f32
    %85 = vector.broadcast %cst_29 : f32 to vector<16x1xf32>
    %86 = arith.divf %84, %85 : vector<16x1xf32>
    %87 = vector.broadcast %86 : vector<16x1xf32> to vector<16x128xf32>
    %88 = arith.subf %80, %87 : vector<16x128xf32>
    %89 = arith.mulf %88, %88 : vector<16x128xf32>
    %cst_30 = arith.constant dense<0.000000e+00> : vector<16xf32>
    %90 = vector.multi_reduction <add>, %89, %cst_30 [1] : vector<16x128xf32> to vector<16xf32>
    %91 = vector.shape_cast %90 : vector<16xf32> to vector<16x1xf32>
    %cst_31 = arith.constant 1.280000e+02 : f32
    %92 = vector.broadcast %cst_31 : f32 to vector<16x1xf32>
    %93 = arith.divf %91, %92 : vector<16x1xf32>
    %94 = vector.broadcast %86 : vector<16x1xf32> to vector<16x128xf32>
    %95 = arith.subf %80, %94 : vector<16x128xf32>
    %cst_32 = arith.constant 9.99999974E-6 : f32
    %96 = vector.broadcast %cst_32 : f32 to vector<16x1xf32>
    %97 = arith.addf %93, %96 : vector<16x1xf32>
    %98 = math.sqrt %97 : vector<16x1xf32>
    %99 = vector.broadcast %98 : vector<16x1xf32> to vector<16x128xf32>
    %100 = arith.divf %95, %99 : vector<16x128xf32>
    %101 = vector.broadcast %81 : vector<1x128xf32> to vector<16x128xf32>
    %102 = arith.mulf %100, %101 : vector<16x128xf32>
    %103 = vector.broadcast %82 : vector<1x128xf32> to vector<16x128xf32>
    %104 = arith.addf %102, %103 : vector<16x128xf32>
    %105 = arith.truncf %104 : vector<16x128xf32> to vector<16x128xbf16>
    %c0_33 = arith.constant 0 : index
    %c0_34 = arith.constant 0 : index
    %106 = vector.load %arg9[%c0_33, %c0_34] : memref<128x512xbf16, #tpu.memory_space<vmem>>, vector<128x512xbf16>
    %cst_35 = arith.constant dense<0.000000e+00> : vector<16x512xf32>
    %107 = tpu.matmul %105, %106, %cst_35 {dimension_numbers = #tpu.dot_dimension_numbers<[1], [0], [0], [1], [0, 0, 1, 1], [], []>} : vector<16x128xbf16>, vector<128x512xbf16>, vector<16x512xf32> -> vector<16x512xf32>
    %c0_36 = arith.constant 0 : index
    %c0_37 = arith.constant 0 : index
    %108 = vector.load %arg10[%c0_36, %c0_37] : memref<1x512xf32, #tpu.memory_space<vmem>>, vector<1x512xf32>
    %109 = vector.broadcast %108 : vector<1x512xf32> to vector<16x512xf32>
    %110 = arith.addf %107, %109 : vector<16x512xf32>
    %cst_38 = arith.constant 5.000000e-01 : f32
    %111 = vector.broadcast %cst_38 : f32 to vector<16x512xf32>
    %112 = arith.mulf %111, %110 : vector<16x512xf32>
    %cst_39 = arith.constant 4.471500e-02 : f32
    %113 = vector.broadcast %cst_39 : f32 to vector<16x512xf32>
    %114 = arith.mulf %113, %110 : vector<16x512xf32>
    %115 = arith.mulf %114, %110 : vector<16x512xf32>
    %116 = arith.mulf %115, %110 : vector<16x512xf32>
    %117 = arith.addf %110, %116 : vector<16x512xf32>
    %cst_40 = arith.constant 0.797884583 : f32
    %118 = vector.broadcast %cst_40 : f32 to vector<16x512xf32>
    %119 = arith.mulf %118, %117 : vector<16x512xf32>
    %120 = math.tanh %119 : vector<16x512xf32>
    %cst_41 = arith.constant 1.000000e+00 : f32
    %121 = vector.broadcast %cst_41 : f32 to vector<16x512xf32>
    %122 = arith.addf %121, %120 : vector<16x512xf32>
    %123 = arith.mulf %112, %122 : vector<16x512xf32>
    %124 = arith.truncf %123 : vector<16x512xf32> to vector<16x512xbf16>
    %c0_42 = arith.constant 0 : index
    %c0_43 = arith.constant 0 : index
    %125 = vector.load %arg11[%c0_42, %c0_43] : memref<512x128xbf16, #tpu.memory_space<vmem>>, vector<512x128xbf16>
    %cst_44 = arith.constant dense<0.000000e+00> : vector<16x128xf32>
    %126 = tpu.matmul %124, %125, %cst_44 {dimension_numbers = #tpu.dot_dimension_numbers<[1], [0], [0], [1], [0, 0, 1, 1], [], []>} : vector<16x512xbf16>, vector<512x128xbf16>, vector<16x128xf32> -> vector<16x128xf32>
    %c0_45 = arith.constant 0 : index
    %c0_46 = arith.constant 0 : index
    %127 = vector.load %arg12[%c0_45, %c0_46] : memref<1x128xf32, #tpu.memory_space<vmem>>, vector<1x128xf32>
    %128 = vector.broadcast %127 : vector<1x128xf32> to vector<16x128xf32>
    %129 = arith.addf %126, %128 : vector<16x128xf32>
    %130 = arith.addf %104, %129 : vector<16x128xf32>
    %c0_47 = arith.constant 0 : index
    %c0_48 = arith.constant 0 : index
    %131 = vector.load %arg13[%c0_47, %c0_48] : memref<1x128xf32, #tpu.memory_space<vmem>>, vector<1x128xf32>
    %c0_49 = arith.constant 0 : index
    %c0_50 = arith.constant 0 : index
    %132 = vector.load %arg14[%c0_49, %c0_50] : memref<1x128xf32, #tpu.memory_space<vmem>>, vector<1x128xf32>
    %cst_51 = arith.constant dense<0.000000e+00> : vector<16xf32>
    %133 = vector.multi_reduction <add>, %130, %cst_51 [1] : vector<16x128xf32> to vector<16xf32>
    %134 = vector.shape_cast %133 : vector<16xf32> to vector<16x1xf32>
    %cst_52 = arith.constant 1.280000e+02 : f32
    %135 = vector.broadcast %cst_52 : f32 to vector<16x1xf32>
    %136 = arith.divf %134, %135 : vector<16x1xf32>
    %137 = vector.broadcast %136 : vector<16x1xf32> to vector<16x128xf32>
    %138 = arith.subf %130, %137 : vector<16x128xf32>
    %139 = arith.mulf %138, %138 : vector<16x128xf32>
    %cst_53 = arith.constant dense<0.000000e+00> : vector<16xf32>
    %140 = vector.multi_reduction <add>, %139, %cst_53 [1] : vector<16x128xf32> to vector<16xf32>
    %141 = vector.shape_cast %140 : vector<16xf32> to vector<16x1xf32>
    %cst_54 = arith.constant 1.280000e+02 : f32
    %142 = vector.broadcast %cst_54 : f32 to vector<16x1xf32>
    %143 = arith.divf %141, %142 : vector<16x1xf32>
    %144 = vector.broadcast %136 : vector<16x1xf32> to vector<16x128xf32>
    %145 = arith.subf %130, %144 : vector<16x128xf32>
    %cst_55 = arith.constant 9.99999974E-6 : f32
    %146 = vector.broadcast %cst_55 : f32 to vector<16x1xf32>
    %147 = arith.addf %143, %146 : vector<16x1xf32>
    %148 = math.sqrt %147 : vector<16x1xf32>
    %149 = vector.broadcast %148 : vector<16x1xf32> to vector<16x128xf32>
    %150 = arith.divf %145, %149 : vector<16x128xf32>
    %151 = vector.broadcast %131 : vector<1x128xf32> to vector<16x128xf32>
    %152 = arith.mulf %150, %151 : vector<16x128xf32>
    %153 = vector.broadcast %132 : vector<1x128xf32> to vector<16x128xf32>
    %154 = arith.addf %152, %153 : vector<16x128xf32>
    %c0_56 = arith.constant 0 : index
    %c0_57 = arith.constant 0 : index
    %155 = vector.load %arg15[%c0_56, %c0_57] : memref<2x16xbf16, #tpu.memory_space<vmem>>, vector<2x16xbf16>
    %156 = arith.truncf %154 : vector<16x128xf32> to vector<16x128xbf16>
    %cst_58 = arith.constant dense<0.000000e+00> : vector<2x128xf32>
    %157 = tpu.matmul %155, %156, %cst_58 {dimension_numbers = #tpu.dot_dimension_numbers<[1], [0], [0], [1], [0, 0, 1, 1], [], []>} : vector<2x16xbf16>, vector<16x128xbf16>, vector<2x128xf32> -> vector<2x128xf32>
    %c0_59 = arith.constant 0 : index
    %c0_60 = arith.constant 0 : index
    %158 = vector.load %arg16[%c0_59, %c0_60] : memref<1x128xf32, #tpu.memory_space<vmem>>, vector<1x128xf32>
    %c0_61 = arith.constant 0 : index
    %c0_62 = arith.constant 0 : index
    %159 = vector.load %arg17[%c0_61, %c0_62] : memref<1x128xf32, #tpu.memory_space<vmem>>, vector<1x128xf32>
    %cst_63 = arith.constant dense<0.000000e+00> : vector<2xf32>
    %160 = vector.multi_reduction <add>, %157, %cst_63 [1] : vector<2x128xf32> to vector<2xf32>
    %161 = vector.shape_cast %160 : vector<2xf32> to vector<2x1xf32>
    %cst_64 = arith.constant 1.280000e+02 : f32
    %162 = vector.broadcast %cst_64 : f32 to vector<2x1xf32>
    %163 = arith.divf %161, %162 : vector<2x1xf32>
    %164 = vector.broadcast %163 : vector<2x1xf32> to vector<2x128xf32>
    %165 = arith.subf %157, %164 : vector<2x128xf32>
    %166 = arith.mulf %165, %165 : vector<2x128xf32>
    %cst_65 = arith.constant dense<0.000000e+00> : vector<2xf32>
    %167 = vector.multi_reduction <add>, %166, %cst_65 [1] : vector<2x128xf32> to vector<2xf32>
    %168 = vector.shape_cast %167 : vector<2xf32> to vector<2x1xf32>
    %cst_66 = arith.constant 1.280000e+02 : f32
    %169 = vector.broadcast %cst_66 : f32 to vector<2x1xf32>
    %170 = arith.divf %168, %169 : vector<2x1xf32>
    %171 = vector.broadcast %163 : vector<2x1xf32> to vector<2x128xf32>
    %172 = arith.subf %157, %171 : vector<2x128xf32>
    %cst_67 = arith.constant 9.99999974E-6 : f32
    %173 = vector.broadcast %cst_67 : f32 to vector<2x1xf32>
    %174 = arith.addf %170, %173 : vector<2x1xf32>
    %175 = math.sqrt %174 : vector<2x1xf32>
    %176 = vector.broadcast %175 : vector<2x1xf32> to vector<2x128xf32>
    %177 = arith.divf %172, %176 : vector<2x128xf32>
    %178 = vector.broadcast %158 : vector<1x128xf32> to vector<2x128xf32>
    %179 = arith.mulf %177, %178 : vector<2x128xf32>
    %180 = vector.broadcast %159 : vector<1x128xf32> to vector<2x128xf32>
    %181 = arith.addf %179, %180 : vector<2x128xf32>
    %182 = arith.truncf %181 : vector<2x128xf32> to vector<2x128xbf16>
    %c0_68 = arith.constant 0 : index
    %c0_69 = arith.constant 0 : index
    %183 = vector.load %arg18[%c0_68, %c0_69] : memref<128x512xbf16, #tpu.memory_space<vmem>>, vector<128x512xbf16>
    %cst_70 = arith.constant dense<0.000000e+00> : vector<2x512xf32>
    %184 = tpu.matmul %182, %183, %cst_70 {dimension_numbers = #tpu.dot_dimension_numbers<[1], [0], [0], [1], [0, 0, 1, 1], [], []>} : vector<2x128xbf16>, vector<128x512xbf16>, vector<2x512xf32> -> vector<2x512xf32>
    %c0_71 = arith.constant 0 : index
    %c0_72 = arith.constant 0 : index
    %185 = vector.load %arg19[%c0_71, %c0_72] : memref<1x512xf32, #tpu.memory_space<vmem>>, vector<1x512xf32>
    %186 = vector.broadcast %185 : vector<1x512xf32> to vector<2x512xf32>
    %187 = arith.addf %184, %186 : vector<2x512xf32>
    %cst_73 = arith.constant 0.000000e+00 : f32
    %188 = vector.broadcast %cst_73 : f32 to vector<2x512xf32>
    %189 = arith.maximumf %187, %188 : vector<2x512xf32>
    %190 = arith.truncf %189 : vector<2x512xf32> to vector<2x512xbf16>
    %c0_74 = arith.constant 0 : index
    %c0_75 = arith.constant 0 : index
    %191 = vector.load %arg20[%c0_74, %c0_75] : memref<512x256xbf16, #tpu.memory_space<vmem>>, vector<512x256xbf16>
    %cst_76 = arith.constant dense<0.000000e+00> : vector<2x256xf32>
    %192 = tpu.matmul %190, %191, %cst_76 {dimension_numbers = #tpu.dot_dimension_numbers<[1], [0], [0], [1], [0, 0, 1, 1], [], []>} : vector<2x512xbf16>, vector<512x256xbf16>, vector<2x256xf32> -> vector<2x256xf32>
    %c0_77 = arith.constant 0 : index
    %c0_78 = arith.constant 0 : index
    %193 = vector.load %arg21[%c0_77, %c0_78] : memref<1x256xf32, #tpu.memory_space<vmem>>, vector<1x256xf32>
    %194 = vector.broadcast %193 : vector<1x256xf32> to vector<2x256xf32>
    %195 = arith.addf %192, %194 : vector<2x256xf32>
    %cst_79 = arith.constant 0.000000e+00 : f32
    %196 = vector.broadcast %cst_79 : f32 to vector<2x256xf32>
    %197 = arith.maximumf %195, %196 : vector<2x256xf32>
    %198 = arith.truncf %197 : vector<2x256xf32> to vector<2x256xbf16>
    %c0_80 = arith.constant 0 : index
    %c0_81 = arith.constant 0 : index
    %199 = vector.load %arg22[%c0_80, %c0_81] : memref<256x128xbf16, #tpu.memory_space<vmem>>, vector<256x128xbf16>
    %cst_82 = arith.constant dense<0.000000e+00> : vector<2x128xf32>
    %200 = tpu.matmul %198, %199, %cst_82 {dimension_numbers = #tpu.dot_dimension_numbers<[1], [0], [0], [1], [0, 0, 1, 1], [], []>} : vector<2x256xbf16>, vector<256x128xbf16>, vector<2x128xf32> -> vector<2x128xf32>
    %c0_83 = arith.constant 0 : index
    %c0_84 = arith.constant 0 : index
    %201 = vector.load %arg23[%c0_83, %c0_84] : memref<1x128xf32, #tpu.memory_space<vmem>>, vector<1x128xf32>
    %202 = vector.broadcast %201 : vector<1x128xf32> to vector<2x128xf32>
    %203 = arith.addf %200, %202 : vector<2x128xf32>
    %cst_85 = arith.constant 0.000000e+00 : f32
    %204 = vector.broadcast %cst_85 : f32 to vector<2x128xf32>
    %205 = arith.maximumf %203, %204 : vector<2x128xf32>
    %206 = arith.truncf %205 : vector<2x128xf32> to vector<2x128xbf16>
    %c0_86 = arith.constant 0 : index
    %c0_87 = arith.constant 0 : index
    %207 = vector.load %arg24[%c0_86, %c0_87] : memref<128x128xbf16, #tpu.memory_space<vmem>>, vector<128x128xbf16>
    %cst_88 = arith.constant dense<0.000000e+00> : vector<2x128xf32>
    %208 = tpu.matmul %206, %207, %cst_88 {dimension_numbers = #tpu.dot_dimension_numbers<[1], [0], [0], [1], [0, 0, 1, 1], [], []>} : vector<2x128xbf16>, vector<128x128xbf16>, vector<2x128xf32> -> vector<2x128xf32>
    %c0_89 = arith.constant 0 : index
    %c0_90 = arith.constant 0 : index
    %209 = vector.load %arg25[%c0_89, %c0_90] : memref<1x128xf32, #tpu.memory_space<vmem>>, vector<1x128xf32>
    %210 = vector.broadcast %209 : vector<1x128xf32> to vector<2x128xf32>
    %211 = arith.addf %208, %210 : vector<2x128xf32>
    %cst_91 = arith.constant 0.000000e+00 : f32
    %212 = vector.broadcast %cst_91 : f32 to vector<2x128xf32>
    %213 = arith.maximumf %211, %212 : vector<2x128xf32>
    %214 = arith.truncf %213 : vector<2x128xf32> to vector<2x128xbf16>
    %c0_92 = arith.constant 0 : index
    %c0_93 = arith.constant 0 : index
    %215 = vector.load %arg26[%c0_92, %c0_93] : memref<128x128xbf16, #tpu.memory_space<vmem>>, vector<128x128xbf16>
    %cst_94 = arith.constant dense<0.000000e+00> : vector<2x128xf32>
    %216 = tpu.matmul %214, %215, %cst_94 {dimension_numbers = #tpu.dot_dimension_numbers<[1], [0], [0], [1], [0, 0, 1, 1], [], []>} : vector<2x128xbf16>, vector<128x128xbf16>, vector<2x128xf32> -> vector<2x128xf32>
    %c0_95 = arith.constant 0 : index
    %c0_96 = arith.constant 0 : index
    %217 = vector.load %arg27[%c0_95, %c0_96] : memref<1x128xf32, #tpu.memory_space<vmem>>, vector<1x128xf32>
    %218 = vector.broadcast %217 : vector<1x128xf32> to vector<2x128xf32>
    %219 = arith.addf %216, %218 : vector<2x128xf32>
    %cst_97 = arith.constant 0.000000e+00 : f32
    %220 = vector.broadcast %cst_97 : f32 to vector<2x128xf32>
    %221 = arith.subf %220, %219 : vector<2x128xf32>
    %222 = math.exp %221 : vector<2x128xf32>
    %cst_98 = arith.constant 1.000000e+00 : f32
    %223 = vector.broadcast %cst_98 : f32 to vector<2x128xf32>
    %224 = arith.addf %223, %222 : vector<2x128xf32>
    %225 = tpu.reciprocal %224 {approx = true} : vector<2x128xf32> -> vector<2x128xf32>
    %c0_99 = arith.constant 0 : index
    %c0_100 = arith.constant 0 : index
    %226 = vector.load %arg28[%c0_99, %c0_100] : memref<2x128xf32, #tpu.memory_space<vmem>>, vector<2x128xf32>
    tpu.vector_store %arg28[%c0_99, %c0_100], %225 {strides = array<i32>} : memref<2x128xf32, #tpu.memory_space<vmem>>, vector<2x128xf32>,
    return
  }
}

</mosaic_0001>

<llo_original>
// kernel: tpu_custom_call.1
$region0: #{tpu_custom_call.1}
  #allocation0 [shape = 'u32[]', space=smem, size = 0x4, offset = 0x4, fixed_abs, tag = 'smem constant byte address 0x4 - core index']
  #allocation1 [shape = 'u32[144,128]{1,0:T(1,128)}', space=vmem, size = 0x12000, scoped, tag = 'internal scratch']
  %s0 = inlined_call_operand.hbm [shape: f32[4,16,128], index: 0, kind: input, shape index: {}]
  %s1 = inlined_call_operand.hbm [shape: bf16[128,384], index: 1, kind: input, shape index: {}]
  %s2 = inlined_call_operand.vmem [shape: f32[1,384], index: 2, kind: input, shape index: {}]
  %s3 = inlined_call_operand.hbm [shape: bf16[128,128], index: 3, kind: input, shape index: {}]
  %s4 = inlined_call_operand.vmem [shape: f32[1,128], index: 4, kind: input, shape index: {}]
  %s5 = inlined_call_operand.hbm [shape: bf16[128,128], index: 5, kind: input, shape index: {}]
  %s6 = inlined_call_operand.hbm [shape: bf16[128,128], index: 6, kind: input, shape index: {}]
  %s7 = inlined_call_operand.vmem [shape: f32[1,128], index: 7, kind: input, shape index: {}]
  %s8 = inlined_call_operand.vmem [shape: f32[1,128], index: 8, kind: input, shape index: {}]
  %s9 = inlined_call_operand.hbm [shape: bf16[128,512], index: 9, kind: input, shape index: {}]
  %s10 = inlined_call_operand.vmem [shape: f32[1,512], index: 10, kind: input, shape index: {}]
  %s11 = inlined_call_operand.hbm [shape: bf16[512,128], index: 11, kind: input, shape index: {}]
  %s12 = inlined_call_operand.vmem [shape: f32[1,128], index: 12, kind: input, shape index: {}]
  %s13 = inlined_call_operand.vmem [shape: f32[1,128], index: 13, kind: input, shape index: {}]
  %s14 = inlined_call_operand.vmem [shape: f32[1,128], index: 14, kind: input, shape index: {}]
  %s15 = inlined_call_operand.vmem [shape: bf16[2,16], index: 15, kind: input, shape index: {}]
  %s16 = inlined_call_operand.vmem [shape: f32[1,128], index: 16, kind: input, shape index: {}]
  %s17 = inlined_call_operand.vmem [shape: f32[1,128], index: 17, kind: input, shape index: {}]
  %s18 = inlined_call_operand.hbm [shape: bf16[128,512], index: 18, kind: input, shape index: {}]
  %s19 = inlined_call_operand.vmem [shape: f32[1,512], index: 19, kind: input, shape index: {}]
  %s20 = inlined_call_operand.hbm [shape: bf16[512,256], index: 20, kind: input, shape index: {}]
  %s21 = inlined_call_operand.vmem [shape: f32[1,256], index: 21, kind: input, shape index: {}]
  %s22 = inlined_call_operand.hbm [shape: bf16[256,128], index: 22, kind: input, shape index: {}]
  %s23 = inlined_call_operand.vmem [shape: f32[1,128], index: 23, kind: input, shape index: {}]
  %s24 = inlined_call_operand.vmem [shape: bf16[128,128], index: 24, kind: input, shape index: {}]
  %s25 = inlined_call_operand.vmem [shape: f32[1,128], index: 25, kind: input, shape index: {}]
  %s26 = inlined_call_operand.hbm [shape: bf16[128,128], index: 26, kind: input, shape index: {}]
  %s27 = inlined_call_operand.vmem [shape: f32[1,128], index: 27, kind: input, shape index: {}]
  %s28 = inlined_call_operand.hbm [shape: f32[2,128], index: 28, kind: output, shape index: {}]
  %s29 = sld [smem:[#allocation0]]
  $region166: #{tpu_custom_call.1} parent=0
    _
  %s31 = ssub.s32 1, %s29
  %s32 = scalar_select 0, %s31, %s29
  $region1: #{tpu_custom_call.1} parent=0
    #allocation2 [shape = 'u8[32768]{0}', space=vmem, size = 0x8000, scoped, tag = 'input window, operand 0, single buffered']
    #allocation3 [shape = 's32[1]{0}', space=sflag, size = 0x4, scoped, tag = 'scoped memory for tpu_custom_call.1']
    #allocation4 [shape = 's32[1]{0}', space=sflag, size = 0x4, scoped, tag = 'scoped memory for tpu_custom_call.1']
    #allocation5 [shape = 'u8[98304]{0}', space=vmem, size = 0x18000, scoped, tag = 'input window, operand 1, single buffered']
    #allocation6 [shape = 's32[1]{0}', space=sflag, size = 0x4, scoped, tag = 'scoped memory for tpu_custom_call.1']
    #allocation7 [shape = 'u8[32768]{0}', space=vmem, size = 0x8000, scoped, tag = 'input window, operand 3, single buffered']
    #allocation8 [shape = 'u8[32768]{0}', space=vmem, size = 0x8000, scoped, tag = 'input window, operand 5, single buffered']
    #allocation9 [shape = 's32[1]{0}', space=sflag, size = 0x4, scoped, tag = 'scoped memory for tpu_custom_call.1']
    #allocation10 [shape = 'u8[32768]{0}', space=vmem, size = 0x8000, scoped, tag = 'input window, operand 6, single buffered']
    #allocation11 [shape = 'u8[131072]{0}', space=vmem, size = 0x20000, scoped, tag = 'input window, operand 9, single buffered']
    #allocation12 [shape = 's32[1]{0}', space=sflag, size = 0x4, scoped, tag = 'scoped memory for tpu_custom_call.1']
    #allocation13 [shape = 'u8[131072]{0}', space=vmem, size = 0x20000, scoped, tag = 'input window, operand 11, single buffered']
    #allocation14 [shape = 'u8[131072]{0}', space=vmem, size = 0x20000, scoped, tag = 'input window, operand 18, single buffered']
    #allocation15 [shape = 's32[1]{0}', space=sflag, size = 0x4, scoped, tag = 'scoped memory for tpu_custom_call.1']
    #allocation16 [shape = 'u8[262144]{0}', space=vmem, size = 0x40000, scoped, tag = 'input window, operand 20, single buffered']
    #allocation17 [shape = 'u8[65536]{0}', space=vmem, size = 0x10000, scoped, tag = 'input window, operand 22, single buffered']
    #allocation18 [shape = 's32[1]{0}', space=sflag, size = 0x4, scoped, tag = 'scoped memory for tpu_custom_call.1']
    #allocation19 [shape = 'u8[32768]{0}', space=vmem, size = 0x8000, scoped, tag = 'input window, operand 26, single buffered']
    #allocation20 [shape = 'u8[1024]{0}', space=vmem, size = 0x400, scoped, tag = 'output window, operand 0, single buffered']
    %33 = vsyncpa [#allocation3], 0
    %34 = vsyncpa [#allocation6], 0
    %35 = vsyncpa [#allocation9], 0
    %36 = vsyncpa [#allocation12], 0
    %37 = vsyncpa [#allocation15], 0
    %38 = vsyncpa [#allocation18], 0
    %39 = vsyncpa [#allocation4], 0
    // Predicated region
    $region2: #{tpu_custom_call.1} parent=1 // pred_check
      _
    $region3: #{tpu_custom_call.1} parent=1 // pred_check_branch
      %41 = sbr.rel (0) target = $region5
    $region4: #{tpu_custom_call.1} parent=1 // pred_region
      %s43 = ssub.s32 1024, 1024
      %44 = vsyncadd [#allocation3], %s43
      %s45 = sshll.u32 [#allocation2], 4
      %s46 = int_to_ptr.vmem [resolvable:$true] %s45
      %51 = dma.hbm_to_vmem [thread:$0]  %s0, 1024, %s46, [#allocation3], 128, 128, 8
    $region5: #{tpu_custom_call.1} parent=1 // pred_fallthru
      _
    // Predicated region
    $region6: #{tpu_custom_call.1} parent=1 // pred_check
      _
    $region7: #{tpu_custom_call.1} parent=1 // pred_check_branch
      %53 = sbr.rel (0) target = $region9
    $region8: #{tpu_custom_call.1} parent=1 // pred_region
      %s55 = ssub.s32 3072, 3072
      %56 = vsyncadd [#allocation6], %s55
      %s57 = sshll.u32 [#allocation5], 4
      %s58 = int_to_ptr.vmem [resolvable:$true] %s57
      %63 = dma.hbm_to_vmem [thread:$0]  %s1, 3072, %s58, [#allocation6], 192, 192, 12
    $region9: #{tpu_custom_call.1} parent=1 // pred_fallthru
      _
    // Predicated region
    $region10: #{tpu_custom_call.1} parent=1 // pred_check
      _
    $region11: #{tpu_custom_call.1} parent=1 // pred_check_branch
      %65 = sbr.rel (0) target = $region13
    $region12: #{tpu_custom_call.1} parent=1 // pred_region
      _
    $region13: #{tpu_custom_call.1} parent=1 // pred_fallthru
      _
    // Predicated region
    $region14: #{tpu_custom_call.1} parent=1 // pred_check
      _
    $region15: #{tpu_custom_call.1} parent=1 // pred_check_branch
      %67 = sbr.rel (0) target = $region17
    $region16: #{tpu_custom_call.1} parent=1 // pred_region
      %s69 = ssub.s32 1024, 1024
      %70 = vsyncadd [#allocation6], %s69
      %s71 = sshll.u32 [#allocation7], 4
      %s72 = int_to_ptr.vmem [resolvable:$true] %s71
      %77 = dma.hbm_to_vmem [thread:$0]  %s3, 1024, %s72, [#allocation6], 64, 64, 4
    $region17: #{tpu_custom_call.1} parent=1 // pred_fallthru
      _
    // Predicated region
    $region18: #{tpu_custom_call.1} parent=1 // pred_check
      _
    $region19: #{tpu_custom_call.1} parent=1 // pred_check_branch
      %79 = sbr.rel (0) target = $region21
    $region20: #{tpu_custom_call.1} parent=1 // pred_region
      _
    $region21: #{tpu_custom_call.1} parent=1 // pred_fallthru
      _
    // Predicated region
    $region22: #{tpu_custom_call.1} parent=1 // pred_check
      _
    $region23: #{tpu_custom_call.1} parent=1 // pred_check_branch
      %81 = sbr.rel (0) target = $region25
    $region24: #{tpu_custom_call.1} parent=1 // pred_region
      %s83 = ssub.s32 1024, 1024
      %84 = vsyncadd [#allocation9], %s83
      %s85 = sshll.u32 [#allocation8], 4
      %s86 = int_to_ptr.vmem [resolvable:$true] %s85
      %91 = dma.hbm_to_vmem [thread:$0]  %s5, 1024, %s86, [#allocation9], 64, 64, 4
    $region25: #{tpu_custom_call.1} parent=1 // pred_fallthru
      _
    // Predicated region
    $region26: #{tpu_custom_call.1} parent=1 // pred_check
      _
    $region27: #{tpu_custom_call.1} parent=1 // pred_check_branch
      %93 = sbr.rel (0) target = $region29
    $region28: #{tpu_custom_call.1} parent=1 // pred_region
      %s95 = ssub.s32 1024, 1024
      %96 = vsyncadd [#allocation9], %s95
      %s97 = sshll.u32 [#allocation10], 4
      %s98 = int_to_ptr.vmem [resolvable:$true] %s97
      %103 = dma.hbm_to_vmem [thread:$0]  %s6, 1024, %s98, [#allocation9], 64, 64, 4
    $region29: #{tpu_custom_call.1} parent=1 // pred_fallthru
      _
    // Predicated region
    $region30: #{tpu_custom_call.1} parent=1 // pred_check
      _
    $region31: #{tpu_custom_call.1} parent=1 // pred_check_branch
      %105 = sbr.rel (0) target = $region33
    $region32: #{tpu_custom_call.1} parent=1 // pred_region
      _
    $region33: #{tpu_custom_call.1} parent=1 // pred_fallthru
      _
    // Predicated region
    $region34: #{tpu_custom_call.1} parent=1 // pred_check
      _
    $region35: #{tpu_custom_call.1} parent=1 // pred_check_branch
      %107 = sbr.rel (0) target = $region37
    $region36: #{tpu_custom_call.1} parent=1 // pred_region
      _
    $region37: #{tpu_custom_call.1} parent=1 // pred_fallthru
      _
    // Predicated region
    $region38: #{tpu_custom_call.1} parent=1 // pred_check
      _
    $region39: #{tpu_custom_call.1} parent=1 // pred_check_branch
      %109 = sbr.rel (0) target = $region41
    $region40: #{tpu_custom_call.1} parent=1 // pred_region
      %s111 = ssub.s32 4096, 4096
      %112 = vsyncadd [#allocation12], %s111
      %s113 = sshll.u32 [#allocation11], 4
      %s114 = int_to_ptr.vmem [resolvable:$true] %s113
      %119 = dma.hbm_to_vmem [thread:$0]  %s9, 4096, %s114, [#allocation12], 256, 256, 16
    $region41: #{tpu_custom_call.1} parent=1 // pred_fallthru
      _
    // Predicated region
    $region42: #{tpu_custom_call.1} parent=1 // pred_check
      _
    $region43: #{tpu_custom_call.1} parent=1 // pred_check_branch
      %121 = sbr.rel (0) target = $region45
    $region44: #{tpu_custom_call.1} parent=1 // pred_region
      _
    $region45: #{tpu_custom_call.1} parent=1 // pred_fallthru
      _
    // Predicated region
    $region46: #{tpu_custom_call.1} parent=1 // pred_check
      _
    $region47: #{tpu_custom_call.1} parent=1 // pred_check_branch
      %123 = sbr.rel (0) target = $region49
    $region48: #{tpu_custom_call.1} parent=1 // pred_region
      %s125 = ssub.s32 4096, 4096
      %126 = vsyncadd [#allocation12], %s125
      %s127 = sshll.u32 [#allocation13], 4
      %s128 = int_to_ptr.vmem [resolvable:$true] %s127
      %133 = dma.hbm_to_vmem [thread:$0]  %s11, 4096, %s128, [#allocation12], 64, 64, 4
    $region49: #{tpu_custom_call.1} parent=1 // pred_fallthru
      _
    // Predicated region
    $region50: #{tpu_custom_call.1} parent=1 // pred_check
      _
    $region51: #{tpu_custom_call.1} parent=1 // pred_check_branch
      %135 = sbr.rel (0) target = $region53
    $region52: #{tpu_custom_call.1} parent=1 // pred_region
      _
    $region53: #{tpu_custom_call.1} parent=1 // pred_fallthru
      _
    // Predicated region
    $region54: #{tpu_custom_call.1} parent=1 // pred_check
      _
    $region55: #{tpu_custom_call.1} parent=1 // pred_check_branch
      %137 = sbr.rel (0) target = $region57
    $region56: #{tpu_custom_call.1} parent=1 // pred_region
      _
    $region57: #{tpu_custom_call.1} parent=1 // pred_fallthru
      _
    // Predicated region
    $region58: #{tpu_custom_call.1} parent=1 // pred_check
      _
    $region59: #{tpu_custom_call.1} parent=1 // pred_check_branch
      %139 = sbr.rel (0) target = $region61
    $region60: #{tpu_custom_call.1} parent=1 // pred_region
      _
    $region61: #{tpu_custom_call.1} parent=1 // pred_fallthru
      _
    // Predicated region
    $region62: #{tpu_custom_call.1} parent=1 // pred_check
      _
    $region63: #{tpu_custom_call.1} parent=1 // pred_check_branch
      %141 = sbr.rel (0) target = $region65
    $region64: #{tpu_custom_call.1} parent=1 // pred_region
      _
    $region65: #{tpu_custom_call.1} parent=1 // pred_fallthru
      _
    // Predicated region
    $region66: #{tpu_custom_call.1} parent=1 // pred_check
      _
    $region67: #{tpu_custom_call.1} parent=1 // pred_check_branch
      %143 = sbr.rel (0) target = $region69
    $region68: #{tpu_custom_call.1} parent=1 // pred_region
      _
    $region69: #{tpu_custom_call.1} parent=1 // pred_fallthru
      _
    // Predicated region
    $region70: #{tpu_custom_call.1} parent=1 // pred_check
      _
    $region71: #{tpu_custom_call.1} parent=1 // pred_check_branch
      %145 = sbr.rel (0) target = $region73
    $region72: #{tpu_custom_call.1} parent=1 // pred_region
      _
    $region73: #{tpu_custom_call.1} parent=1 // pred_fallthru
      _
    // Predicated region
    $region74: #{tpu_custom_call.1} parent=1 // pred_check
      _
    $region75: #{tpu_custom_call.1} parent=1 // pred_check_branch
      %147 = sbr.rel (0) target = $region77
    $region76: #{tpu_custom_call.1} parent=1 // pred_region
      %s149 = ssub.s32 4096, 4096
      %150 = vsyncadd [#allocation15], %s149
      %s151 = sshll.u32 [#allocation14], 4
      %s152 = int_to_ptr.vmem [resolvable:$true] %s151
      %157 = dma.hbm_to_vmem [thread:$0]  %s18, 4096, %s152, [#allocation15], 256, 256, 16
    $region77: #{tpu_custom_call.1} parent=1 // pred_fallthru
      _
    // Predicated region
    $region78: #{tpu_custom_call.1} parent=1 // pred_check
      _
    $region79: #{tpu_custom_call.1} parent=1 // pred_check_branch
      %159 = sbr.rel (0) target = $region81
    $region80: #{tpu_custom_call.1} parent=1 // pred_region
      _
    $region81: #{tpu_custom_call.1} parent=1 // pred_fallthru
      _
    // Predicated region
    $region82: #{tpu_custom_call.1} parent=1 // pred_check
      _
    $region83: #{tpu_custom_call.1} parent=1 // pred_check_branch
      %161 = sbr.rel (0) target = $region85
    $region84: #{tpu_custom_call.1} parent=1 // pred_region
      %s163 = ssub.s32 8192, 8192
      %164 = vsyncadd [#allocation15], %s163
      %s165 = sshll.u32 [#allocation16], 4
      %s166 = int_to_ptr.vmem [resolvable:$true] %s165
      %171 = dma.hbm_to_vmem [thread:$0]  %s20, 8192, %s166, [#allocation15], 128, 128, 8
    $region85: #{tpu_custom_call.1} parent=1 // pred_fallthru
      _
    // Predicated region
    $region86: #{tpu_custom_call.1} parent=1 // pred_check
      _
    $region87: #{tpu_custom_call.1} parent=1 // pred_check_branch
      %173 = sbr.rel (0) target = $region89
    $region88: #{tpu_custom_call.1} parent=1 // pred_region
      _
    $region89: #{tpu_custom_call.1} parent=1 // pred_fallthru
      _
    // Predicated region
    $region90: #{tpu_custom_call.1} parent=1 // pred_check
      _
    $region91: #{tpu_custom_call.1} parent=1 // pred_check_branch
      %175 = sbr.rel (0) target = $region93
    $region92: #{tpu_custom_call.1} parent=1 // pred_region
      %s177 = ssub.s32 2048, 2048
      %178 = vsyncadd [#allocation18], %s177
      %s179 = sshll.u32 [#allocation17], 4
      %s180 = int_to_ptr.vmem [resolvable:$true] %s179
      %185 = dma.hbm_to_vmem [thread:$0]  %s22, 2048, %s180, [#allocation18], 64, 64, 4
    $region93: #{tpu_custom_call.1} parent=1 // pred_fallthru
      _
    // Predicated region
    $region94: #{tpu_custom_call.1} parent=1 // pred_check
      _
    $region95: #{tpu_custom_call.1} parent=1 // pred_check_branch
      %187 = sbr.rel (0) target = $region97
    $region96: #{tpu_custom_call.1} parent=1 // pred_region
      _
    $region97: #{tpu_custom_call.1} parent=1 // pred_fallthru
      _
    // Predicated region
    $region98: #{tpu_custom_call.1} parent=1 // pred_check
      _
    $region99: #{tpu_custom_call.1} parent=1 // pred_check_branch
      %189 = sbr.rel (0) target = $region101
    $region100: #{tpu_custom_call.1} parent=1 // pred_region
      _
    $region101: #{tpu_custom_call.1} parent=1 // pred_fallthru
      _
    // Predicated region
    $region102: #{tpu_custom_call.1} parent=1 // pred_check
      _
    $region103: #{tpu_custom_call.1} parent=1 // pred_check_branch
      %191 = sbr.rel (0) target = $region105
    $region104: #{tpu_custom_call.1} parent=1 // pred_region
      _
    $region105: #{tpu_custom_call.1} parent=1 // pred_fallthru
      _
    // Predicated region
    $region106: #{tpu_custom_call.1} parent=1 // pred_check
      _
    $region107: #{tpu_custom_call.1} parent=1 // pred_check_branch
      %193 = sbr.rel (0) target = $region109
    $region108: #{tpu_custom_call.1} parent=1 // pred_region
      %s195 = ssub.s32 1024, 1024
      %196 = vsyncadd [#allocation18], %s195
      %s197 = sshll.u32 [#allocation19], 4
      %s198 = int_to_ptr.vmem [resolvable:$true] %s197
      %203 = dma.hbm_to_vmem [thread:$0]  %s26, 1024, %s198, [#allocation18], 64, 64, 4
    $region109: #{tpu_custom_call.1} parent=1 // pred_fallthru
      _
    // Predicated region
    $region110: #{tpu_custom_call.1} parent=1 // pred_check
      _
    $region111: #{tpu_custom_call.1} parent=1 // pred_check_branch
      %205 = sbr.rel (0) target = $region113
    $region112: #{tpu_custom_call.1} parent=1 // pred_region
      _
    $region113: #{tpu_custom_call.1} parent=1 // pred_fallthru
      _
    // Predicated region
    $region114: #{tpu_custom_call.1} parent=1 // pred_check
      _
    $region115: #{tpu_custom_call.1} parent=1 // pred_check_branch
      %207 = sbr.rel (0) target = $region117
    $region116: #{tpu_custom_call.1} parent=1 // pred_region
      %208 = dma.done [#allocation3], 1024
    $region117: #{tpu_custom_call.1} parent=1 // pred_fallthru
      _
    // Predicated region
    $region118: #{tpu_custom_call.1} parent=1 // pred_check
      _
    $region119: #{tpu_custom_call.1} parent=1 // pred_check_branch
      %210 = sbr.rel (0) target = $region121
    $region120: #{tpu_custom_call.1} parent=1 // pred_region
      %211 = dma.done [#allocation6], 3072
    $region121: #{tpu_custom_call.1} parent=1 // pred_fallthru
      _
    // Predicated region
    $region122: #{tpu_custom_call.1} parent=1 // pred_check
      _
    $region123: #{tpu_custom_call.1} parent=1 // pred_check_branch
      %213 = sbr.rel (0) target = $region125
    $region124: #{tpu_custom_call.1} parent=1 // pred_region
      %214 = dma.done [#allocation6], 1024
    $region125: #{tpu_custom_call.1} parent=1 // pred_fallthru
      _
    // Predicated region
    $region126: #{tpu_custom_call.1} parent=1 // pred_check
      _
    $region127: #{tpu_custom_call.1} parent=1 // pred_check_branch
      %216 = sbr.rel (0) target = $region129
    $region128: #{tpu_custom_call.1} parent=1 // pred_region
      %217 = dma.done [#allocation9], 1024
    $region129: #{tpu_custom_call.1} parent=1 // pred_fallthru
      _
    // Predicated region
    $region130: #{tpu_custom_call.1} parent=1 // pred_check
      _
    $region131: #{tpu_custom_call.1} parent=1 // pred_check_branch
      %219 = sbr.rel (0) target = $region133
    $region132: #{tpu_custom_call.1} parent=1 // pred_region
      %220 = dma.done [#allocation9], 1024
    $region133: #{tpu_custom_call.1} parent=1 // pred_fallthru
      _
    // Predicated region
    $region134: #{tpu_custom_call.1} parent=1 // pred_check
      _
    $region135: #{tpu_custom_call.1} parent=1 // pred_check_branch
      %222 = sbr.rel (0) target = $region137
    $region136: #{tpu_custom_call.1} parent=1 // pred_region
      %223 = dma.done [#allocation12], 4096
    $region137: #{tpu_custom_call.1} parent=1 // pred_fallthru
      _
    // Predicated region
    $region138: #{tpu_custom_call.1} parent=1 // pred_check
      _
    $region139: #{tpu_custom_call.1} parent=1 // pred_check_branch
      %225 = sbr.rel (0) target = $region141
    $region140: #{tpu_custom_call.1} parent=1 // pred_region
      %226 = dma.done [#allocation12], 4096
    $region141: #{tpu_custom_call.1} parent=1 // pred_fallthru
      _
    // Predicated region
    $region142: #{tpu_custom_call.1} parent=1 // pred_check
      _
    $region143: #{tpu_custom_call.1} parent=1 // pred_check_branch
      %228 = sbr.rel (0) target = $region145
    $region144: #{tpu_custom_call.1} parent=1 // pred_region
      %229 = dma.done [#allocation15], 4096
    $region145: #{tpu_custom_call.1} parent=1 // pred_fallthru
      _
    // Predicated region
    $region146: #{tpu_custom_call.1} parent=1 // pred_check
      _
    $region147: #{tpu_custom_call.1} parent=1 // pred_check_branch
      %231 = sbr.rel (0) target = $region149
    $region148: #{tpu_custom_call.1} parent=1 // pred_region
      %232 = dma.done [#allocation15], 8192
    $region149: #{tpu_custom_call.1} parent=1 // pred_fallthru
      _
    // Predicated region
    $region150: #{tpu_custom_call.1} parent=1 // pred_check
      _
    $region151: #{tpu_custom_call.1} parent=1 // pred_check_branch
      %234 = sbr.rel (0) target = $region153
    $region152: #{tpu_custom_call.1} parent=1 // pred_region
      %235 = dma.done [#allocation18], 2048
    $region153: #{tpu_custom_call.1} parent=1 // pred_fallthru
      _
    // Predicated region
    $region154: #{tpu_custom_call.1} parent=1 // pred_check
      _
    $region155: #{tpu_custom_call.1} parent=1 // pred_check_branch
      %237 = sbr.rel (0) target = $region157
    $region156: #{tpu_custom_call.1} parent=1 // pred_region
      %238 = dma.done [#allocation18], 1024
    $region157: #{tpu_custom_call.1} parent=1 // pred_fallthru
      _
    %v240 = vld [vmem:[#allocation2] sm:$0xff]
    %v241 = vld [vmem:[#allocation2 + $0x8] sm:$0xff]
    %s242 = scalar_lea.vmem [#allocation2], 16
    %v243 = vld [vmem:[%s242] sm:$0xff]
    %v244 = vld [vmem:[%s242 + $0x8] sm:$0xff]
    %v245 = vadd.f32 %v240, %v243
    %v246 = vadd.f32 %v241, %v244
    %s247 = scalar_lea.vmem [#allocation2], 32
    %v248 = vld [vmem:[%s247] sm:$0xff]
    %v249 = vld [vmem:[%s247 + $0x8] sm:$0xff]
    %v250 = vadd.f32 %v245, %v248
    %v251 = vadd.f32 %v246, %v249
    %s252 = scalar_lea.vmem [#allocation2], 48
    %v253 = vld [vmem:[%s252] sm:$0xff]
    %v254 = vld [vmem:[%s252 + $0x8] sm:$0xff]
    %v255 = vadd.f32 %v250, %v253
    %v256 = vadd.f32 %v251, %v254
    %v257 = vmul.f32 %v255, 0.25
    %v258 = vmul.f32 %v256, 0.25
    %v259 = vpack.c.bf16 %v258, %v257
    %v260 = vld [vmem:[#allocation5] sm:$0xff]
    %v261 = vld [vmem:[#allocation5 + $0x8] sm:$0xf]
    %v262 = vld [vmem:[#allocation5 + $0xc] sm:$0xff]
    %v263 = vld [vmem:[#allocation5 + $0x14] sm:$0xf]
    %v264 = vld [vmem:[#allocation5 + $0x18] sm:$0xff]
    %v265 = vld [vmem:[#allocation5 + $0x20] sm:$0xf]
    %v266 = vld [vmem:[#allocation5 + $0x24] sm:$0xff]
    %v267 = vld [vmem:[#allocation5 + $0x2c] sm:$0xf]
    %v268 = vld [vmem:[#allocation5 + $0x30] sm:$0xff]
    %v269 = vld [vmem:[#allocation5 + $0x38] sm:$0xf]
    %v270 = vld [vmem:[#allocation5 + $0x3c] sm:$0xff]
    %v271 = vld [vmem:[#allocation5 + $0x44] sm:$0xf]
    %v272 = vld [vmem:[#allocation5 + $0x48] sm:$0xff]
    %v273 = vld [vmem:[#allocation5 + $0x50] sm:$0xf]
    %v274 = vld [vmem:[#allocation5 + $0x54] sm:$0xff]
    %v275 = vld [vmem:[#allocation5 + $0x5c] sm:$0xf]
    %v276 = vld [vmem:[#allocation5 + $0x60] sm:$0xff]
    %v277 = vld [vmem:[#allocation5 + $0x68] sm:$0xf]
    %v278 = vld [vmem:[#allocation5 + $0x6c] sm:$0xff]
    %v279 = vld [vmem:[#allocation5 + $0x74] sm:$0xf]
    %v280 = vld [vmem:[#allocation5 + $0x78] sm:$0xff]
    %v281 = vld [vmem:[#allocation5 + $0x80] sm:$0xf]
    %v282 = vld [vmem:[#allocation5 + $0x84] sm:$0xff]
    %v283 = vld [vmem:[#allocation5 + $0x8c] sm:$0xf]
    %v284 = vld [vmem:[#allocation5 + $0x90] sm:$0xff]
    %v285 = vld [vmem:[#allocation5 + $0x98] sm:$0xf]
    %v286 = vld [vmem:[#allocation5 + $0x9c] sm:$0xff]
    %v287 = vld [vmem:[#allocation5 + $0xa4] sm:$0xf]
    %v288 = vld [vmem:[#allocation5 + $0xa8] sm:$0xff]
    %v289 = vld [vmem:[#allocation5 + $0xb0] sm:$0xf]
    %v290 = vld [vmem:[#allocation5 + $0xb4] sm:$0xff]
    %v291 = vld [vmem:[#allocation5 + $0xbc] sm:$0xf]
    %v292 = vld [vmem:[%s2] sm:$0x7]
    %v294 = vlaneseq
    %v295 = vshrl.u32 %v294, 7
    %v296 = vsub.s32 0, %v295
    %v297 = vrot.slane %v292, %v296
    %v298 = vlaneseq
    %v299 = vshrl.u32 %v298, 7
    %v300 = vsub.s32 1, %v299
    %v301 = vrot.slane %v292, %v300
    %v302 = vlaneseq
    %v303 = vshrl.u32 %v302, 7
    %v304 = vsub.s32 2, %v303
    %v305 = vrot.slane %v292, %v304
    %v341 = vunpack.c.l.b16 %v260
    %v342 = vunpack.c.h.b16 %v260
    %v343 = vunpack.c.l.b16 %v261
    %v344 = vunpack.c.l.b16 %v262
    %v345 = vunpack.c.h.b16 %v262
    %v346 = vunpack.c.l.b16 %v263
    %v347 = vunpack.c.l.b16 %v264
    %v348 = vunpack.c.h.b16 %v264
    %v349 = vunpack.c.l.b16 %v265
    %v350 = vunpack.c.l.b16 %v266
    %v351 = vunpack.c.h.b16 %v266
    %v352 = vunpack.c.l.b16 %v267
    %v353 = vunpack.c.l.b16 %v268
    %v354 = vunpack.c.h.b16 %v268
    %v355 = vunpack.c.l.b16 %v269
    %v356 = vunpack.c.l.b16 %v270
    %v357 = vunpack.c.h.b16 %v270
    %v358 = vunpack.c.l.b16 %v271
    %v359 = vunpack.c.l.b16 %v272
    %v360 = vunpack.c.h.b16 %v272
    %v361 = vunpack.c.l.b16 %v273
    %v362 = vunpack.c.l.b16 %v274
    %v363 = vunpack.c.h.b16 %v274
    %v364 = vunpack.c.l.b16 %v275
    %v365 = vunpack.c.l.b16 %v276
    %v366 = vunpack.c.h.b16 %v276
    %v367 = vunpack.c.l.b16 %v277
    %v368 = vunpack.c.l.b16 %v278
    %v369 = vunpack.c.h.b16 %v278
    %v370 = vunpack.c.l.b16 %v279
    %v371 = vunpack.c.l.b16 %v280
    %v372 = vunpack.c.h.b16 %v280
    %v373 = vunpack.c.l.b16 %v281
    %v374 = vunpack.c.l.b16 %v282
    %v375 = vunpack.c.h.b16 %v282
    %v376 = vunpack.c.l.b16 %v283
    %v377 = vunpack.c.l.b16 %v284
    %v378 = vunpack.c.h.b16 %v284
    %v379 = vunpack.c.l.b16 %v285
    %v380 = vunpack.c.l.b16 %v286
    %v381 = vunpack.c.h.b16 %v286
    %v382 = vunpack.c.l.b16 %v287
    %v383 = vunpack.c.l.b16 %v288
    %v384 = vunpack.c.h.b16 %v288
    %v385 = vunpack.c.l.b16 %v289
    %v386 = vunpack.c.l.b16 %v290
    %v387 = vunpack.c.h.b16 %v290
    %v388 = vunpack.c.l.b16 %v291
    %v389 = vpack.c.b16 %v344, %v341
    %v390 = vpack.c.b16 %v345, %v342
    %v391 = vpack.c.b16 %v346, %v343
    %v392 = vpack.c.b16 %v350, %v347
    %v393 = vpack.c.b16 %v351, %v348
    %v394 = vpack.c.b16 %v352, %v349
    %v395 = vpack.c.b16 %v356, %v353
    %v396 = vpack.c.b16 %v357, %v354
    %v397 = vpack.c.b16 %v358, %v355
    %v398 = vpack.c.b16 %v362, %v359
    %v399 = vpack.c.b16 %v363, %v360
    %v400 = vpack.c.b16 %v364, %v361
    %v401 = vpack.c.b16 %v368, %v365
    %v402 = vpack.c.b16 %v369, %v366
    %v403 = vpack.c.b16 %v370, %v367
    %v404 = vpack.c.b16 %v374, %v371
    %v405 = vpack.c.b16 %v375, %v372
    %v406 = vpack.c.b16 %v376, %v373
    %v407 = vpack.c.b16 %v380, %v377
    %v408 = vpack.c.b16 %v381, %v378
    %v409 = vpack.c.b16 %v382, %v379
    %v410 = vpack.c.b16 %v386, %v383
    %v411 = vpack.c.b16 %v387, %v384
    %v412 = vpack.c.b16 %v388, %v385
    %437 = vmatprep.subr.bf16.mxu0 %v390
    %438 = vmatpush1.bf16.msra.mxu0 %v389
    %439 = vmatprep.subr.bf16.mxu0 %v393
    %440 = vmatpush1.bf16.msra.mxu0 %v392
    %441 = vmatprep.subr.bf16.mxu0 %v396
    %442 = vmatpush1.bf16.msra.mxu0 %v395
    %443 = vmatprep.subr.bf16.mxu0 %v399
    %444 = vmatpush1.bf16.msra.mxu0 %v398
    %445 = vmatprep.subr.bf16.mxu0 %v402
    %446 = vmatpush1.bf16.msra.mxu0 %v401
    %447 = vmatprep.subr.bf16.mxu0 %v405
    %448 = vmatpush1.bf16.msra.mxu0 %v404
    %449 = vmatprep.subr.bf16.mxu0 %v408
    %450 = vmatpush1.bf16.msra.mxu0 %v407
    %451 = vmatprep.subr.bf16.mxu0 %v411
    %452 = vmatpush1.bf16.msra.mxu0 %v410
    %453 = vmatprep.subr.bf16.mxu0 0
    %454 = vmatpush1.bf16.msra.mxu0 0
    %455 = vmatprep.subr.bf16.mxu0 0
    %456 = vmatpush1.bf16.msra.mxu0 0
    %457 = vmatprep.subr.bf16.mxu0 0
    %458 = vmatpush1.bf16.msra.mxu0 0
    %459 = vmatprep.subr.bf16.mxu0 0
    %460 = vmatpush1.bf16.msra.mxu0 0
    %461 = vmatprep.subr.bf16.mxu0 0
    %462 = vmatpush1.bf16.msra.mxu0 0
    %463 = vmatprep.subr.bf16.mxu0 0
    %464 = vmatpush1.bf16.msra.mxu0 0
    %465 = vmatprep.subr.bf16.mxu0 0
    %466 = vmatpush1.bf16.msra.mxu0 0
    %467 = vmatprep.subr.bf16.mxu0 0
    %468 = vmatpush1.bf16.msra.mxu0 0
    %469 = vmatprep.mubr.bf16.mxu0 0
    %470 = vmatmul.mubr.bf16.gmra.mrb[0].mxu0 %v259
    %v471 = vpop.f32.mrb[0].mxu0
    %v472 = vadd.f32 %v297, %v471
    %v473 = vpop.f32.mrb[0].mxu0
    %v474 = vadd.f32 %v301, %v473
    %v475 = vpop.f32.mrb[0].mxu0
    %v476 = vadd.f32 %v297, %v475
    %v477 = vpop.f32.mrb[0].mxu0
    %v478 = vadd.f32 %v301, %v477
    %479 = vdwg.mxu0
    %480 = vmatprep.subr.bf16.mxu0 0
    %481 = vmatpush1.bf16.msra.mxu0 %v391
    %482 = vmatprep.subr.bf16.mxu0 0
    %483 = vmatpush1.bf16.msra.mxu0 %v394
    %484 = vmatprep.subr.bf16.mxu0 0
    %485 = vmatpush1.bf16.msra.mxu0 %v397
    %486 = vmatprep.subr.bf16.mxu0 0
    %487 = vmatpush1.bf16.msra.mxu0 %v400
    %488 = vmatprep.subr.bf16.mxu0 0
    %489 = vmatpush1.bf16.msra.mxu0 %v403
    %490 = vmatprep.subr.bf16.mxu0 0
    %491 = vmatpush1.bf16.msra.mxu0 %v406
    %492 = vmatprep.subr.bf16.mxu0 0
    %493 = vmatpush1.bf16.msra.mxu0 %v409
    %494 = vmatprep.subr.bf16.mxu0 0
    %495 = vmatpush1.bf16.msra.mxu0 %v412
    %496 = vmatprep.subr.bf16.mxu0 0
    %497 = vmatpush1.bf16.msra.mxu0 0
    %498 = vmatprep.subr.bf16.mxu0 0
    %499 = vmatpush1.bf16.msra.mxu0 0
    %500 = vmatprep.subr.bf16.mxu0 0
    %501 = vmatpush1.bf16.msra.mxu0 0
    %502 = vmatprep.subr.bf16.mxu0 0
    %503 = vmatpush1.bf16.msra.mxu0 0
    %504 = vmatprep.subr.bf16.mxu0 0
    %505 = vmatpush1.bf16.msra.mxu0 0
    %506 = vmatprep.subr.bf16.mxu0 0
    %507 = vmatpush1.bf16.msra.mxu0 0
    %508 = vmatprep.subr.bf16.mxu0 0
    %509 = vmatpush1.bf16.msra.mxu0 0
    %510 = vmatprep.subr.bf16.mxu0 0
    %511 = vmatpush1.bf16.msra.mxu0 0
    %512 = vmatprep.mubr.bf16.mxu0 0
    %513 = vmatmul.mubr.bf16.gmra.mrb[0].mxu0 %v259
    %v514 = vpop.f32.mrb[0].mxu0
    %v515 = vadd.f32 %v305, %v514
    %v516 = vpop.f32.mrb[0].mxu0
    %v517 = vpop.f32.mrb[0].mxu0
    %v518 = vadd.f32 %v305, %v517
    %v519 = vpop.f32.mrb[0].mxu0
    %520 = vdwg.mxu0
    %v521 = vmul.f32 %v472, %v474
    %v522 = vmul.f32 %v472, %v478
    %v523 = vmul.f32 %v476, %v474
    %v524 = vmul.f32 %v476, %v478
    %v525 = vpack.c.bf16 %v522, %v521
    %v526 = vpack.c.bf16 %v524, %v523
    %v527 = vld [vmem:[#allocation8] sm:$0xf]
    %v528 = vld [vmem:[#allocation8 + $0x4] sm:$0xf]
    %v529 = vld [vmem:[#allocation8 + $0x8] sm:$0xf]
    %v530 = vld [vmem:[#allocation8 + $0xc] sm:$0xf]
    %v531 = vld [vmem:[#allocation8 + $0x10] sm:$0xf]
    %v532 = vld [vmem:[#allocation8 + $0x14] sm:$0xf]
    %v533 = vld [vmem:[#allocation8 + $0x18] sm:$0xf]
    %v534 = vld [vmem:[#allocation8 + $0x1c] sm:$0xf]
    %v535 = vld [vmem:[#allocation8 + $0x20] sm:$0xf]
    %v536 = vld [vmem:[#allocation8 + $0x24] sm:$0xf]
    %v537 = vld [vmem:[#allocation8 + $0x28] sm:$0xf]
    %v538 = vld [vmem:[#allocation8 + $0x2c] sm:$0xf]
    %v539 = vld [vmem:[#allocation8 + $0x30] sm:$0xf]
    %v540 = vld [vmem:[#allocation8 + $0x34] sm:$0xf]
    %v541 = vld [vmem:[#allocation8 + $0x38] sm:$0xf]
    %v542 = vld [vmem:[#allocation8 + $0x3c] sm:$0xf]
    %v559 = vunpack.c.l.b16 %v527
    %v560 = vunpack.c.l.b16 %v528
    %v561 = vunpack.c.l.b16 %v529
    %v562 = vunpack.c.l.b16 %v530
    %v563 = vunpack.c.l.b16 %v531
    %v564 = vunpack.c.l.b16 %v532
    %v565 = vunpack.c.l.b16 %v533
    %v566 = vunpack.c.l.b16 %v534
    %v567 = vunpack.c.l.b16 %v535
    %v568 = vunpack.c.l.b16 %v536
    %v569 = vunpack.c.l.b16 %v537
    %v570 = vunpack.c.l.b16 %v538
    %v571 = vunpack.c.l.b16 %v539
    %v572 = vunpack.c.l.b16 %v540
    %v573 = vunpack.c.l.b16 %v541
    %v574 = vunpack.c.l.b16 %v542
    %v575 = vpack.c.b16 %v560, %v559
    %v576 = vpack.c.b16 %v562, %v561
    %v577 = vpack.c.b16 %v564, %v563
    %v578 = vpack.c.b16 %v566, %v565
    %v579 = vpack.c.b16 %v568, %v567
    %v580 = vpack.c.b16 %v570, %v569
    %v581 = vpack.c.b16 %v572, %v571
    %v582 = vpack.c.b16 %v574, %v573
    %591 = vmatprep.subr.bf16.mxu0 0
    %592 = vmatpush1.bf16.msra.mxu0 %v575
    %593 = vmatprep.subr.bf16.mxu0 0
    %594 = vmatpush1.bf16.msra.mxu0 %v576
    %595 = vmatprep.subr.bf16.mxu0 0
    %596 = vmatpush1.bf16.msra.mxu0 %v577
    %597 = vmatprep.subr.bf16.mxu0 0
    %598 = vmatpush1.bf16.msra.mxu0 %v578
    %599 = vmatprep.subr.bf16.mxu0 0
    %600 = vmatpush1.bf16.msra.mxu0 %v579
    %601 = vmatprep.subr.bf16.mxu0 0
    %602 = vmatpush1.bf16.msra.mxu0 %v580
    %603 = vmatprep.subr.bf16.mxu0 0
    %604 = vmatpush1.bf16.msra.mxu0 %v581
    %605 = vmatprep.subr.bf16.mxu0 0
    %606 = vmatpush1.bf16.msra.mxu0 %v582
    %607 = vmatprep.subr.bf16.mxu0 0
    %608 = vmatpush1.bf16.msra.mxu0 0
    %609 = vmatprep.subr.bf16.mxu0 0
    %610 = vmatpush1.bf16.msra.mxu0 0
    %611 = vmatprep.subr.bf16.mxu0 0
    %612 = vmatpush1.bf16.msra.mxu0 0
    %613 = vmatprep.subr.bf16.mxu0 0
    %614 = vmatpush1.bf16.msra.mxu0 0
    %615 = vmatprep.subr.bf16.mxu0 0
    %616 = vmatpush1.bf16.msra.mxu0 0
    %617 = vmatprep.subr.bf16.mxu0 0
    %618 = vmatpush1.bf16.msra.mxu0 0
    %619 = vmatprep.subr.bf16.mxu0 0
    %620 = vmatpush1.bf16.msra.mxu0 0
    %621 = vmatprep.subr.bf16.mxu0 0
    %622 = vmatpush1.bf16.msra.mxu0 0
    %623 = vmatprep.mubr.bf16.mxu0 0
    %624 = vmatmul.mubr.bf16.gmra.mrb[0].mxu0 %v525
    %v625 = vpop.f32.mrb[0].mxu0
    %v626 = vadd.f32 0.0, %v625
    %v627 = vpop.f32.mrb[0].mxu0
    %v628 = vpop.f32.mrb[0].mxu0
    %v629 = vadd.f32 0.0, %v628
    %v630 = vpop.f32.mrb[0].mxu0
    %631 = vmatprep.mubr.bf16.mxu0 0
    %632 = vmatmul.mubr.bf16.gmra.mrb[0].mxu0 %v526
    %v633 = vpop.f32.mrb[0].mxu0
    %v634 = vadd.f32 0.0, %v633
    %v635 = vpop.f32.mrb[0].mxu0
    %v636 = vpop.f32.mrb[0].mxu0
    %v637 = vadd.f32 0.0, %v636
    %v638 = vpop.f32.mrb[0].mxu0
    %639 = vdwg.mxu0
    %v640 = vmax.f32 %v626, %v629
    %v641 = vmax.f32 %v634, %v637
    %v642 = vsub.f32 %v626, %v640
    %v643 = vsub.f32 %v629, %v640
    %v644 = vsub.f32 %v634, %v641
    %v645 = vsub.f32 %v637, %v641
    %v646 = vmul.f32 %v642, 1.442695
    %v647 = vpow.pop %v646
    %v648 = vmul.f32 %v643, 1.442695
    %v649 = vpow.pop %v648
    %v650 = vmul.f32 %v644, 1.442695
    %v651 = vpow.pop %v650
    %v652 = vmul.f32 %v645, 1.442695
    %v653 = vpow.pop %v652
    %v654 = vadd.f32 %v647, %v649
    %v655 = vadd.f32 %v651, %v653
    %v656 = vrcp.pop %v654
    %v657 = vrcp.pop %v655
    %v658 = vmul.f32 %v647, %v656
    %v659 = vmul.f32 %v649, %v656
    %v660 = vmul.f32 %v651, %v657
    %v661 = vmul.f32 %v653, %v657
    %v662 = vpack.c.bf16 %v659, %v658
    %v663 = vpack.c.bf16 %v661, %v660
    %v664 = vld [vmem:[#allocation10] sm:$0xf]
    %v665 = vld [vmem:[#allocation10 + $0x4] sm:$0xf]
    %v666 = vld [vmem:[#allocation10 + $0x8] sm:$0xf]
    %v667 = vld [vmem:[#allocation10 + $0xc] sm:$0xf]
    %v668 = vld [vmem:[#allocation10 + $0x10] sm:$0xf]
    %v669 = vld [vmem:[#allocation10 + $0x14] sm:$0xf]
    %v670 = vld [vmem:[#allocation10 + $0x18] sm:$0xf]
    %v671 = vld [vmem:[#allocation10 + $0x1c] sm:$0xf]
    %v672 = vld [vmem:[#allocation10 + $0x20] sm:$0xf]
    %v673 = vld [vmem:[#allocation10 + $0x24] sm:$0xf]
    %v674 = vld [vmem:[#allocation10 + $0x28] sm:$0xf]
    %v675 = vld [vmem:[#allocation10 + $0x2c] sm:$0xf]
    %v676 = vld [vmem:[#allocation10 + $0x30] sm:$0xf]
    %v677 = vld [vmem:[#allocation10 + $0x34] sm:$0xf]
    %v678 = vld [vmem:[#allocation10 + $0x38] sm:$0xf]
    %v679 = vld [vmem:[#allocation10 + $0x3c] sm:$0xf]
    %v696 = vunpack.c.l.b16 %v664
    %v697 = vunpack.c.l.b16 %v665
    %v698 = vunpack.c.l.b16 %v666
    %v699 = vunpack.c.l.b16 %v667
    %v700 = vunpack.c.l.b16 %v668
    %v701 = vunpack.c.l.b16 %v669
    %v702 = vunpack.c.l.b16 %v670
    %v703 = vunpack.c.l.b16 %v671
    %v704 = vunpack.c.l.b16 %v672
    %v705 = vunpack.c.l.b16 %v673
    %v706 = vunpack.c.l.b16 %v674
    %v707 = vunpack.c.l.b16 %v675
    %v708 = vunpack.c.l.b16 %v676
    %v709 = vunpack.c.l.b16 %v677
    %v710 = vunpack.c.l.b16 %v678
    %v711 = vunpack.c.l.b16 %v679
    %v712 = vpack.c.b16 %v697, %v696
    %v713 = vpack.c.b16 %v699, %v698
    %v714 = vpack.c.b16 %v701, %v700
    %v715 = vpack.c.b16 %v703, %v702
    %v716 = vpack.c.b16 %v705, %v704
    %v717 = vpack.c.b16 %v707, %v706
    %v718 = vpack.c.b16 %v709, %v708
    %v719 = vpack.c.b16 %v711, %v710
    %728 = vmatprep.subr.bf16.mxu0 0
    %729 = vmatpush1.bf16.msra.mxu0 %v712
    %730 = vmatprep.subr.bf16.mxu0 0
    %731 = vmatpush1.bf16.msra.mxu0 %v713
    %732 = vmatprep.subr.bf16.mxu0 0
    %733 = vmatpush1.bf16.msra.mxu0 %v714
    %734 = vmatprep.subr.bf16.mxu0 0
    %735 = vmatpush1.bf16.msra.mxu0 %v715
    %736 = vmatprep.subr.bf16.mxu0 0
    %737 = vmatpush1.bf16.msra.mxu0 %v716
    %738 = vmatprep.subr.bf16.mxu0 0
    %739 = vmatpush1.bf16.msra.mxu0 %v717
    %740 = vmatprep.subr.bf16.mxu0 0
    %741 = vmatpush1.bf16.msra.mxu0 %v718
    %742 = vmatprep.subr.bf16.mxu0 0
    %743 = vmatpush1.bf16.msra.mxu0 %v719
    %744 = vmatprep.subr.bf16.mxu0 0
    %745 = vmatpush1.bf16.msra.mxu0 0
    %746 = vmatprep.subr.bf16.mxu0 0
    %747 = vmatpush1.bf16.msra.mxu0 0
    %748 = vmatprep.subr.bf16.mxu0 0
    %749 = vmatpush1.bf16.msra.mxu0 0
    %750 = vmatprep.subr.bf16.mxu0 0
    %751 = vmatpush1.bf16.msra.mxu0 0
    %752 = vmatprep.subr.bf16.mxu0 0
    %753 = vmatpush1.bf16.msra.mxu0 0
    %754 = vmatprep.subr.bf16.mxu0 0
    %755 = vmatpush1.bf16.msra.mxu0 0
    %756 = vmatprep.subr.bf16.mxu0 0
    %757 = vmatpush1.bf16.msra.mxu0 0
    %758 = vmatprep.subr.bf16.mxu0 0
    %759 = vmatpush1.bf16.msra.mxu0 0
    %760 = vmatprep.mubr.bf16.mxu0 0
    %761 = vmatmul.mubr.bf16.gmra.mrb[0].mxu0 %v662
    %v762 = vpop.f32.mrb[0].mxu0
    %v763 = vadd.f32 0.0, %v762
    %v764 = vpop.f32.mrb[0].mxu0
    %v765 = vpop.f32.mrb[0].mxu0
    %v766 = vadd.f32 0.0, %v765
    %v767 = vpop.f32.mrb[0].mxu0
    %768 = vmatprep.mubr.bf16.mxu0 0
    %769 = vmatmul.mubr.bf16.gmra.mrb[0].mxu0 %v663
    %v770 = vpop.f32.mrb[0].mxu0
    %v771 = vadd.f32 0.0, %v770
    %v772 = vpop.f32.mrb[0].mxu0
    %v773 = vpop.f32.mrb[0].mxu0
    %v774 = vadd.f32 0.0, %v773
    %v775 = vpop.f32.mrb[0].mxu0
    %776 = vdwg.mxu0
    %v777 = vmul.f32 %v763, %v515
    %v778 = vmul.f32 %v771, %v515
    %v779 = vmul.f32 %v766, %v518
    %v780 = vmul.f32 %v774, %v518
    %v781 = vadd.f32 %v777, %v779
    %v782 = vadd.f32 %v778, %v780
    %v783 = vpack.c.bf16 %v782, %v781
    %v784 = vld [vmem:[#allocation7] sm:$0xf]
    %v785 = vld [vmem:[#allocation7 + $0x4] sm:$0xf]
    %v786 = vld [vmem:[#allocation7 + $0x8] sm:$0xf]
    %v787 = vld [vmem:[#allocation7 + $0xc] sm:$0xf]
    %v788 = vld [vmem:[#allocation7 + $0x10] sm:$0xf]
    %v789 = vld [vmem:[#allocation7 + $0x14] sm:$0xf]
    %v790 = vld [vmem:[#allocation7 + $0x18] sm:$0xf]
    %v791 = vld [vmem:[#allocation7 + $0x1c] sm:$0xf]
    %v792 = vld [vmem:[#allocation7 + $0x20] sm:$0xf]
    %v793 = vld [vmem:[#allocation7 + $0x24] sm:$0xf]
    %v794 = vld [vmem:[#allocation7 + $0x28] sm:$0xf]
    %v795 = vld [vmem:[#allocation7 + $0x2c] sm:$0xf]
    %v796 = vld [vmem:[#allocation7 + $0x30] sm:$0xf]
    %v797 = vld [vmem:[#allocation7 + $0x34] sm:$0xf]
    %v798 = vld [vmem:[#allocation7 + $0x38] sm:$0xf]
    %v799 = vld [vmem:[#allocation7 + $0x3c] sm:$0xf]
    %v800 = vld [vmem:[%s4] sm:$0x1]
    %v802 = vlaneseq
    %v803 = vshrl.u32 %v802, 7
    %v804 = vsub.s32 0, %v803
    %v805 = vrot.slane %v800, %v804
    %v823 = vunpack.c.l.b16 %v784
    %v824 = vunpack.c.l.b16 %v785
    %v825 = vunpack.c.l.b16 %v786
    %v826 = vunpack.c.l.b16 %v787
    %v827 = vunpack.c.l.b16 %v788
    %v828 = vunpack.c.l.b16 %v789
    %v829 = vunpack.c.l.b16 %v790
    %v830 = vunpack.c.l.b16 %v791
    %v831 = vunpack.c.l.b16 %v792
    %v832 = vunpack.c.l.b16 %v793
    %v833 = vunpack.c.l.b16 %v794
    %v834 = vunpack.c.l.b16 %v795
    %v835 = vunpack.c.l.b16 %v796
    %v836 = vunpack.c.l.b16 %v797
    %v837 = vunpack.c.l.b16 %v798
    %v838 = vunpack.c.l.b16 %v799
    %v839 = vpack.c.b16 %v824, %v823
    %v840 = vpack.c.b16 %v826, %v825
    %v841 = vpack.c.b16 %v828, %v827
    %v842 = vpack.c.b16 %v830, %v829
    %v843 = vpack.c.b16 %v832, %v831
    %v844 = vpack.c.b16 %v834, %v833
    %v845 = vpack.c.b16 %v836, %v835
    %v846 = vpack.c.b16 %v838, %v837
    %855 = vmatprep.subr.bf16.mxu0 0
    %856 = vmatpush1.bf16.msra.mxu0 %v839
    %857 = vmatprep.subr.bf16.mxu0 0
    %858 = vmatpush1.bf16.msra.mxu0 %v840
    %859 = vmatprep.subr.bf16.mxu0 0
    %860 = vmatpush1.bf16.msra.mxu0 %v841
    %861 = vmatprep.subr.bf16.mxu0 0
    %862 = vmatpush1.bf16.msra.mxu0 %v842
    %863 = vmatprep.subr.bf16.mxu0 0
    %864 = vmatpush1.bf16.msra.mxu0 %v843
    %865 = vmatprep.subr.bf16.mxu0 0
    %866 = vmatpush1.bf16.msra.mxu0 %v844
    %867 = vmatprep.subr.bf16.mxu0 0
    %868 = vmatpush1.bf16.msra.mxu0 %v845
    %869 = vmatprep.subr.bf16.mxu0 0
    %870 = vmatpush1.bf16.msra.mxu0 %v846
    %871 = vmatprep.subr.bf16.mxu0 0
    %872 = vmatpush1.bf16.msra.mxu0 0
    %873 = vmatprep.subr.bf16.mxu0 0
    %874 = vmatpush1.bf16.msra.mxu0 0
    %875 = vmatprep.subr.bf16.mxu0 0
    %876 = vmatpush1.bf16.msra.mxu0 0
    %877 = vmatprep.subr.bf16.mxu0 0
    %878 = vmatpush1.bf16.msra.mxu0 0
    %879 = vmatprep.subr.bf16.mxu0 0
    %880 = vmatpush1.bf16.msra.mxu0 0
    %881 = vmatprep.subr.bf16.mxu0 0
    %882 = vmatpush1.bf16.msra.mxu0 0
    %883 = vmatprep.subr.bf16.mxu0 0
    %884 = vmatpush1.bf16.msra.mxu0 0
    %885 = vmatprep.subr.bf16.mxu0 0
    %886 = vmatpush1.bf16.msra.mxu0 0
    %887 = vmatprep.mubr.bf16.mxu0 0
    %888 = vmatmul.mubr.bf16.gmra.mrb[0].mxu0 %v783
    %v889 = vpop.f32.mrb[0].mxu0
    %v890 = vadd.f32 %v805, %v889
    %v891 = vpop.f32.mrb[0].mxu0
    %v892 = vpop.f32.mrb[0].mxu0
    %v893 = vadd.f32 %v805, %v892
    %v894 = vpop.f32.mrb[0].mxu0
    %895 = vdwg.mxu0
    %v896 = vadd.f32 %v257, %v890
    %v897 = vadd.f32 %v258, %v893
    %v898 = vld [vmem:[%s7] sm:$0x1]
    %v899 = vld [vmem:[%s8] sm:$0x1]
    %900 = vadd.xlane.f32.xlu0 %v896
    %v901 = vpop.xlane.xlu0 %900
    %902 = vadd.xlane.f32.xlu0 %v897
    %v903 = vpop.xlane.xlu0 %902
    %v904 = vrcp.pop 128.0
    %v905 = vmul.f32 %v901, %v904
    %v906 = vmul.f32 %v903, %v904
    %v907 = vsub.f32 %v896, %v905
    %v908 = vsub.f32 %v897, %v906
    %v909 = vmul.f32 %v907, %v907
    %v910 = vmul.f32 %v908, %v908
    %911 = vadd.xlane.f32.xlu0 %v909
    %v912 = vpop.xlane.xlu0 %911
    %913 = vadd.xlane.f32.xlu0 %v910
    %v914 = vpop.xlane.xlu0 %913
    %v915 = vmul.f32 %v912, %v904
    %v916 = vmul.f32 %v914, %v904
    %v917 = vadd.f32 %v915, 1e-05
    %v918 = vadd.f32 %v916, 1e-05
    %v919 = vrsqrt.pop %v917
    %v920 = vmul.f32 %v917, %v919
    %vm921 = vcmp.eq.f32.partialorder %v917, inf
    %v922 = vsel %vm921, %v917, %v920
    %vm923 = vcmp.eq.f32.partialorder %v917, 0.0
    %v924 = vand.u32 %v917, 2147483648
    %v925 = vsel %vm923, %v924, %v922
    %v926 = vrsqrt.pop %v918
    %v927 = vmul.f32 %v918, %v926
    %vm928 = vcmp.eq.f32.partialorder %v918, inf
    %v929 = vsel %vm928, %v918, %v927
    %vm930 = vcmp.eq.f32.partialorder %v918, 0.0
    %v931 = vand.u32 %v918, 2147483648
    %v932 = vsel %vm930, %v931, %v929
    %v933 = vrcp.pop %v925
    %v934 = vmul.f32 %v907, %v933
    %v935 = vrcp.pop %v932
    %v936 = vmul.f32 %v908, %v935
    %v938 = vlaneseq
    %v939 = vshrl.u32 %v938, 7
    %v940 = vsub.s32 0, %v939
    %v941 = vrot.slane %v898, %v940
    %v943 = vmul.f32 %v934, %v941
    %v944 = vmul.f32 %v936, %v941
    %v946 = vlaneseq
    %v947 = vshrl.u32 %v946, 7
    %v948 = vsub.s32 0, %v947
    %v949 = vrot.slane %v899, %v948
    %v951 = vadd.f32 %v943, %v949
    %v952 = vadd.f32 %v944, %v949
    %v953 = vpack.c.bf16 %v952, %v951
    %v954 = vld [vmem:[#allocation11] sm:$0xff]
    %v955 = vld [vmem:[#allocation11 + $0x8] sm:$0xff]
    %v956 = vld [vmem:[#allocation11 + $0x10] sm:$0xff]
    %v957 = vld [vmem:[#allocation11 + $0x18] sm:$0xff]
    %v958 = vld [vmem:[#allocation11 + $0x20] sm:$0xff]
    %v959 = vld [vmem:[#allocation11 + $0x28] sm:$0xff]
    %v960 = vld [vmem:[#allocation11 + $0x30] sm:$0xff]
    %v961 = vld [vmem:[#allocation11 + $0x38] sm:$0xff]
    %v962 = vld [vmem:[#allocation11 + $0x40] sm:$0xff]
    %v963 = vld [vmem:[#allocation11 + $0x48] sm:$0xff]
    %v964 = vld [vmem:[#allocation11 + $0x50] sm:$0xff]
    %v965 = vld [vmem:[#allocation11 + $0x58] sm:$0xff]
    %v966 = vld [vmem:[#allocation11 + $0x60] sm:$0xff]
    %v967 = vld [vmem:[#allocation11 + $0x68] sm:$0xff]
    %v968 = vld [vmem:[#allocation11 + $0x70] sm:$0xff]
    %v969 = vld [vmem:[#allocation11 + $0x78] sm:$0xff]
    %v970 = vld [vmem:[#allocation11 + $0x80] sm:$0xff]
    %v971 = vld [vmem:[#allocation11 + $0x88] sm:$0xff]
    %v972 = vld [vmem:[#allocation11 + $0x90] sm:$0xff]
    %v973 = vld [vmem:[#allocation11 + $0x98] sm:$0xff]
    %v974 = vld [vmem:[#allocation11 + $0xa0] sm:$0xff]
    %v975 = vld [vmem:[#allocation11 + $0xa8] sm:$0xff]
    %v976 = vld [vmem:[#allocation11 + $0xb0] sm:$0xff]
    %v977 = vld [vmem:[#allocation11 + $0xb8] sm:$0xff]
    %v978 = vld [vmem:[#allocation11 + $0xc0] sm:$0xff]
    %v979 = vld [vmem:[#allocation11 + $0xc8] sm:$0xff]
    %v980 = vld [vmem:[#allocation11 + $0xd0] sm:$0xff]
    %v981 = vld [vmem:[#allocation11 + $0xd8] sm:$0xff]
    %v982 = vld [vmem:[#allocation11 + $0xe0] sm:$0xff]
    %v983 = vld [vmem:[#allocation11 + $0xe8] sm:$0xff]
    %v984 = vld [vmem:[#allocation11 + $0xf0] sm:$0xff]
    %v985 = vld [vmem:[#allocation11 + $0xf8] sm:$0xff]
    %v986 = vld [vmem:[%s10] sm:$0xf]
    %v988 = vlaneseq
    %v989 = vshrl.u32 %v988, 7
    %v990 = vsub.s32 0, %v989
    %v991 = vrot.slane %v986, %v990
    %v992 = vlaneseq
    %v993 = vshrl.u32 %v992, 7
    %v994 = vsub.s32 1, %v993
    %v995 = vrot.slane %v986, %v994
    %v996 = vlaneseq
    %v997 = vshrl.u32 %v996, 7
    %v998 = vsub.s32 2, %v997
    %v999 = vrot.slane %v986, %v998
    %v1000 = vlaneseq
    %v1001 = vshrl.u32 %v1000, 7
    %v1002 = vsub.s32 3, %v1001
    %v1003 = vrot.slane %v986, %v1002
    %v1040 = vunpack.c.l.b16 %v954
    %v1041 = vunpack.c.h.b16 %v954
    %v1042 = vunpack.c.l.b16 %v955
    %v1043 = vunpack.c.h.b16 %v955
    %v1044 = vunpack.c.l.b16 %v956
    %v1045 = vunpack.c.h.b16 %v956
    %v1046 = vunpack.c.l.b16 %v957
    %v1047 = vunpack.c.h.b16 %v957
    %v1048 = vunpack.c.l.b16 %v958
    %v1049 = vunpack.c.h.b16 %v958
    %v1050 = vunpack.c.l.b16 %v959
    %v1051 = vunpack.c.h.b16 %v959
    %v1052 = vunpack.c.l.b16 %v960
    %v1053 = vunpack.c.h.b16 %v960
    %v1054 = vunpack.c.l.b16 %v961
    %v1055 = vunpack.c.h.b16 %v961
    %v1056 = vunpack.c.l.b16 %v962
    %v1057 = vunpack.c.h.b16 %v962
    %v1058 = vunpack.c.l.b16 %v963
    %v1059 = vunpack.c.h.b16 %v963
    %v1060 = vunpack.c.l.b16 %v964
    %v1061 = vunpack.c.h.b16 %v964
    %v1062 = vunpack.c.l.b16 %v965
    %v1063 = vunpack.c.h.b16 %v965
    %v1064 = vunpack.c.l.b16 %v966
    %v1065 = vunpack.c.h.b16 %v966
    %v1066 = vunpack.c.l.b16 %v967
    %v1067 = vunpack.c.h.b16 %v967
    %v1068 = vunpack.c.l.b16 %v968
    %v1069 = vunpack.c.h.b16 %v968
    %v1070 = vunpack.c.l.b16 %v969
    %v1071 = vunpack.c.h.b16 %v969
    %v1072 = vunpack.c.l.b16 %v970
    %v1073 = vunpack.c.h.b16 %v970
    %v1074 = vunpack.c.l.b16 %v971
    %v1075 = vunpack.c.h.b16 %v971
    %v1076 = vunpack.c.l.b16 %v972
    %v1077 = vunpack.c.h.b16 %v972
    %v1078 = vunpack.c.l.b16 %v973
    %v1079 = vunpack.c.h.b16 %v973
    %v1080 = vunpack.c.l.b16 %v974
    %v1081 = vunpack.c.h.b16 %v974
    %v1082 = vunpack.c.l.b16 %v975
    %v1083 = vunpack.c.h.b16 %v975
    %v1084 = vunpack.c.l.b16 %v976
    %v1085 = vunpack.c.h.b16 %v976
    %v1086 = vunpack.c.l.b16 %v977
    %v1087 = vunpack.c.h.b16 %v977
    %v1088 = vunpack.c.l.b16 %v978
    %v1089 = vunpack.c.h.b16 %v978
    %v1090 = vunpack.c.l.b16 %v979
    %v1091 = vunpack.c.h.b16 %v979
    %v1092 = vunpack.c.l.b16 %v980
    %v1093 = vunpack.c.h.b16 %v980
    %v1094 = vunpack.c.l.b16 %v981
    %v1095 = vunpack.c.h.b16 %v981
    %v1096 = vunpack.c.l.b16 %v982
    %v1097 = vunpack.c.h.b16 %v982
    %v1098 = vunpack.c.l.b16 %v983
    %v1099 = vunpack.c.h.b16 %v983
    %v1100 = vunpack.c.l.b16 %v984
    %v1101 = vunpack.c.h.b16 %v984
    %v1102 = vunpack.c.l.b16 %v985
    %v1103 = vunpack.c.h.b16 %v985
    %v1104 = vpack.c.b16 %v1044, %v1040
    %v1105 = vpack.c.b16 %v1045, %v1041
    %v1106 = vpack.c.b16 %v1046, %v1042
    %v1107 = vpack.c.b16 %v1047, %v1043
    %v1108 = vpack.c.b16 %v1052, %v1048
    %v1109 = vpack.c.b16 %v1053, %v1049
    %v1110 = vpack.c.b16 %v1054, %v1050
    %v1111 = vpack.c.b16 %v1055, %v1051
    %v1112 = vpack.c.b16 %v1060, %v1056
    %v1113 = vpack.c.b16 %v1061, %v1057
    %v1114 = vpack.c.b16 %v1062, %v1058
    %v1115 = vpack.c.b16 %v1063, %v1059
    %v1116 = vpack.c.b16 %v1068, %v1064
    %v1117 = vpack.c.b16 %v1069, %v1065
    %v1118 = vpack.c.b16 %v1070, %v1066
    %v1119 = vpack.c.b16 %v1071, %v1067
    %v1120 = vpack.c.b16 %v1076, %v1072
    %v1121 = vpack.c.b16 %v1077, %v1073
    %v1122 = vpack.c.b16 %v1078, %v1074
    %v1123 = vpack.c.b16 %v1079, %v1075
    %v1124 = vpack.c.b16 %v1084, %v1080
    %v1125 = vpack.c.b16 %v1085, %v1081
    %v1126 = vpack.c.b16 %v1086, %v1082
    %v1127 = vpack.c.b16 %v1087, %v1083
    %v1128 = vpack.c.b16 %v1092, %v1088
    %v1129 = vpack.c.b16 %v1093, %v1089
    %v1130 = vpack.c.b16 %v1094, %v1090
    %v1131 = vpack.c.b16 %v1095, %v1091
    %v1132 = vpack.c.b16 %v1100, %v1096
    %v1133 = vpack.c.b16 %v1101, %v1097
    %v1134 = vpack.c.b16 %v1102, %v1098
    %v1135 = vpack.c.b16 %v1103, %v1099
    %1168 = vmatprep.subr.bf16.mxu0 %v1105
    %1169 = vmatpush1.bf16.msra.mxu0 %v1104
    %1170 = vmatprep.subr.bf16.mxu0 %v1109
    %1171 = vmatpush1.bf16.msra.mxu0 %v1108
    %1172 = vmatprep.subr.bf16.mxu0 %v1113
    %1173 = vmatpush1.bf16.msra.mxu0 %v1112
    %1174 = vmatprep.subr.bf16.mxu0 %v1117
    %1175 = vmatpush1.bf16.msra.mxu0 %v1116
    %1176 = vmatprep.subr.bf16.mxu0 %v1121
    %1177 = vmatpush1.bf16.msra.mxu0 %v1120
    %1178 = vmatprep.subr.bf16.mxu0 %v1125
    %1179 = vmatpush1.bf16.msra.mxu0 %v1124
    %1180 = vmatprep.subr.bf16.mxu0 %v1129
    %1181 = vmatpush1.bf16.msra.mxu0 %v1128
    %1182 = vmatprep.subr.bf16.mxu0 %v1133
    %1183 = vmatpush1.bf16.msra.mxu0 %v1132
    %1184 = vmatprep.subr.bf16.mxu0 0
    %1185 = vmatpush1.bf16.msra.mxu0 0
    %1186 = vmatprep.subr.bf16.mxu0 0
    %1187 = vmatpush1.bf16.msra.mxu0 0
    %1188 = vmatprep.subr.bf16.mxu0 0
    %1189 = vmatpush1.bf16.msra.mxu0 0
    %1190 = vmatprep.subr.bf16.mxu0 0
    %1191 = vmatpush1.bf16.msra.mxu0 0
    %1192 = vmatprep.subr.bf16.mxu0 0
    %1193 = vmatpush1.bf16.msra.mxu0 0
    %1194 = vmatprep.subr.bf16.mxu0 0
    %1195 = vmatpush1.bf16.msra.mxu0 0
    %1196 = vmatprep.subr.bf16.mxu0 0
    %1197 = vmatpush1.bf16.msra.mxu0 0
    %1198 = vmatprep.subr.bf16.mxu0 0
    %1199 = vmatpush1.bf16.msra.mxu0 0
    %1200 = vmatprep.mubr.bf16.mxu0 0
    %1201 = vmatmul.mubr.bf16.gmra.mrb[0].mxu0 %v953
    %v1202 = vpop.f32.mrb[0].mxu0
    %v1203 = vadd.f32 %v991, %v1202
    %v1204 = vpop.f32.mrb[0].mxu0
    %v1205 = vadd.f32 %v995, %v1204
    %v1206 = vpop.f32.mrb[0].mxu0
    %v1207 = vadd.f32 %v991, %v1206
    %v1208 = vpop.f32.mrb[0].mxu0
    %v1209 = vadd.f32 %v995, %v1208
    %1210 = vdwg.mxu0
    %1211 = vmatprep.subr.bf16.mxu0 %v1107
    %1212 = vmatpush1.bf16.msra.mxu0 %v1106
    %1213 = vmatprep.subr.bf16.mxu0 %v1111
    %1214 = vmatpush1.bf16.msra.mxu0 %v1110
    %1215 = vmatprep.subr.bf16.mxu0 %v1115
    %1216 = vmatpush1.bf16.msra.mxu0 %v1114
    %1217 = vmatprep.subr.bf16.mxu0 %v1119
    %1218 = vmatpush1.bf16.msra.mxu0 %v1118
    %1219 = vmatprep.subr.bf16.mxu0 %v1123
    %1220 = vmatpush1.bf16.msra.mxu0 %v1122
    %1221 = vmatprep.subr.bf16.mxu0 %v1127
    %1222 = vmatpush1.bf16.msra.mxu0 %v1126
    %1223 = vmatprep.subr.bf16.mxu0 %v1131
    %1224 = vmatpush1.bf16.msra.mxu0 %v1130
    %1225 = vmatprep.subr.bf16.mxu0 %v1135
    %1226 = vmatpush1.bf16.msra.mxu0 %v1134
    %1227 = vmatprep.subr.bf16.mxu0 0
    %1228 = vmatpush1.bf16.msra.mxu0 0
    %1229 = vmatprep.subr.bf16.mxu0 0
    %1230 = vmatpush1.bf16.msra.mxu0 0
    %1231 = vmatprep.subr.bf16.mxu0 0
    %1232 = vmatpush1.bf16.msra.mxu0 0
    %1233 = vmatprep.subr.bf16.mxu0 0
    %1234 = vmatpush1.bf16.msra.mxu0 0
    %1235 = vmatprep.subr.bf16.mxu0 0
    %1236 = vmatpush1.bf16.msra.mxu0 0
    %1237 = vmatprep.subr.bf16.mxu0 0
    %1238 = vmatpush1.bf16.msra.mxu0 0
    %1239 = vmatprep.subr.bf16.mxu0 0
    %1240 = vmatpush1.bf16.msra.mxu0 0
    %1241 = vmatprep.subr.bf16.mxu0 0
    %1242 = vmatpush1.bf16.msra.mxu0 0
    %1243 = vmatprep.mubr.bf16.mxu0 0
    %1244 = vmatmul.mubr.bf16.gmra.mrb[0].mxu0 %v953
    %v1245 = vpop.f32.mrb[0].mxu0
    %v1246 = vadd.f32 %v999, %v1245
    %v1247 = vpop.f32.mrb[0].mxu0
    %v1248 = vadd.f32 %v1003, %v1247
    %v1249 = vpop.f32.mrb[0].mxu0
    %v1250 = vadd.f32 %v999, %v1249
    %v1251 = vpop.f32.mrb[0].mxu0
    %v1252 = vadd.f32 %v1003, %v1251
    %1253 = vdwg.mxu0
    %v1254 = vmul.f32 %v1203, 0.5
    %v1255 = vmul.f32 %v1205, 0.5
    %v1256 = vmul.f32 %v1246, 0.5
    %v1257 = vmul.f32 %v1248, 0.5
    %v1258 = vmul.f32 %v1207, 0.5
    %v1259 = vmul.f32 %v1209, 0.5
    %v1260 = vmul.f32 %v1250, 0.5
    %v1261 = vmul.f32 %v1252, 0.5
    %v1262 = vmul.f32 %v1203, 0.044715
    %v1263 = vmul.f32 %v1205, 0.044715
    %v1264 = vmul.f32 %v1246, 0.044715
    %v1265 = vmul.f32 %v1248, 0.044715
    %v1266 = vmul.f32 %v1207, 0.044715
    %v1267 = vmul.f32 %v1209, 0.044715
    %v1268 = vmul.f32 %v1250, 0.044715
    %v1269 = vmul.f32 %v1252, 0.044715
    %v1270 = vmul.f32 %v1262, %v1203
    %v1271 = vmul.f32 %v1263, %v1205
    %v1272 = vmul.f32 %v1264, %v1246
    %v1273 = vmul.f32 %v1265, %v1248
    %v1274 = vmul.f32 %v1266, %v1207
    %v1275 = vmul.f32 %v1267, %v1209
    %v1276 = vmul.f32 %v1268, %v1250
    %v1277 = vmul.f32 %v1269, %v1252
    %v1278 = vmul.f32 %v1270, %v1203
    %v1279 = vmul.f32 %v1271, %v1205
    %v1280 = vmul.f32 %v1272, %v1246
    %v1281 = vmul.f32 %v1273, %v1248
    %v1282 = vmul.f32 %v1274, %v1207
    %v1283 = vmul.f32 %v1275, %v1209
    %v1284 = vmul.f32 %v1276, %v1250
    %v1285 = vmul.f32 %v1277, %v1252
    %v1286 = vadd.f32 %v1203, %v1278
    %v1287 = vadd.f32 %v1205, %v1279
    %v1288 = vadd.f32 %v1246, %v1280
    %v1289 = vadd.f32 %v1248, %v1281
    %v1290 = vadd.f32 %v1207, %v1282
    %v1291 = vadd.f32 %v1209, %v1283
    %v1292 = vadd.f32 %v1250, %v1284
    %v1293 = vadd.f32 %v1252, %v1285
    %v1294 = vmul.f32 %v1286, 0.7978846
    %v1295 = vmul.f32 %v1287, 0.7978846
    %v1296 = vmul.f32 %v1288, 0.7978846
    %v1297 = vmul.f32 %v1289, 0.7978846
    %v1298 = vmul.f32 %v1290, 0.7978846
    %v1299 = vmul.f32 %v1291, 0.7978846
    %v1300 = vmul.f32 %v1292, 0.7978846
    %v1301 = vmul.f32 %v1293, 0.7978846
    %v1302 = vtanh.pop %v1294
    %v1303 = vtanh.pop %v1295
    %v1304 = vtanh.pop %v1296
    %v1305 = vtanh.pop %v1297
    %v1306 = vtanh.pop %v1298
    %v1307 = vtanh.pop %v1299
    %v1308 = vtanh.pop %v1300
    %v1309 = vtanh.pop %v1301
    %v1310 = vadd.f32 %v1302, 1.0
    %v1311 = vadd.f32 %v1303, 1.0
    %v1312 = vadd.f32 %v1304, 1.0
    %v1313 = vadd.f32 %v1305, 1.0
    %v1314 = vadd.f32 %v1306, 1.0
    %v1315 = vadd.f32 %v1307, 1.0
    %v1316 = vadd.f32 %v1308, 1.0
    %v1317 = vadd.f32 %v1309, 1.0
    %v1318 = vmul.f32 %v1254, %v1310
    %v1319 = vmul.f32 %v1255, %v1311
    %v1320 = vmul.f32 %v1256, %v1312
    %v1321 = vmul.f32 %v1257, %v1313
    %v1322 = vmul.f32 %v1258, %v1314
    %v1323 = vmul.f32 %v1259, %v1315
    %v1324 = vmul.f32 %v1260, %v1316
    %v1325 = vmul.f32 %v1261, %v1317
    %v1326 = vpack.c.bf16 %v1322, %v1318
    %v1327 = vpack.c.bf16 %v1323, %v1319
    %v1328 = vpack.c.bf16 %v1324, %v1320
    %v1329 = vpack.c.bf16 %v1325, %v1321
    %v1330 = vld [vmem:[#allocation13] sm:$0xf]
    %v1331 = vld [vmem:[#allocation13 + $0x4] sm:$0xf]
    %v1332 = vld [vmem:[#allocation13 + $0x8] sm:$0xf]
    %v1333 = vld [vmem:[#allocation13 + $0xc] sm:$0xf]
    %v1334 = vld [vmem:[#allocation13 + $0x10] sm:$0xf]
    %v1335 = vld [vmem:[#allocation13 + $0x14] sm:$0xf]
    %v1336 = vld [vmem:[#allocation13 + $0x18] sm:$0xf]
    %v1337 = vld [vmem:[#allocation13 + $0x1c] sm:$0xf]
    %v1338 = vld [vmem:[#allocation13 + $0x20] sm:$0xf]
    %v1339 = vld [vmem:[#allocation13 + $0x24] sm:$0xf]
    %v1340 = vld [vmem:[#allocation13 + $0x28] sm:$0xf]
    %v1341 = vld [vmem:[#allocation13 + $0x2c] sm:$0xf]
    %v1342 = vld [vmem:[#allocation13 + $0x30] sm:$0xf]
    %v1343 = vld [vmem:[#allocation13 + $0x34] sm:$0xf]
    %v1344 = vld [vmem:[#allocation13 + $0x38] sm:$0xf]
    %v1345 = vld [vmem:[#allocation13 + $0x3c] sm:$0xf]
    %v1346 = vld [vmem:[#allocation13 + $0x40] sm:$0xf]
    %v1347 = vld [vmem:[#allocation13 + $0x44] sm:$0xf]
    %v1348 = vld [vmem:[#allocation13 + $0x48] sm:$0xf]
    %v1349 = vld [vmem:[#allocation13 + $0x4c] sm:$0xf]
    %v1350 = vld [vmem:[#allocation13 + $0x50] sm:$0xf]
    %v1351 = vld [vmem:[#allocation13 + $0x54] sm:$0xf]
    %v1352 = vld [vmem:[#allocation13 + $0x58] sm:$0xf]
    %v1353 = vld [vmem:[#allocation13 + $0x5c] sm:$0xf]
    %v1354 = vld [vmem:[#allocation13 + $0x60] sm:$0xf]
    %v1355 = vld [vmem:[#allocation13 + $0x64] sm:$0xf]
    %v1356 = vld [vmem:[#allocation13 + $0x68] sm:$0xf]
    %v1357 = vld [vmem:[#allocation13 + $0x6c] sm:$0xf]
    %v1358 = vld [vmem:[#allocation13 + $0x70] sm:$0xf]
    %v1359 = vld [vmem:[#allocation13 + $0x74] sm:$0xf]
    %v1360 = vld [vmem:[#allocation13 + $0x78] sm:$0xf]
    %v1361 = vld [vmem:[#allocation13 + $0x7c] sm:$0xf]
    %v1362 = vld [vmem:[#allocation13 + $0x80] sm:$0xf]
    %v1363 = vld [vmem:[#allocation13 + $0x84] sm:$0xf]
    %v1364 = vld [vmem:[#allocation13 + $0x88] sm:$0xf]
    %v1365 = vld [vmem:[#allocation13 + $0x8c] sm:$0xf]
    %v1366 = vld [vmem:[#allocation13 + $0x90] sm:$0xf]
    %v1367 = vld [vmem:[#allocation13 + $0x94] sm:$0xf]
    %v1368 = vld [vmem:[#allocation13 + $0x98] sm:$0xf]
    %v1369 = vld [vmem:[#allocation13 + $0x9c] sm:$0xf]
    %v1370 = vld [vmem:[#allocation13 + $0xa0] sm:$0xf]
    %v1371 = vld [vmem:[#allocation13 + $0xa4] sm:$0xf]
    %v1372 = vld [vmem:[#allocation13 + $0xa8] sm:$0xf]
    %v1373 = vld [vmem:[#allocation13 + $0xac] sm:$0xf]
    %v1374 = vld [vmem:[#allocation13 + $0xb0] sm:$0xf]
    %v1375 = vld [vmem:[#allocation13 + $0xb4] sm:$0xf]
    %v1376 = vld [vmem:[#allocation13 + $0xb8] sm:$0xf]
    %v1377 = vld [vmem:[#allocation13 + $0xbc] sm:$0xf]
    %v1378 = vld [vmem:[#allocation13 + $0xc0] sm:$0xf]
    %v1379 = vld [vmem:[#allocation13 + $0xc4] sm:$0xf]
    %v1380 = vld [vmem:[#allocation13 + $0xc8] sm:$0xf]
    %v1381 = vld [vmem:[#allocation13 + $0xcc] sm:$0xf]
    %v1382 = vld [vmem:[#allocation13 + $0xd0] sm:$0xf]
    %v1383 = vld [vmem:[#allocation13 + $0xd4] sm:$0xf]
    %v1384 = vld [vmem:[#allocation13 + $0xd8] sm:$0xf]
    %v1385 = vld [vmem:[#allocation13 + $0xdc] sm:$0xf]
    %v1386 = vld [vmem:[#allocation13 + $0xe0] sm:$0xf]
    %v1387 = vld [vmem:[#allocation13 + $0xe4] sm:$0xf]
    %v1388 = vld [vmem:[#allocation13 + $0xe8] sm:$0xf]
    %v1389 = vld [vmem:[#allocation13 + $0xec] sm:$0xf]
    %v1390 = vld [vmem:[#allocation13 + $0xf0] sm:$0xf]
    %v1391 = vld [vmem:[#allocation13 + $0xf4] sm:$0xf]
    %v1392 = vld [vmem:[#allocation13 + $0xf8] sm:$0xf]
    %v1393 = vld [vmem:[#allocation13 + $0xfc] sm:$0xf]
    %v1394 = vld [vmem:[%s12] sm:$0x1]
    %v1396 = vlaneseq
    %v1397 = vshrl.u32 %v1396, 7
    %v1398 = vsub.s32 0, %v1397
    %v1399 = vrot.slane %v1394, %v1398
    %v1465 = vunpack.c.l.b16 %v1330
    %v1466 = vunpack.c.l.b16 %v1331
    %v1467 = vunpack.c.l.b16 %v1332
    %v1468 = vunpack.c.l.b16 %v1333
    %v1469 = vunpack.c.l.b16 %v1334
    %v1470 = vunpack.c.l.b16 %v1335
    %v1471 = vunpack.c.l.b16 %v1336
    %v1472 = vunpack.c.l.b16 %v1337
    %v1473 = vunpack.c.l.b16 %v1338
    %v1474 = vunpack.c.l.b16 %v1339
    %v1475 = vunpack.c.l.b16 %v1340
    %v1476 = vunpack.c.l.b16 %v1341
    %v1477 = vunpack.c.l.b16 %v1342
    %v1478 = vunpack.c.l.b16 %v1343
    %v1479 = vunpack.c.l.b16 %v1344
    %v1480 = vunpack.c.l.b16 %v1345
    %v1481 = vunpack.c.l.b16 %v1346
    %v1482 = vunpack.c.l.b16 %v1347
    %v1483 = vunpack.c.l.b16 %v1348
    %v1484 = vunpack.c.l.b16 %v1349
    %v1485 = vunpack.c.l.b16 %v1350
    %v1486 = vunpack.c.l.b16 %v1351
    %v1487 = vunpack.c.l.b16 %v1352
    %v1488 = vunpack.c.l.b16 %v1353
    %v1489 = vunpack.c.l.b16 %v1354
    %v1490 = vunpack.c.l.b16 %v1355
    %v1491 = vunpack.c.l.b16 %v1356
    %v1492 = vunpack.c.l.b16 %v1357
    %v1493 = vunpack.c.l.b16 %v1358
    %v1494 = vunpack.c.l.b16 %v1359
    %v1495 = vunpack.c.l.b16 %v1360
    %v1496 = vunpack.c.l.b16 %v1361
    %v1497 = vunpack.c.l.b16 %v1362
    %v1498 = vunpack.c.l.b16 %v1363
    %v1499 = vunpack.c.l.b16 %v1364
    %v1500 = vunpack.c.l.b16 %v1365
    %v1501 = vunpack.c.l.b16 %v1366
    %v1502 = vunpack.c.l.b16 %v1367
    %v1503 = vunpack.c.l.b16 %v1368
    %v1504 = vunpack.c.l.b16 %v1369
    %v1505 = vunpack.c.l.b16 %v1370
    %v1506 = vunpack.c.l.b16 %v1371
    %v1507 = vunpack.c.l.b16 %v1372
    %v1508 = vunpack.c.l.b16 %v1373
    %v1509 = vunpack.c.l.b16 %v1374
    %v1510 = vunpack.c.l.b16 %v1375
    %v1511 = vunpack.c.l.b16 %v1376
    %v1512 = vunpack.c.l.b16 %v1377
    %v1513 = vunpack.c.l.b16 %v1378
    %v1514 = vunpack.c.l.b16 %v1379
    %v1515 = vunpack.c.l.b16 %v1380
    %v1516 = vunpack.c.l.b16 %v1381
    %v1517 = vunpack.c.l.b16 %v1382
    %v1518 = vunpack.c.l.b16 %v1383
    %v1519 = vunpack.c.l.b16 %v1384
    %v1520 = vunpack.c.l.b16 %v1385
    %v1521 = vunpack.c.l.b16 %v1386
    %v1522 = vunpack.c.l.b16 %v1387
    %v1523 = vunpack.c.l.b16 %v1388
    %v1524 = vunpack.c.l.b16 %v1389
    %v1525 = vunpack.c.l.b16 %v1390
    %v1526 = vunpack.c.l.b16 %v1391
    %v1527 = vunpack.c.l.b16 %v1392
    %v1528 = vunpack.c.l.b16 %v1393
    %v1529 = vpack.c.b16 %v1466, %v1465
    %v1530 = vpack.c.b16 %v1468, %v1467
    %v1531 = vpack.c.b16 %v1470, %v1469
    %v1532 = vpack.c.b16 %v1472, %v1471
    %v1533 = vpack.c.b16 %v1474, %v1473
    %v1534 = vpack.c.b16 %v1476, %v1475
    %v1535 = vpack.c.b16 %v1478, %v1477
    %v1536 = vpack.c.b16 %v1480, %v1479
    %v1537 = vpack.c.b16 %v1482, %v1481
    %v1538 = vpack.c.b16 %v1484, %v1483
    %v1539 = vpack.c.b16 %v1486, %v1485
    %v1540 = vpack.c.b16 %v1488, %v1487
    %v1541 = vpack.c.b16 %v1490, %v1489
    %v1542 = vpack.c.b16 %v1492, %v1491
    %v1543 = vpack.c.b16 %v1494, %v1493
    %v1544 = vpack.c.b16 %v1496, %v1495
    %v1545 = vpack.c.b16 %v1498, %v1497
    %v1546 = vpack.c.b16 %v1500, %v1499
    %v1547 = vpack.c.b16 %v1502, %v1501
    %v1548 = vpack.c.b16 %v1504, %v1503
    %v1549 = vpack.c.b16 %v1506, %v1505
    %v1550 = vpack.c.b16 %v1508, %v1507
    %v1551 = vpack.c.b16 %v1510, %v1509
    %v1552 = vpack.c.b16 %v1512, %v1511
    %v1553 = vpack.c.b16 %v1514, %v1513
    %v1554 = vpack.c.b16 %v1516, %v1515
    %v1555 = vpack.c.b16 %v1518, %v1517
    %v1556 = vpack.c.b16 %v1520, %v1519
    %v1557 = vpack.c.b16 %v1522, %v1521
    %v1558 = vpack.c.b16 %v1524, %v1523
    %v1559 = vpack.c.b16 %v1526, %v1525
    %v1560 = vpack.c.b16 %v1528, %v1527
    %1593 = vmatprep.subr.bf16.mxu0 0
    %1594 = vmatpush1.bf16.msra.mxu0 %v1529
    %1595 = vmatprep.subr.bf16.mxu0 0
    %1596 = vmatpush1.bf16.msra.mxu0 %v1530
    %1597 = vmatprep.subr.bf16.mxu0 0
    %1598 = vmatpush1.bf16.msra.mxu0 %v1531
    %1599 = vmatprep.subr.bf16.mxu0 0
    %1600 = vmatpush1.bf16.msra.mxu0 %v1532
    %1601 = vmatprep.subr.bf16.mxu0 0
    %1602 = vmatpush1.bf16.msra.mxu0 %v1533
    %1603 = vmatprep.subr.bf16.mxu0 0
    %1604 = vmatpush1.bf16.msra.mxu0 %v1534
    %1605 = vmatprep.subr.bf16.mxu0 0
    %1606 = vmatpush1.bf16.msra.mxu0 %v1535
    %1607 = vmatprep.subr.bf16.mxu0 0
    %1608 = vmatpush1.bf16.msra.mxu0 %v1536
    %1609 = vmatprep.subr.bf16.mxu0 0
    %1610 = vmatpush1.bf16.msra.mxu0 %v1537
    %1611 = vmatprep.subr.bf16.mxu0 0
    %1612 = vmatpush1.bf16.msra.mxu0 %v1538
    %1613 = vmatprep.subr.bf16.mxu0 0
    %1614 = vmatpush1.bf16.msra.mxu0 %v1539
    %1615 = vmatprep.subr.bf16.mxu0 0
    %1616 = vmatpush1.bf16.msra.mxu0 %v1540
    %1617 = vmatprep.subr.bf16.mxu0 0
    %1618 = vmatpush1.bf16.msra.mxu0 %v1541
    %1619 = vmatprep.subr.bf16.mxu0 0
    %1620 = vmatpush1.bf16.msra.mxu0 %v1542
    %1621 = vmatprep.subr.bf16.mxu0 0
    %1622 = vmatpush1.bf16.msra.mxu0 %v1543
    %1623 = vmatprep.subr.bf16.mxu0 0
    %1624 = vmatpush1.bf16.msra.mxu0 %v1544
    %1625 = vmatprep.mubr.bf16.mxu0 %v1327
    %1626 = vmatmul.mubr.bf16.gmra.mrb[0].mxu0 %v1326
    %v1627 = vpop.f32.mrb[0].mxu0
    %v1628 = vadd.f32 %v1399, %v1627
    %v1629 = vpop.f32.mrb[0].mxu0
    %v1630 = vpop.f32.mrb[0].mxu0
    %v1631 = vadd.f32 %v1399, %v1630
    %v1632 = vpop.f32.mrb[0].mxu0
    %1633 = vdwg.mxu0
    %1634 = vmatprep.subr.bf16.mxu0 0
    %1635 = vmatpush1.bf16.msra.mxu0 %v1545
    %1636 = vmatprep.subr.bf16.mxu0 0
    %1637 = vmatpush1.bf16.msra.mxu0 %v1546
    %1638 = vmatprep.subr.bf16.mxu0 0
    %1639 = vmatpush1.bf16.msra.mxu0 %v1547
    %1640 = vmatprep.subr.bf16.mxu0 0
    %1641 = vmatpush1.bf16.msra.mxu0 %v1548
    %1642 = vmatprep.subr.bf16.mxu0 0
    %1643 = vmatpush1.bf16.msra.mxu0 %v1549
    %1644 = vmatprep.subr.bf16.mxu0 0
    %1645 = vmatpush1.bf16.msra.mxu0 %v1550
    %1646 = vmatprep.subr.bf16.mxu0 0
    %1647 = vmatpush1.bf16.msra.mxu0 %v1551
    %1648 = vmatprep.subr.bf16.mxu0 0
    %1649 = vmatpush1.bf16.msra.mxu0 %v1552
    %1650 = vmatprep.subr.bf16.mxu0 0
    %1651 = vmatpush1.bf16.msra.mxu0 %v1553
    %1652 = vmatprep.subr.bf16.mxu0 0
    %1653 = vmatpush1.bf16.msra.mxu0 %v1554
    %1654 = vmatprep.subr.bf16.mxu0 0
    %1655 = vmatpush1.bf16.msra.mxu0 %v1555
    %1656 = vmatprep.subr.bf16.mxu0 0
    %1657 = vmatpush1.bf16.msra.mxu0 %v1556
    %1658 = vmatprep.subr.bf16.mxu0 0
    %1659 = vmatpush1.bf16.msra.mxu0 %v1557
    %1660 = vmatprep.subr.bf16.mxu0 0
    %1661 = vmatpush1.bf16.msra.mxu0 %v1558
    %1662 = vmatprep.subr.bf16.mxu0 0
    %1663 = vmatpush1.bf16.msra.mxu0 %v1559
    %1664 = vmatprep.subr.bf16.mxu0 0
    %1665 = vmatpush1.bf16.msra.mxu0 %v1560
    %1666 = vmatprep.mubr.bf16.mxu0 %v1329
    %1667 = vmatmul.mubr.bf16.gmra.mrb[0].mxu0 %v1328
    %v1668 = vpop.f32.mrb[0].mxu0
    %v1669 = vadd.f32 %v1628, %v1668
    %v1670 = vpop.f32.mrb[0].mxu0
    %v1671 = vpop.f32.mrb[0].mxu0
    %v1672 = vadd.f32 %v1631, %v1671
    %v1673 = vpop.f32.mrb[0].mxu0
    %1674 = vdwg.mxu0
    %v1675 = vadd.f32 %v951, %v1669
    %v1676 = vadd.f32 %v952, %v1672
    %v1677 = vld [vmem:[%s13] sm:$0x1]
    %v1678 = vld [vmem:[%s14] sm:$0x1]
    %1679 = vadd.xlane.f32.xlu0 %v1675
    %v1680 = vpop.xlane.xlu0 %1679
    %1681 = vadd.xlane.f32.xlu0 %v1676
    %v1682 = vpop.xlane.xlu0 %1681
    %v1683 = vmul.f32 %v1680, %v904
    %v1684 = vmul.f32 %v1682, %v904
    %v1685 = vsub.f32 %v1675, %v1683
    %v1686 = vsub.f32 %v1676, %v1684
    %v1687 = vmul.f32 %v1685, %v1685
    %v1688 = vmul.f32 %v1686, %v1686
    %1689 = vadd.xlane.f32.xlu0 %v1687
    %v1690 = vpop.xlane.xlu0 %1689
    %1691 = vadd.xlane.f32.xlu0 %v1688
    %v1692 = vpop.xlane.xlu0 %1691
    %v1693 = vmul.f32 %v1690, %v904
    %v1694 = vmul.f32 %v1692, %v904
    %v1695 = vadd.f32 %v1693, 1e-05
    %v1696 = vadd.f32 %v1694, 1e-05
    %v1697 = vrsqrt.pop %v1695
    %v1698 = vmul.f32 %v1695, %v1697
    %vm1699 = vcmp.eq.f32.partialorder %v1695, inf
    %v1700 = vsel %vm1699, %v1695, %v1698
    %vm1701 = vcmp.eq.f32.partialorder %v1695, 0.0
    %v1702 = vand.u32 %v1695, 2147483648
    %v1703 = vsel %vm1701, %v1702, %v1700
    %v1704 = vrsqrt.pop %v1696
    %v1705 = vmul.f32 %v1696, %v1704
    %vm1706 = vcmp.eq.f32.partialorder %v1696, inf
    %v1707 = vsel %vm1706, %v1696, %v1705
    %vm1708 = vcmp.eq.f32.partialorder %v1696, 0.0
    %v1709 = vand.u32 %v1696, 2147483648
    %v1710 = vsel %vm1708, %v1709, %v1707
    %v1711 = vrcp.pop %v1703
    %v1712 = vmul.f32 %v1685, %v1711
    %v1713 = vrcp.pop %v1710
    %v1714 = vmul.f32 %v1686, %v1713
    %v1716 = vlaneseq
    %v1717 = vshrl.u32 %v1716, 7
    %v1718 = vsub.s32 0, %v1717
    %v1719 = vrot.slane %v1677, %v1718
    %v1721 = vmul.f32 %v1712, %v1719
    %v1722 = vmul.f32 %v1714, %v1719
    %v1724 = vlaneseq
    %v1725 = vshrl.u32 %v1724, 7
    %v1726 = vsub.s32 0, %v1725
    %v1727 = vrot.slane %v1678, %v1726
    %v1729 = vadd.f32 %v1721, %v1727
    %v1730 = vadd.f32 %v1722, %v1727
    %v1731 = vld [vmem:[%s15] sm:$0x1]
    %v1732 = vpack.c.bf16 %v1730, %v1729
    %vm1733 = vcmask 130048
    %v1735 = vsel %vm1733, %v1731, 0
    %1737 = vmatprep.subr.bf16.mxu0 0
    %1738 = vmatpush1.bf16.msra.mxu0 %v1732
    %1739 = vmatprep.subr.bf16.mxu0 0
    %1740 = vmatpush1.bf16.msra.mxu0 0
    %1741 = vmatprep.subr.bf16.mxu0 0
    %1742 = vmatpush1.bf16.msra.mxu0 0
    %1743 = vmatprep.subr.bf16.mxu0 0
    %1744 = vmatpush1.bf16.msra.mxu0 0
    %1745 = vmatprep.subr.bf16.mxu0 0
    %1746 = vmatpush1.bf16.msra.mxu0 0
    %1747 = vmatprep.subr.bf16.mxu0 0
    %1748 = vmatpush1.bf16.msra.mxu0 0
    %1749 = vmatprep.subr.bf16.mxu0 0
    %1750 = vmatpush1.bf16.msra.mxu0 0
    %1751 = vmatprep.subr.bf16.mxu0 0
    %1752 = vmatpush1.bf16.msra.mxu0 0
    %1753 = vmatprep.subr.bf16.mxu0 0
    %1754 = vmatpush1.bf16.msra.mxu0 0
    %1755 = vmatprep.subr.bf16.mxu0 0
    %1756 = vmatpush1.bf16.msra.mxu0 0
    %1757 = vmatprep.subr.bf16.mxu0 0
    %1758 = vmatpush1.bf16.msra.mxu0 0
    %1759 = vmatprep.subr.bf16.mxu0 0
    %1760 = vmatpush1.bf16.msra.mxu0 0
    %1761 = vmatprep.subr.bf16.mxu0 0
    %1762 = vmatpush1.bf16.msra.mxu0 0
    %1763 = vmatprep.subr.bf16.mxu0 0
    %1764 = vmatpush1.bf16.msra.mxu0 0
    %1765 = vmatprep.subr.bf16.mxu0 0
    %1766 = vmatpush1.bf16.msra.mxu0 0
    %1767 = vmatprep.subr.bf16.mxu0 0
    %1768 = vmatpush1.bf16.msra.mxu0 0
    %1769 = vmatprep.mubr.bf16.mxu0 0
    %1770 = vmatmul.mubr.bf16.gmra.mrb[0].mxu0 %v1735
    %v1771 = vpop.f32.mrb[0].mxu0
    %v1772 = vadd.f32 0.0, %v1771
    %v1773 = vpop.f32.mrb[0].mxu0
    %v1774 = vpop.f32.mrb[0].mxu0
    %v1775 = vpop.f32.mrb[0].mxu0
    %1776 = vdwg.mxu0
    %v1777 = vld [vmem:[%s16] sm:$0x1]
    %v1778 = vld [vmem:[%s17] sm:$0x1]
    %vm1779 = vcmask 1041408
    %v1780 = vsel %vm1779, %v1772, 0.0
    %1781 = vadd.xlane.f32.xlu0 %v1780
    %v1782 = vpop.xlane.xlu0 %1781
    %v1783 = vmul.f32 %v1782, %v904
    %v1784 = vsub.f32 %v1772, %v1783
    %v1785 = vmul.f32 %v1784, %v1784
    %v1786 = vsel %vm1779, %v1785, 0.0
    %1787 = vadd.xlane.f32.xlu0 %v1786
    %v1788 = vpop.xlane.xlu0 %1787
    %v1789 = vmul.f32 %v1788, %v904
    %v1790 = vadd.f32 %v1789, 1e-05
    %v1791 = vrsqrt.pop %v1790
    %v1792 = vmul.f32 %v1790, %v1791
    %vm1793 = vcmp.eq.f32.partialorder %v1790, inf
    %v1794 = vsel %vm1793, %v1790, %v1792
    %vm1795 = vcmp.eq.f32.partialorder %v1790, 0.0
    %v1796 = vand.u32 %v1790, 2147483648
    %v1797 = vsel %vm1795, %v1796, %v1794
    %v1798 = vrcp.pop %v1797
    %v1799 = vmul.f32 %v1784, %v1798
    %v1801 = vlaneseq
    %v1802 = vshrl.u32 %v1801, 7
    %v1803 = vsub.s32 0, %v1802
    %v1804 = vrot.slane %v1777, %v1803
    %v1806 = vmul.f32 %v1799, %v1804
    %v1808 = vlaneseq
    %v1809 = vshrl.u32 %v1808, 7
    %v1810 = vsub.s32 0, %v1809
    %v1811 = vrot.slane %v1778, %v1810
    %v1813 = vadd.f32 %v1806, %v1811
    %v1814 = vpack.c.bf16 %v1813, %v1813
    %v1815 = vld [vmem:[#allocation14] sm:$0xff]
    %v1816 = vld [vmem:[#allocation14 + $0x8] sm:$0xff]
    %v1817 = vld [vmem:[#allocation14 + $0x10] sm:$0xff]
    %v1818 = vld [vmem:[#allocation14 + $0x18] sm:$0xff]
    %v1819 = vld [vmem:[#allocation14 + $0x20] sm:$0xff]
    %v1820 = vld [vmem:[#allocation14 + $0x28] sm:$0xff]
    %v1821 = vld [vmem:[#allocation14 + $0x30] sm:$0xff]
    %v1822 = vld [vmem:[#allocation14 + $0x38] sm:$0xff]
    %v1823 = vld [vmem:[#allocation14 + $0x40] sm:$0xff]
    %v1824 = vld [vmem:[#allocation14 + $0x48] sm:$0xff]
    %v1825 = vld [vmem:[#allocation14 + $0x50] sm:$0xff]
    %v1826 = vld [vmem:[#allocation14 + $0x58] sm:$0xff]
    %v1827 = vld [vmem:[#allocation14 + $0x60] sm:$0xff]
    %v1828 = vld [vmem:[#allocation14 + $0x68] sm:$0xff]
    %v1829 = vld [vmem:[#allocation14 + $0x70] sm:$0xff]
    %v1830 = vld [vmem:[#allocation14 + $0x78] sm:$0xff]
    %v1831 = vld [vmem:[#allocation14 + $0x80] sm:$0xff]
    %v1832 = vld [vmem:[#allocation14 + $0x88] sm:$0xff]
    %v1833 = vld [vmem:[#allocation14 + $0x90] sm:$0xff]
    %v1834 = vld [vmem:[#allocation14 + $0x98] sm:$0xff]
    %v1835 = vld [vmem:[#allocation14 + $0xa0] sm:$0xff]
    %v1836 = vld [vmem:[#allocation14 + $0xa8] sm:$0xff]
    %v1837 = vld [vmem:[#allocation14 + $0xb0] sm:$0xff]
    %v1838 = vld [vmem:[#allocation14 + $0xb8] sm:$0xff]
    %v1839 = vld [vmem:[#allocation14 + $0xc0] sm:$0xff]
    %v1840 = vld [vmem:[#allocation14 + $0xc8] sm:$0xff]
    %v1841 = vld [vmem:[#allocation14 + $0xd0] sm:$0xff]
    %v1842 = vld [vmem:[#allocation14 + $0xd8] sm:$0xff]
    %v1843 = vld [vmem:[#allocation14 + $0xe0] sm:$0xff]
    %v1844 = vld [vmem:[#allocation14 + $0xe8] sm:$0xff]
    %v1845 = vld [vmem:[#allocation14 + $0xf0] sm:$0xff]
    %v1846 = vld [vmem:[#allocation14 + $0xf8] sm:$0xff]
    %v1847 = vld [vmem:[%s19] sm:$0xf]
    %v1849 = vlaneseq
    %v1850 = vshrl.u32 %v1849, 7
    %v1851 = vsub.s32 0, %v1850
    %v1852 = vrot.slane %v1847, %v1851
    %v1853 = vlaneseq
    %v1854 = vshrl.u32 %v1853, 7
    %v1855 = vsub.s32 1, %v1854
    %v1856 = vrot.slane %v1847, %v1855
    %v1857 = vlaneseq
    %v1858 = vshrl.u32 %v1857, 7
    %v1859 = vsub.s32 2, %v1858
    %v1860 = vrot.slane %v1847, %v1859
    %v1861 = vlaneseq
    %v1862 = vshrl.u32 %v1861, 7
    %v1863 = vsub.s32 3, %v1862
    %v1864 = vrot.slane %v1847, %v1863
    %v1901 = vunpack.c.l.b16 %v1815
    %v1902 = vunpack.c.h.b16 %v1815
    %v1903 = vunpack.c.l.b16 %v1816
    %v1904 = vunpack.c.h.b16 %v1816
    %v1905 = vunpack.c.l.b16 %v1817
    %v1906 = vunpack.c.h.b16 %v1817
    %v1907 = vunpack.c.l.b16 %v1818
    %v1908 = vunpack.c.h.b16 %v1818
    %v1909 = vunpack.c.l.b16 %v1819
    %v1910 = vunpack.c.h.b16 %v1819
    %v1911 = vunpack.c.l.b16 %v1820
    %v1912 = vunpack.c.h.b16 %v1820
    %v1913 = vunpack.c.l.b16 %v1821
    %v1914 = vunpack.c.h.b16 %v1821
    %v1915 = vunpack.c.l.b16 %v1822
    %v1916 = vunpack.c.h.b16 %v1822
    %v1917 = vunpack.c.l.b16 %v1823
    %v1918 = vunpack.c.h.b16 %v1823
    %v1919 = vunpack.c.l.b16 %v1824
    %v1920 = vunpack.c.h.b16 %v1824
    %v1921 = vunpack.c.l.b16 %v1825
    %v1922 = vunpack.c.h.b16 %v1825
    %v1923 = vunpack.c.l.b16 %v1826
    %v1924 = vunpack.c.h.b16 %v1826
    %v1925 = vunpack.c.l.b16 %v1827
    %v1926 = vunpack.c.h.b16 %v1827
    %v1927 = vunpack.c.l.b16 %v1828
    %v1928 = vunpack.c.h.b16 %v1828
    %v1929 = vunpack.c.l.b16 %v1829
    %v1930 = vunpack.c.h.b16 %v1829
    %v1931 = vunpack.c.l.b16 %v1830
    %v1932 = vunpack.c.h.b16 %v1830
    %v1933 = vunpack.c.l.b16 %v1831
    %v1934 = vunpack.c.h.b16 %v1831
    %v1935 = vunpack.c.l.b16 %v1832
    %v1936 = vunpack.c.h.b16 %v1832
    %v1937 = vunpack.c.l.b16 %v1833
    %v1938 = vunpack.c.h.b16 %v1833
    %v1939 = vunpack.c.l.b16 %v1834
    %v1940 = vunpack.c.h.b16 %v1834
    %v1941 = vunpack.c.l.b16 %v1835
    %v1942 = vunpack.c.h.b16 %v1835
    %v1943 = vunpack.c.l.b16 %v1836
    %v1944 = vunpack.c.h.b16 %v1836
    %v1945 = vunpack.c.l.b16 %v1837
    %v1946 = vunpack.c.h.b16 %v1837
    %v1947 = vunpack.c.l.b16 %v1838
    %v1948 = vunpack.c.h.b16 %v1838
    %v1949 = vunpack.c.l.b16 %v1839
    %v1950 = vunpack.c.h.b16 %v1839
    %v1951 = vunpack.c.l.b16 %v1840
    %v1952 = vunpack.c.h.b16 %v1840
    %v1953 = vunpack.c.l.b16 %v1841
    %v1954 = vunpack.c.h.b16 %v1841
    %v1955 = vunpack.c.l.b16 %v1842
    %v1956 = vunpack.c.h.b16 %v1842
    %v1957 = vunpack.c.l.b16 %v1843
    %v1958 = vunpack.c.h.b16 %v1843
    %v1959 = vunpack.c.l.b16 %v1844
    %v1960 = vunpack.c.h.b16 %v1844
    %v1961 = vunpack.c.l.b16 %v1845
    %v1962 = vunpack.c.h.b16 %v1845
    %v1963 = vunpack.c.l.b16 %v1846
    %v1964 = vunpack.c.h.b16 %v1846
    %v1965 = vpack.c.b16 %v1905, %v1901
    %v1966 = vpack.c.b16 %v1906, %v1902
    %v1967 = vpack.c.b16 %v1907, %v1903
    %v1968 = vpack.c.b16 %v1908, %v1904
    %v1969 = vpack.c.b16 %v1913, %v1909
    %v1970 = vpack.c.b16 %v1914, %v1910
    %v1971 = vpack.c.b16 %v1915, %v1911
    %v1972 = vpack.c.b16 %v1916, %v1912
    %v1973 = vpack.c.b16 %v1921, %v1917
    %v1974 = vpack.c.b16 %v1922, %v1918
    %v1975 = vpack.c.b16 %v1923, %v1919
    %v1976 = vpack.c.b16 %v1924, %v1920
    %v1977 = vpack.c.b16 %v1929, %v1925
    %v1978 = vpack.c.b16 %v1930, %v1926
    %v1979 = vpack.c.b16 %v1931, %v1927
    %v1980 = vpack.c.b16 %v1932, %v1928
    %v1981 = vpack.c.b16 %v1937, %v1933
    %v1982 = vpack.c.b16 %v1938, %v1934
    %v1983 = vpack.c.b16 %v1939, %v1935
    %v1984 = vpack.c.b16 %v1940, %v1936
    %v1985 = vpack.c.b16 %v1945, %v1941
    %v1986 = vpack.c.b16 %v1946, %v1942
    %v1987 = vpack.c.b16 %v1947, %v1943
    %v1988 = vpack.c.b16 %v1948, %v1944
    %v1989 = vpack.c.b16 %v1953, %v1949
    %v1990 = vpack.c.b16 %v1954, %v1950
    %v1991 = vpack.c.b16 %v1955, %v1951
    %v1992 = vpack.c.b16 %v1956, %v1952
    %v1993 = vpack.c.b16 %v1961, %v1957
    %v1994 = vpack.c.b16 %v1962, %v1958
    %v1995 = vpack.c.b16 %v1963, %v1959
    %v1996 = vpack.c.b16 %v1964, %v1960
    %2029 = vmatprep.subr.bf16.mxu0 %v1966
    %2030 = vmatpush1.bf16.msra.mxu0 %v1965
    %2031 = vmatprep.subr.bf16.mxu0 %v1970
    %2032 = vmatpush1.bf16.msra.mxu0 %v1969
    %2033 = vmatprep.subr.bf16.mxu0 %v1974
    %2034 = vmatpush1.bf16.msra.mxu0 %v1973
    %2035 = vmatprep.subr.bf16.mxu0 %v1978
    %2036 = vmatpush1.bf16.msra.mxu0 %v1977
    %2037 = vmatprep.subr.bf16.mxu0 %v1982
    %2038 = vmatpush1.bf16.msra.mxu0 %v1981
    %2039 = vmatprep.subr.bf16.mxu0 %v1986
    %2040 = vmatpush1.bf16.msra.mxu0 %v1985
    %2041 = vmatprep.subr.bf16.mxu0 %v1990
    %2042 = vmatpush1.bf16.msra.mxu0 %v1989
    %2043 = vmatprep.subr.bf16.mxu0 %v1994
    %2044 = vmatpush1.bf16.msra.mxu0 %v1993
    %2045 = vmatprep.subr.bf16.mxu0 0
    %2046 = vmatpush1.bf16.msra.mxu0 0
    %2047 = vmatprep.subr.bf16.mxu0 0
    %2048 = vmatpush1.bf16.msra.mxu0 0
    %2049 = vmatprep.subr.bf16.mxu0 0
    %2050 = vmatpush1.bf16.msra.mxu0 0
    %2051 = vmatprep.subr.bf16.mxu0 0
    %2052 = vmatpush1.bf16.msra.mxu0 0
    %2053 = vmatprep.subr.bf16.mxu0 0
    %2054 = vmatpush1.bf16.msra.mxu0 0
    %2055 = vmatprep.subr.bf16.mxu0 0
    %2056 = vmatpush1.bf16.msra.mxu0 0
    %2057 = vmatprep.subr.bf16.mxu0 0
    %2058 = vmatpush1.bf16.msra.mxu0 0
    %2059 = vmatprep.subr.bf16.mxu0 0
    %2060 = vmatpush1.bf16.msra.mxu0 0
    %2061 = vmatprep.mubr.bf16.mxu0 0
    %2062 = vmatmul.mubr.bf16.gmra.mrb[0].mxu0 %v1814
    %v2063 = vpop.f32.mrb[0].mxu0
    %v2064 = vadd.f32 %v1852, %v2063
    %v2065 = vpop.f32.mrb[0].mxu0
    %v2066 = vadd.f32 %v1856, %v2065
    %v2067 = vpop.f32.mrb[0].mxu0
    %v2068 = vpop.f32.mrb[0].mxu0
    %2069 = vdwg.mxu0
    %2070 = vmatprep.subr.bf16.mxu0 %v1968
    %2071 = vmatpush1.bf16.msra.mxu0 %v1967
    %2072 = vmatprep.subr.bf16.mxu0 %v1972
    %2073 = vmatpush1.bf16.msra.mxu0 %v1971
    %2074 = vmatprep.subr.bf16.mxu0 %v1976
    %2075 = vmatpush1.bf16.msra.mxu0 %v1975
    %2076 = vmatprep.subr.bf16.mxu0 %v1980
    %2077 = vmatpush1.bf16.msra.mxu0 %v1979
    %2078 = vmatprep.subr.bf16.mxu0 %v1984
    %2079 = vmatpush1.bf16.msra.mxu0 %v1983
    %2080 = vmatprep.subr.bf16.mxu0 %v1988
    %2081 = vmatpush1.bf16.msra.mxu0 %v1987
    %2082 = vmatprep.subr.bf16.mxu0 %v1992
    %2083 = vmatpush1.bf16.msra.mxu0 %v1991
    %2084 = vmatprep.subr.bf16.mxu0 %v1996
    %2085 = vmatpush1.bf16.msra.mxu0 %v1995
    %2086 = vmatprep.subr.bf16.mxu0 0
    %2087 = vmatpush1.bf16.msra.mxu0 0
    %2088 = vmatprep.subr.bf16.mxu0 0
    %2089 = vmatpush1.bf16.msra.mxu0 0
    %2090 = vmatprep.subr.bf16.mxu0 0
    %2091 = vmatpush1.bf16.msra.mxu0 0
    %2092 = vmatprep.subr.bf16.mxu0 0
    %2093 = vmatpush1.bf16.msra.mxu0 0
    %2094 = vmatprep.subr.bf16.mxu0 0
    %2095 = vmatpush1.bf16.msra.mxu0 0
    %2096 = vmatprep.subr.bf16.mxu0 0
    %2097 = vmatpush1.bf16.msra.mxu0 0
    %2098 = vmatprep.subr.bf16.mxu0 0
    %2099 = vmatpush1.bf16.msra.mxu0 0
    %2100 = vmatprep.subr.bf16.mxu0 0
    %2101 = vmatpush1.bf16.msra.mxu0 0
    %2102 = vmatprep.mubr.bf16.mxu0 0
    %2103 = vmatmul.mubr.bf16.gmra.mrb[0].mxu0 %v1814
    %v2104 = vpop.f32.mrb[0].mxu0
    %v2105 = vadd.f32 %v1860, %v2104
    %v2106 = vpop.f32.mrb[0].mxu0
    %v2107 = vadd.f32 %v1864, %v2106
    %v2108 = vpop.f32.mrb[0].mxu0
    %v2109 = vpop.f32.mrb[0].mxu0
    %2110 = vdwg.mxu0
    %v2111 = vmax.f32 %v2064, 0.0
    %v2112 = vmax.f32 %v2066, 0.0
    %v2113 = vmax.f32 %v2105, 0.0
    %v2114 = vmax.f32 %v2107, 0.0
    %v2115 = vpack.c.bf16 %v2111, %v2111
    %v2116 = vpack.c.bf16 %v2112, %v2112
    %v2117 = vpack.c.bf16 %v2113, %v2113
    %v2118 = vpack.c.bf16 %v2114, %v2114
    %v2119 = vld [vmem:[#allocation16] sm:$0xff]
    %v2120 = vld [vmem:[#allocation16 + $0x8] sm:$0xff]
    %v2121 = vld [vmem:[#allocation16 + $0x10] sm:$0xff]
    %v2122 = vld [vmem:[#allocation16 + $0x18] sm:$0xff]
    %v2123 = vld [vmem:[#allocation16 + $0x20] sm:$0xff]
    %v2124 = vld [vmem:[#allocation16 + $0x28] sm:$0xff]
    %v2125 = vld [vmem:[#allocation16 + $0x30] sm:$0xff]
    %v2126 = vld [vmem:[#allocation16 + $0x38] sm:$0xff]
    %v2127 = vld [vmem:[#allocation16 + $0x40] sm:$0xff]
    %v2128 = vld [vmem:[#allocation16 + $0x48] sm:$0xff]
    %v2129 = vld [vmem:[#allocation16 + $0x50] sm:$0xff]
    %v2130 = vld [vmem:[#allocation16 + $0x58] sm:$0xff]
    %v2131 = vld [vmem:[#allocation16 + $0x60] sm:$0xff]
    %v2132 = vld [vmem:[#allocation16 + $0x68] sm:$0xff]
    %v2133 = vld [vmem:[#allocation16 + $0x70] sm:$0xff]
    %v2134 = vld [vmem:[#allocation16 + $0x78] sm:$0xff]
    %v2135 = vld [vmem:[#allocation16 + $0x80] sm:$0xff]
    %v2136 = vld [vmem:[#allocation16 + $0x88] sm:$0xff]
    %v2137 = vld [vmem:[#allocation16 + $0x90] sm:$0xff]
    %v2138 = vld [vmem:[#allocation16 + $0x98] sm:$0xff]
    %v2139 = vld [vmem:[#allocation16 + $0xa0] sm:$0xff]
    %v2140 = vld [vmem:[#allocation16 + $0xa8] sm:$0xff]
    %v2141 = vld [vmem:[#allocation16 + $0xb0] sm:$0xff]
    %v2142 = vld [vmem:[#allocation16 + $0xb8] sm:$0xff]
    %v2143 = vld [vmem:[#allocation16 + $0xc0] sm:$0xff]
    %v2144 = vld [vmem:[#allocation16 + $0xc8] sm:$0xff]
    %v2145 = vld [vmem:[#allocation16 + $0xd0] sm:$0xff]
    %v2146 = vld [vmem:[#allocation16 + $0xd8] sm:$0xff]
    %v2147 = vld [vmem:[#allocation16 + $0xe0] sm:$0xff]
    %v2148 = vld [vmem:[#allocation16 + $0xe8] sm:$0xff]
    %v2149 = vld [vmem:[#allocation16 + $0xf0] sm:$0xff]
    %v2150 = vld [vmem:[#allocation16 + $0xf8] sm:$0xff]
    %v2151 = vld [vmem:[#allocation16 + $0x100] sm:$0xff]
    %v2152 = vld [vmem:[#allocation16 + $0x108] sm:$0xff]
    %v2153 = vld [vmem:[#allocation16 + $0x110] sm:$0xff]
    %v2154 = vld [vmem:[#allocation16 + $0x118] sm:$0xff]
    %v2155 = vld [vmem:[#allocation16 + $0x120] sm:$0xff]
    %v2156 = vld [vmem:[#allocation16 + $0x128] sm:$0xff]
    %v2157 = vld [vmem:[#allocation16 + $0x130] sm:$0xff]
    %v2158 = vld [vmem:[#allocation16 + $0x138] sm:$0xff]
    %v2159 = vld [vmem:[#allocation16 + $0x140] sm:$0xff]
    %v2160 = vld [vmem:[#allocation16 + $0x148] sm:$0xff]
    %v2161 = vld [vmem:[#allocation16 + $0x150] sm:$0xff]
    %v2162 = vld [vmem:[#allocation16 + $0x158] sm:$0xff]
    %v2163 = vld [vmem:[#allocation16 + $0x160] sm:$0xff]
    %v2164 = vld [vmem:[#allocation16 + $0x168] sm:$0xff]
    %v2165 = vld [vmem:[#allocation16 + $0x170] sm:$0xff]
    %v2166 = vld [vmem:[#allocation16 + $0x178] sm:$0xff]
    %v2167 = vld [vmem:[#allocation16 + $0x180] sm:$0xff]
    %v2168 = vld [vmem:[#allocation16 + $0x188] sm:$0xff]
    %v2169 = vld [vmem:[#allocation16 + $0x190] sm:$0xff]
    %v2170 = vld [vmem:[#allocation16 + $0x198] sm:$0xff]
    %v2171 = vld [vmem:[#allocation16 + $0x1a0] sm:$0xff]
    %v2172 = vld [vmem:[#allocation16 + $0x1a8] sm:$0xff]
    %v2173 = vld [vmem:[#allocation16 + $0x1b0] sm:$0xff]
    %v2174 = vld [vmem:[#allocation16 + $0x1b8] sm:$0xff]
    %v2175 = vld [vmem:[#allocation16 + $0x1c0] sm:$0xff]
    %v2176 = vld [vmem:[#allocation16 + $0x1c8] sm:$0xff]
    %v2177 = vld [vmem:[#allocation16 + $0x1d0] sm:$0xff]
    %v2178 = vld [vmem:[#allocation16 + $0x1d8] sm:$0xff]
    %v2179 = vld [vmem:[#allocation16 + $0x1e0] sm:$0xff]
    %v2180 = vld [vmem:[#allocation16 + $0x1e8] sm:$0xff]
    %v2181 = vld [vmem:[#allocation16 + $0x1f0] sm:$0xff]
    %v2182 = vld [vmem:[#allocation16 + $0x1f8] sm:$0xff]
    %v2183 = vld [vmem:[%s21] sm:$0x3]
    %v2185 = vlaneseq
    %v2186 = vshrl.u32 %v2185, 7
    %v2187 = vsub.s32 0, %v2186
    %v2188 = vrot.slane %v2183, %v2187
    %v2189 = vlaneseq
    %v2190 = vshrl.u32 %v2189, 7
    %v2191 = vsub.s32 1, %v2190
    %v2192 = vrot.slane %v2183, %v2191
    %v2259 = vunpack.c.l.b16 %v2119
    %v2260 = vunpack.c.h.b16 %v2119
    %v2261 = vunpack.c.l.b16 %v2120
    %v2262 = vunpack.c.h.b16 %v2120
    %v2263 = vunpack.c.l.b16 %v2121
    %v2264 = vunpack.c.h.b16 %v2121
    %v2265 = vunpack.c.l.b16 %v2122
    %v2266 = vunpack.c.h.b16 %v2122
    %v2267 = vunpack.c.l.b16 %v2123
    %v2268 = vunpack.c.h.b16 %v2123
    %v2269 = vunpack.c.l.b16 %v2124
    %v2270 = vunpack.c.h.b16 %v2124
    %v2271 = vunpack.c.l.b16 %v2125
    %v2272 = vunpack.c.h.b16 %v2125
    %v2273 = vunpack.c.l.b16 %v2126
    %v2274 = vunpack.c.h.b16 %v2126
    %v2275 = vunpack.c.l.b16 %v2127
    %v2276 = vunpack.c.h.b16 %v2127
    %v2277 = vunpack.c.l.b16 %v2128
    %v2278 = vunpack.c.h.b16 %v2128
    %v2279 = vunpack.c.l.b16 %v2129
    %v2280 = vunpack.c.h.b16 %v2129
    %v2281 = vunpack.c.l.b16 %v2130
    %v2282 = vunpack.c.h.b16 %v2130
    %v2283 = vunpack.c.l.b16 %v2131
    %v2284 = vunpack.c.h.b16 %v2131
    %v2285 = vunpack.c.l.b16 %v2132
    %v2286 = vunpack.c.h.b16 %v2132
    %v2287 = vunpack.c.l.b16 %v2133
    %v2288 = vunpack.c.h.b16 %v2133
    %v2289 = vunpack.c.l.b16 %v2134
    %v2290 = vunpack.c.h.b16 %v2134
    %v2291 = vunpack.c.l.b16 %v2135
    %v2292 = vunpack.c.h.b16 %v2135
    %v2293 = vunpack.c.l.b16 %v2136
    %v2294 = vunpack.c.h.b16 %v2136
    %v2295 = vunpack.c.l.b16 %v2137
    %v2296 = vunpack.c.h.b16 %v2137
    %v2297 = vunpack.c.l.b16 %v2138
    %v2298 = vunpack.c.h.b16 %v2138
    %v2299 = vunpack.c.l.b16 %v2139
    %v2300 = vunpack.c.h.b16 %v2139
    %v2301 = vunpack.c.l.b16 %v2140
    %v2302 = vunpack.c.h.b16 %v2140
    %v2303 = vunpack.c.l.b16 %v2141
    %v2304 = vunpack.c.h.b16 %v2141
    %v2305 = vunpack.c.l.b16 %v2142
    %v2306 = vunpack.c.h.b16 %v2142
    %v2307 = vunpack.c.l.b16 %v2143
    %v2308 = vunpack.c.h.b16 %v2143
    %v2309 = vunpack.c.l.b16 %v2144
    %v2310 = vunpack.c.h.b16 %v2144
    %v2311 = vunpack.c.l.b16 %v2145
    %v2312 = vunpack.c.h.b16 %v2145
    %v2313 = vunpack.c.l.b16 %v2146
    %v2314 = vunpack.c.h.b16 %v2146
    %v2315 = vunpack.c.l.b16 %v2147
    %v2316 = vunpack.c.h.b16 %v2147
    %v2317 = vunpack.c.l.b16 %v2148
    %v2318 = vunpack.c.h.b16 %v2148
    %v2319 = vunpack.c.l.b16 %v2149
    %v2320 = vunpack.c.h.b16 %v2149
    %v2321 = vunpack.c.l.b16 %v2150
    %v2322 = vunpack.c.h.b16 %v2150
    %v2323 = vunpack.c.l.b16 %v2151
    %v2324 = vunpack.c.h.b16 %v2151
    %v2325 = vunpack.c.l.b16 %v2152
    %v2326 = vunpack.c.h.b16 %v2152
    %v2327 = vunpack.c.l.b16 %v2153
    %v2328 = vunpack.c.h.b16 %v2153
    %v2329 = vunpack.c.l.b16 %v2154
    %v2330 = vunpack.c.h.b16 %v2154
    %v2331 = vunpack.c.l.b16 %v2155
    %v2332 = vunpack.c.h.b16 %v2155
    %v2333 = vunpack.c.l.b16 %v2156
    %v2334 = vunpack.c.h.b16 %v2156
    %v2335 = vunpack.c.l.b16 %v2157
    %v2336 = vunpack.c.h.b16 %v2157
    %v2337 = vunpack.c.l.b16 %v2158
    %v2338 = vunpack.c.h.b16 %v2158
    %v2339 = vunpack.c.l.b16 %v2159
    %v2340 = vunpack.c.h.b16 %v2159
    %v2341 = vunpack.c.l.b16 %v2160
    %v2342 = vunpack.c.h.b16 %v2160
    %v2343 = vunpack.c.l.b16 %v2161
    %v2344 = vunpack.c.h.b16 %v2161
    %v2345 = vunpack.c.l.b16 %v2162
    %v2346 = vunpack.c.h.b16 %v2162
    %v2347 = vunpack.c.l.b16 %v2163
    %v2348 = vunpack.c.h.b16 %v2163
    %v2349 = vunpack.c.l.b16 %v2164
    %v2350 = vunpack.c.h.b16 %v2164
    %v2351 = vunpack.c.l.b16 %v2165
    %v2352 = vunpack.c.h.b16 %v2165
    %v2353 = vunpack.c.l.b16 %v2166
    %v2354 = vunpack.c.h.b16 %v2166
    %v2355 = vunpack.c.l.b16 %v2167
    %v2356 = vunpack.c.h.b16 %v2167
    %v2357 = vunpack.c.l.b16 %v2168
    %v2358 = vunpack.c.h.b16 %v2168
    %v2359 = vunpack.c.l.b16 %v2169
    %v2360 = vunpack.c.h.b16 %v2169
    %v2361 = vunpack.c.l.b16 %v2170
    %v2362 = vunpack.c.h.b16 %v2170
    %v2363 = vunpack.c.l.b16 %v2171
    %v2364 = vunpack.c.h.b16 %v2171
    %v2365 = vunpack.c.l.b16 %v2172
    %v2366 = vunpack.c.h.b16 %v2172
    %v2367 = vunpack.c.l.b16 %v2173
    %v2368 = vunpack.c.h.b16 %v2173
    %v2369 = vunpack.c.l.b16 %v2174
    %v2370 = vunpack.c.h.b16 %v2174
    %v2371 = vunpack.c.l.b16 %v2175
    %v2372 = vunpack.c.h.b16 %v2175
    %v2373 = vunpack.c.l.b16 %v2176
    %v2374 = vunpack.c.h.b16 %v2176
    %v2375 = vunpack.c.l.b16 %v2177
    %v2376 = vunpack.c.h.b16 %v2177
    %v2377 = vunpack.c.l.b16 %v2178
    %v2378 = vunpack.c.h.b16 %v2178
    %v2379 = vunpack.c.l.b16 %v2179
    %v2380 = vunpack.c.h.b16 %v2179
    %v2381 = vunpack.c.l.b16 %v2180
    %v2382 = vunpack.c.h.b16 %v2180
    %v2383 = vunpack.c.l.b16 %v2181
    %v2384 = vunpack.c.h.b16 %v2181
    %v2385 = vunpack.c.l.b16 %v2182
    %v2386 = vunpack.c.h.b16 %v2182
    %v2387 = vpack.c.b16 %v2261, %v2259
    %v2388 = vpack.c.b16 %v2262, %v2260
    %v2389 = vpack.c.b16 %v2265, %v2263
    %v2390 = vpack.c.b16 %v2266, %v2264
    %v2391 = vpack.c.b16 %v2269, %v2267
    %v2392 = vpack.c.b16 %v2270, %v2268
    %v2393 = vpack.c.b16 %v2273, %v2271
    %v2394 = vpack.c.b16 %v2274, %v2272
    %v2395 = vpack.c.b16 %v2277, %v2275
    %v2396 = vpack.c.b16 %v2278, %v2276
    %v2397 = vpack.c.b16 %v2281, %v2279
    %v2398 = vpack.c.b16 %v2282, %v2280
    %v2399 = vpack.c.b16 %v2285, %v2283
    %v2400 = vpack.c.b16 %v2286, %v2284
    %v2401 = vpack.c.b16 %v2289, %v2287
    %v2402 = vpack.c.b16 %v2290, %v2288
    %v2403 = vpack.c.b16 %v2293, %v2291
    %v2404 = vpack.c.b16 %v2294, %v2292
    %v2405 = vpack.c.b16 %v2297, %v2295
    %v2406 = vpack.c.b16 %v2298, %v2296
    %v2407 = vpack.c.b16 %v2301, %v2299
    %v2408 = vpack.c.b16 %v2302, %v2300
    %v2409 = vpack.c.b16 %v2305, %v2303
    %v2410 = vpack.c.b16 %v2306, %v2304
    %v2411 = vpack.c.b16 %v2309, %v2307
    %v2412 = vpack.c.b16 %v2310, %v2308
    %v2413 = vpack.c.b16 %v2313, %v2311
    %v2414 = vpack.c.b16 %v2314, %v2312
    %v2415 = vpack.c.b16 %v2317, %v2315
    %v2416 = vpack.c.b16 %v2318, %v2316
    %v2417 = vpack.c.b16 %v2321, %v2319
    %v2418 = vpack.c.b16 %v2322, %v2320
    %v2419 = vpack.c.b16 %v2325, %v2323
    %v2420 = vpack.c.b16 %v2326, %v2324
    %v2421 = vpack.c.b16 %v2329, %v2327
    %v2422 = vpack.c.b16 %v2330, %v2328
    %v2423 = vpack.c.b16 %v2333, %v2331
    %v2424 = vpack.c.b16 %v2334, %v2332
    %v2425 = vpack.c.b16 %v2337, %v2335
    %v2426 = vpack.c.b16 %v2338, %v2336
    %v2427 = vpack.c.b16 %v2341, %v2339
    %v2428 = vpack.c.b16 %v2342, %v2340
    %v2429 = vpack.c.b16 %v2345, %v2343
    %v2430 = vpack.c.b16 %v2346, %v2344
    %v2431 = vpack.c.b16 %v2349, %v2347
    %v2432 = vpack.c.b16 %v2350, %v2348
    %v2433 = vpack.c.b16 %v2353, %v2351
    %v2434 = vpack.c.b16 %v2354, %v2352
    %v2435 = vpack.c.b16 %v2357, %v2355
    %v2436 = vpack.c.b16 %v2358, %v2356
    %v2437 = vpack.c.b16 %v2361, %v2359
    %v2438 = vpack.c.b16 %v2362, %v2360
    %v2439 = vpack.c.b16 %v2365, %v2363
    %v2440 = vpack.c.b16 %v2366, %v2364
    %v2441 = vpack.c.b16 %v2369, %v2367
    %v2442 = vpack.c.b16 %v2370, %v2368
    %v2443 = vpack.c.b16 %v2373, %v2371
    %v2444 = vpack.c.b16 %v2374, %v2372
    %v2445 = vpack.c.b16 %v2377, %v2375
    %v2446 = vpack.c.b16 %v2378, %v2376
    %v2447 = vpack.c.b16 %v2381, %v2379
    %v2448 = vpack.c.b16 %v2382, %v2380
    %v2449 = vpack.c.b16 %v2385, %v2383
    %v2450 = vpack.c.b16 %v2386, %v2384
    %2515 = vmatprep.subr.bf16.mxu0 %v2388
    %2516 = vmatpush1.bf16.msra.mxu0 %v2387
    %2517 = vmatprep.subr.bf16.mxu0 %v2390
    %2518 = vmatpush1.bf16.msra.mxu0 %v2389
    %2519 = vmatprep.subr.bf16.mxu0 %v2392
    %2520 = vmatpush1.bf16.msra.mxu0 %v2391
    %2521 = vmatprep.subr.bf16.mxu0 %v2394
    %2522 = vmatpush1.bf16.msra.mxu0 %v2393
    %2523 = vmatprep.subr.bf16.mxu0 %v2396
    %2524 = vmatpush1.bf16.msra.mxu0 %v2395
    %2525 = vmatprep.subr.bf16.mxu0 %v2398
    %2526 = vmatpush1.bf16.msra.mxu0 %v2397
    %2527 = vmatprep.subr.bf16.mxu0 %v2400
    %2528 = vmatpush1.bf16.msra.mxu0 %v2399
    %2529 = vmatprep.subr.bf16.mxu0 %v2402
    %2530 = vmatpush1.bf16.msra.mxu0 %v2401
    %2531 = vmatprep.subr.bf16.mxu0 %v2404
    %2532 = vmatpush1.bf16.msra.mxu0 %v2403
    %2533 = vmatprep.subr.bf16.mxu0 %v2406
    %2534 = vmatpush1.bf16.msra.mxu0 %v2405
    %2535 = vmatprep.subr.bf16.mxu0 %v2408
    %2536 = vmatpush1.bf16.msra.mxu0 %v2407
    %2537 = vmatprep.subr.bf16.mxu0 %v2410
    %2538 = vmatpush1.bf16.msra.mxu0 %v2409
    %2539 = vmatprep.subr.bf16.mxu0 %v2412
    %2540 = vmatpush1.bf16.msra.mxu0 %v2411
    %2541 = vmatprep.subr.bf16.mxu0 %v2414
    %2542 = vmatpush1.bf16.msra.mxu0 %v2413
    %2543 = vmatprep.subr.bf16.mxu0 %v2416
    %2544 = vmatpush1.bf16.msra.mxu0 %v2415
    %2545 = vmatprep.subr.bf16.mxu0 %v2418
    %2546 = vmatpush1.bf16.msra.mxu0 %v2417
    %2547 = vmatprep.mubr.bf16.mxu0 %v2116
    %2548 = vmatmul.mubr.bf16.gmra.mrb[0].mxu0 %v2115
    %v2549 = vpop.f32.mrb[0].mxu0
    %v2550 = vadd.f32 %v2188, %v2549
    %v2551 = vpop.f32.mrb[0].mxu0
    %v2552 = vadd.f32 %v2192, %v2551
    %v2553 = vpop.f32.mrb[0].mxu0
    %v2554 = vpop.f32.mrb[0].mxu0
    %2555 = vdwg.mxu0
    %2556 = vmatprep.subr.bf16.mxu0 %v2420
    %2557 = vmatpush1.bf16.msra.mxu0 %v2419
    %2558 = vmatprep.subr.bf16.mxu0 %v2422
    %2559 = vmatpush1.bf16.msra.mxu0 %v2421
    %2560 = vmatprep.subr.bf16.mxu0 %v2424
    %2561 = vmatpush1.bf16.msra.mxu0 %v2423
    %2562 = vmatprep.subr.bf16.mxu0 %v2426
    %2563 = vmatpush1.bf16.msra.mxu0 %v2425
    %2564 = vmatprep.subr.bf16.mxu0 %v2428
    %2565 = vmatpush1.bf16.msra.mxu0 %v2427
    %2566 = vmatprep.subr.bf16.mxu0 %v2430
    %2567 = vmatpush1.bf16.msra.mxu0 %v2429
    %2568 = vmatprep.subr.bf16.mxu0 %v2432
    %2569 = vmatpush1.bf16.msra.mxu0 %v2431
    %2570 = vmatprep.subr.bf16.mxu0 %v2434
    %2571 = vmatpush1.bf16.msra.mxu0 %v2433
    %2572 = vmatprep.subr.bf16.mxu0 %v2436
    %2573 = vmatpush1.bf16.msra.mxu0 %v2435
    %2574 = vmatprep.subr.bf16.mxu0 %v2438
    %2575 = vmatpush1.bf16.msra.mxu0 %v2437
    %2576 = vmatprep.subr.bf16.mxu0 %v2440
    %2577 = vmatpush1.bf16.msra.mxu0 %v2439
    %2578 = vmatprep.subr.bf16.mxu0 %v2442
    %2579 = vmatpush1.bf16.msra.mxu0 %v2441
    %2580 = vmatprep.subr.bf16.mxu0 %v2444
    %2581 = vmatpush1.bf16.msra.mxu0 %v2443
    %2582 = vmatprep.subr.bf16.mxu0 %v2446
    %2583 = vmatpush1.bf16.msra.mxu0 %v2445
    %2584 = vmatprep.subr.bf16.mxu0 %v2448
    %2585 = vmatpush1.bf16.msra.mxu0 %v2447
    %2586 = vmatprep.subr.bf16.mxu0 %v2450
    %2587 = vmatpush1.bf16.msra.mxu0 %v2449
    %2588 = vmatprep.mubr.bf16.mxu0 %v2118
    %2589 = vmatmul.mubr.bf16.gmra.mrb[0].mxu0 %v2117
    %v2590 = vpop.f32.mrb[0].mxu0
    %v2591 = vadd.f32 %v2550, %v2590
    %v2592 = vpop.f32.mrb[0].mxu0
    %v2593 = vadd.f32 %v2552, %v2592
    %v2594 = vpop.f32.mrb[0].mxu0
    %v2595 = vpop.f32.mrb[0].mxu0
    %2596 = vdwg.mxu0
    %v2597 = vmax.f32 %v2591, 0.0
    %v2598 = vmax.f32 %v2593, 0.0
    %v2599 = vpack.c.bf16 %v2597, %v2597
    %v2600 = vpack.c.bf16 %v2598, %v2598
    %v2601 = vld [vmem:[#allocation17] sm:$0xf]
    %v2602 = vld [vmem:[#allocation17 + $0x4] sm:$0xf]
    %v2603 = vld [vmem:[#allocation17 + $0x8] sm:$0xf]
    %v2604 = vld [vmem:[#allocation17 + $0xc] sm:$0xf]
    %v2605 = vld [vmem:[#allocation17 + $0x10] sm:$0xf]
    %v2606 = vld [vmem:[#allocation17 + $0x14] sm:$0xf]
    %v2607 = vld [vmem:[#allocation17 + $0x18] sm:$0xf]
    %v2608 = vld [vmem:[#allocation17 + $0x1c] sm:$0xf]
    %v2609 = vld [vmem:[#allocation17 + $0x20] sm:$0xf]
    %v2610 = vld [vmem:[#allocation17 + $0x24] sm:$0xf]
    %v2611 = vld [vmem:[#allocation17 + $0x28] sm:$0xf]
    %v2612 = vld [vmem:[#allocation17 + $0x2c] sm:$0xf]
    %v2613 = vld [vmem:[#allocation17 + $0x30] sm:$0xf]
    %v2614 = vld [vmem:[#allocation17 + $0x34] sm:$0xf]
    %v2615 = vld [vmem:[#allocation17 + $0x38] sm:$0xf]
    %v2616 = vld [vmem:[#allocation17 + $0x3c] sm:$0xf]
    %v2617 = vld [vmem:[#allocation17 + $0x40] sm:$0xf]
    %v2618 = vld [vmem:[#allocation17 + $0x44] sm:$0xf]
    %v2619 = vld [vmem:[#allocation17 + $0x48] sm:$0xf]
    %v2620 = vld [vmem:[#allocation17 + $0x4c] sm:$0xf]
    %v2621 = vld [vmem:[#allocation17 + $0x50] sm:$0xf]
    %v2622 = vld [vmem:[#allocation17 + $0x54] sm:$0xf]
    %v2623 = vld [vmem:[#allocation17 + $0x58] sm:$0xf]
    %v2624 = vld [vmem:[#allocation17 + $0x5c] sm:$0xf]
    %v2625 = vld [vmem:[#allocation17 + $0x60] sm:$0xf]
    %v2626 = vld [vmem:[#allocation17 + $0x64] sm:$0xf]
    %v2627 = vld [vmem:[#allocation17 + $0x68] sm:$0xf]
    %v2628 = vld [vmem:[#allocation17 + $0x6c] sm:$0xf]
    %v2629 = vld [vmem:[#allocation17 + $0x70] sm:$0xf]
    %v2630 = vld [vmem:[#allocation17 + $0x74] sm:$0xf]
    %v2631 = vld [vmem:[#allocation17 + $0x78] sm:$0xf]
    %v2632 = vld [vmem:[#allocation17 + $0x7c] sm:$0xf]
    %v2633 = vld [vmem:[%s23] sm:$0x1]
    %v2635 = vlaneseq
    %v2636 = vshrl.u32 %v2635, 7
    %v2637 = vsub.s32 0, %v2636
    %v2638 = vrot.slane %v2633, %v2637
    %v2672 = vunpack.c.l.b16 %v2601
    %v2673 = vunpack.c.l.b16 %v2602
    %v2674 = vunpack.c.l.b16 %v2603
    %v2675 = vunpack.c.l.b16 %v2604
    %v2676 = vunpack.c.l.b16 %v2605
    %v2677 = vunpack.c.l.b16 %v2606
    %v2678 = vunpack.c.l.b16 %v2607
    %v2679 = vunpack.c.l.b16 %v2608
    %v2680 = vunpack.c.l.b16 %v2609
    %v2681 = vunpack.c.l.b16 %v2610
    %v2682 = vunpack.c.l.b16 %v2611
    %v2683 = vunpack.c.l.b16 %v2612
    %v2684 = vunpack.c.l.b16 %v2613
    %v2685 = vunpack.c.l.b16 %v2614
    %v2686 = vunpack.c.l.b16 %v2615
    %v2687 = vunpack.c.l.b16 %v2616
    %v2688 = vunpack.c.l.b16 %v2617
    %v2689 = vunpack.c.l.b16 %v2618
    %v2690 = vunpack.c.l.b16 %v2619
    %v2691 = vunpack.c.l.b16 %v2620
    %v2692 = vunpack.c.l.b16 %v2621
    %v2693 = vunpack.c.l.b16 %v2622
    %v2694 = vunpack.c.l.b16 %v2623
    %v2695 = vunpack.c.l.b16 %v2624
    %v2696 = vunpack.c.l.b16 %v2625
    %v2697 = vunpack.c.l.b16 %v2626
    %v2698 = vunpack.c.l.b16 %v2627
    %v2699 = vunpack.c.l.b16 %v2628
    %v2700 = vunpack.c.l.b16 %v2629
    %v2701 = vunpack.c.l.b16 %v2630
    %v2702 = vunpack.c.l.b16 %v2631
    %v2703 = vunpack.c.l.b16 %v2632
    %v2704 = vpack.c.b16 %v2673, %v2672
    %v2705 = vpack.c.b16 %v2675, %v2674
    %v2706 = vpack.c.b16 %v2677, %v2676
    %v2707 = vpack.c.b16 %v2679, %v2678
    %v2708 = vpack.c.b16 %v2681, %v2680
    %v2709 = vpack.c.b16 %v2683, %v2682
    %v2710 = vpack.c.b16 %v2685, %v2684
    %v2711 = vpack.c.b16 %v2687, %v2686
    %v2712 = vpack.c.b16 %v2689, %v2688
    %v2713 = vpack.c.b16 %v2691, %v2690
    %v2714 = vpack.c.b16 %v2693, %v2692
    %v2715 = vpack.c.b16 %v2695, %v2694
    %v2716 = vpack.c.b16 %v2697, %v2696
    %v2717 = vpack.c.b16 %v2699, %v2698
    %v2718 = vpack.c.b16 %v2701, %v2700
    %v2719 = vpack.c.b16 %v2703, %v2702
    %2736 = vmatprep.subr.bf16.mxu0 0
    %2737 = vmatpush1.bf16.msra.mxu0 %v2704
    %2738 = vmatprep.subr.bf16.mxu0 0
    %2739 = vmatpush1.bf16.msra.mxu0 %v2705
    %2740 = vmatprep.subr.bf16.mxu0 0
    %2741 = vmatpush1.bf16.msra.mxu0 %v2706
    %2742 = vmatprep.subr.bf16.mxu0 0
    %2743 = vmatpush1.bf16.msra.mxu0 %v2707
    %2744 = vmatprep.subr.bf16.mxu0 0
    %2745 = vmatpush1.bf16.msra.mxu0 %v2708
    %2746 = vmatprep.subr.bf16.mxu0 0
    %2747 = vmatpush1.bf16.msra.mxu0 %v2709
    %2748 = vmatprep.subr.bf16.mxu0 0
    %2749 = vmatpush1.bf16.msra.mxu0 %v2710
    %2750 = vmatprep.subr.bf16.mxu0 0
    %2751 = vmatpush1.bf16.msra.mxu0 %v2711
    %2752 = vmatprep.subr.bf16.mxu0 0
    %2753 = vmatpush1.bf16.msra.mxu0 %v2712
    %2754 = vmatprep.subr.bf16.mxu0 0
    %2755 = vmatpush1.bf16.msra.mxu0 %v2713
    %2756 = vmatprep.subr.bf16.mxu0 0
    %2757 = vmatpush1.bf16.msra.mxu0 %v2714
    %2758 = vmatprep.subr.bf16.mxu0 0
    %2759 = vmatpush1.bf16.msra.mxu0 %v2715
    %2760 = vmatprep.subr.bf16.mxu0 0
    %2761 = vmatpush1.bf16.msra.mxu0 %v2716
    %2762 = vmatprep.subr.bf16.mxu0 0
    %2763 = vmatpush1.bf16.msra.mxu0 %v2717
    %2764 = vmatprep.subr.bf16.mxu0 0
    %2765 = vmatpush1.bf16.msra.mxu0 %v2718
    %2766 = vmatprep.subr.bf16.mxu0 0
    %2767 = vmatpush1.bf16.msra.mxu0 %v2719
    %2768 = vmatprep.mubr.bf16.mxu0 %v2600
    %2769 = vmatmul.mubr.bf16.gmra.mrb[0].mxu0 %v2599
    %v2770 = vpop.f32.mrb[0].mxu0
    %v2771 = vadd.f32 %v2638, %v2770
    %v2772 = vpop.f32.mrb[0].mxu0
    %v2773 = vpop.f32.mrb[0].mxu0
    %v2774 = vpop.f32.mrb[0].mxu0
    %2775 = vdwg.mxu0
    %v2776 = vmax.f32 %v2771, 0.0
    %v2777 = vpack.c.bf16 %v2776, %v2776
    %v2778 = vld [vmem:[%s24] sm:$0xf]
    %v2779 = vld [vmem:[%s24 + $0x4] sm:$0xf]
    %v2780 = vld [vmem:[%s24 + $0x8] sm:$0xf]
    %v2781 = vld [vmem:[%s24 + $0xc] sm:$0xf]
    %v2782 = vld [vmem:[%s24 + $0x10] sm:$0xf]
    %v2783 = vld [vmem:[%s24 + $0x14] sm:$0xf]
    %v2784 = vld [vmem:[%s24 + $0x18] sm:$0xf]
    %v2785 = vld [vmem:[%s24 + $0x1c] sm:$0xf]
    %v2786 = vld [vmem:[%s24 + $0x20] sm:$0xf]
    %v2787 = vld [vmem:[%s24 + $0x24] sm:$0xf]
    %v2788 = vld [vmem:[%s24 + $0x28] sm:$0xf]
    %v2789 = vld [vmem:[%s24 + $0x2c] sm:$0xf]
    %v2790 = vld [vmem:[%s24 + $0x30] sm:$0xf]
    %v2791 = vld [vmem:[%s24 + $0x34] sm:$0xf]
    %v2792 = vld [vmem:[%s24 + $0x38] sm:$0xf]
    %v2793 = vld [vmem:[%s24 + $0x3c] sm:$0xf]
    %v2794 = vld [vmem:[%s25] sm:$0x1]
    %v2796 = vlaneseq
    %v2797 = vshrl.u32 %v2796, 7
    %v2798 = vsub.s32 0, %v2797
    %v2799 = vrot.slane %v2794, %v2798
    %v2817 = vunpack.c.l.b16 %v2778
    %v2818 = vunpack.c.l.b16 %v2779
    %v2819 = vunpack.c.l.b16 %v2780
    %v2820 = vunpack.c.l.b16 %v2781
    %v2821 = vunpack.c.l.b16 %v2782
    %v2822 = vunpack.c.l.b16 %v2783
    %v2823 = vunpack.c.l.b16 %v2784
    %v2824 = vunpack.c.l.b16 %v2785
    %v2825 = vunpack.c.l.b16 %v2786
    %v2826 = vunpack.c.l.b16 %v2787
    %v2827 = vunpack.c.l.b16 %v2788
    %v2828 = vunpack.c.l.b16 %v2789
    %v2829 = vunpack.c.l.b16 %v2790
    %v2830 = vunpack.c.l.b16 %v2791
    %v2831 = vunpack.c.l.b16 %v2792
    %v2832 = vunpack.c.l.b16 %v2793
    %v2833 = vpack.c.b16 %v2818, %v2817
    %v2834 = vpack.c.b16 %v2820, %v2819
    %v2835 = vpack.c.b16 %v2822, %v2821
    %v2836 = vpack.c.b16 %v2824, %v2823
    %v2837 = vpack.c.b16 %v2826, %v2825
    %v2838 = vpack.c.b16 %v2828, %v2827
    %v2839 = vpack.c.b16 %v2830, %v2829
    %v2840 = vpack.c.b16 %v2832, %v2831
    %2849 = vmatprep.subr.bf16.mxu0 0
    %2850 = vmatpush1.bf16.msra.mxu0 %v2833
    %2851 = vmatprep.subr.bf16.mxu0 0
    %2852 = vmatpush1.bf16.msra.mxu0 %v2834
    %2853 = vmatprep.subr.bf16.mxu0 0
    %2854 = vmatpush1.bf16.msra.mxu0 %v2835
    %2855 = vmatprep.subr.bf16.mxu0 0
    %2856 = vmatpush1.bf16.msra.mxu0 %v2836
    %2857 = vmatprep.subr.bf16.mxu0 0
    %2858 = vmatpush1.bf16.msra.mxu0 %v2837
    %2859 = vmatprep.subr.bf16.mxu0 0
    %2860 = vmatpush1.bf16.msra.mxu0 %v2838
    %2861 = vmatprep.subr.bf16.mxu0 0
    %2862 = vmatpush1.bf16.msra.mxu0 %v2839
    %2863 = vmatprep.subr.bf16.mxu0 0
    %2864 = vmatpush1.bf16.msra.mxu0 %v2840
    %2865 = vmatprep.subr.bf16.mxu0 0
    %2866 = vmatpush1.bf16.msra.mxu0 0
    %2867 = vmatprep.subr.bf16.mxu0 0
    %2868 = vmatpush1.bf16.msra.mxu0 0
    %2869 = vmatprep.subr.bf16.mxu0 0
    %2870 = vmatpush1.bf16.msra.mxu0 0
    %2871 = vmatprep.subr.bf16.mxu0 0
    %2872 = vmatpush1.bf16.msra.mxu0 0
    %2873 = vmatprep.subr.bf16.mxu0 0
    %2874 = vmatpush1.bf16.msra.mxu0 0
    %2875 = vmatprep.subr.bf16.mxu0 0
    %2876 = vmatpush1.bf16.msra.mxu0 0
    %2877 = vmatprep.subr.bf16.mxu0 0
    %2878 = vmatpush1.bf16.msra.mxu0 0
    %2879 = vmatprep.subr.bf16.mxu0 0
    %2880 = vmatpush1.bf16.msra.mxu0 0
    %2881 = vmatprep.mubr.bf16.mxu0 0
    %2882 = vmatmul.mubr.bf16.gmra.mrb[0].mxu0 %v2777
    %v2883 = vpop.f32.mrb[0].mxu0
    %v2884 = vadd.f32 %v2799, %v2883
    %v2885 = vpop.f32.mrb[0].mxu0
    %v2886 = vpop.f32.mrb[0].mxu0
    %v2887 = vpop.f32.mrb[0].mxu0
    %2888 = vdwg.mxu0
    %v2889 = vmax.f32 %v2884, 0.0
    %v2890 = vpack.c.bf16 %v2889, %v2889
    %v2891 = vld [vmem:[#allocation19] sm:$0xf]
    %v2892 = vld [vmem:[#allocation19 + $0x4] sm:$0xf]
    %v2893 = vld [vmem:[#allocation19 + $0x8] sm:$0xf]
    %v2894 = vld [vmem:[#allocation19 + $0xc] sm:$0xf]
    %v2895 = vld [vmem:[#allocation19 + $0x10] sm:$0xf]
    %v2896 = vld [vmem:[#allocation19 + $0x14] sm:$0xf]
    %v2897 = vld [vmem:[#allocation19 + $0x18] sm:$0xf]
    %v2898 = vld [vmem:[#allocation19 + $0x1c] sm:$0xf]
    %v2899 = vld [vmem:[#allocation19 + $0x20] sm:$0xf]
    %v2900 = vld [vmem:[#allocation19 + $0x24] sm:$0xf]
    %v2901 = vld [vmem:[#allocation19 + $0x28] sm:$0xf]
    %v2902 = vld [vmem:[#allocation19 + $0x2c] sm:$0xf]
    %v2903 = vld [vmem:[#allocation19 + $0x30] sm:$0xf]
    %v2904 = vld [vmem:[#allocation19 + $0x34] sm:$0xf]
    %v2905 = vld [vmem:[#allocation19 + $0x38] sm:$0xf]
    %v2906 = vld [vmem:[#allocation19 + $0x3c] sm:$0xf]
    %v2907 = vld [vmem:[%s27] sm:$0x1]
    %v2909 = vlaneseq
    %v2910 = vshrl.u32 %v2909, 7
    %v2911 = vsub.s32 0, %v2910
    %v2912 = vrot.slane %v2907, %v2911
    %v2930 = vunpack.c.l.b16 %v2891
    %v2931 = vunpack.c.l.b16 %v2892
    %v2932 = vunpack.c.l.b16 %v2893
    %v2933 = vunpack.c.l.b16 %v2894
    %v2934 = vunpack.c.l.b16 %v2895
    %v2935 = vunpack.c.l.b16 %v2896
    %v2936 = vunpack.c.l.b16 %v2897
    %v2937 = vunpack.c.l.b16 %v2898
    %v2938 = vunpack.c.l.b16 %v2899
    %v2939 = vunpack.c.l.b16 %v2900
    %v2940 = vunpack.c.l.b16 %v2901
    %v2941 = vunpack.c.l.b16 %v2902
    %v2942 = vunpack.c.l.b16 %v2903
    %v2943 = vunpack.c.l.b16 %v2904
    %v2944 = vunpack.c.l.b16 %v2905
    %v2945 = vunpack.c.l.b16 %v2906
    %v2946 = vpack.c.b16 %v2931, %v2930
    %v2947 = vpack.c.b16 %v2933, %v2932
    %v2948 = vpack.c.b16 %v2935, %v2934
    %v2949 = vpack.c.b16 %v2937, %v2936
    %v2950 = vpack.c.b16 %v2939, %v2938
    %v2951 = vpack.c.b16 %v2941, %v2940
    %v2952 = vpack.c.b16 %v2943, %v2942
    %v2953 = vpack.c.b16 %v2945, %v2944
    %2962 = vmatprep.subr.bf16.mxu0 0
    %2963 = vmatpush1.bf16.msra.mxu0 %v2946
    %2964 = vmatprep.subr.bf16.mxu0 0
    %2965 = vmatpush1.bf16.msra.mxu0 %v2947
    %2966 = vmatprep.subr.bf16.mxu0 0
    %2967 = vmatpush1.bf16.msra.mxu0 %v2948
    %2968 = vmatprep.subr.bf16.mxu0 0
    %2969 = vmatpush1.bf16.msra.mxu0 %v2949
    %2970 = vmatprep.subr.bf16.mxu0 0
    %2971 = vmatpush1.bf16.msra.mxu0 %v2950
    %2972 = vmatprep.subr.bf16.mxu0 0
    %2973 = vmatpush1.bf16.msra.mxu0 %v2951
    %2974 = vmatprep.subr.bf16.mxu0 0
    %2975 = vmatpush1.bf16.msra.mxu0 %v2952
    %2976 = vmatprep.subr.bf16.mxu0 0
    %2977 = vmatpush1.bf16.msra.mxu0 %v2953
    %2978 = vmatprep.subr.bf16.mxu0 0
    %2979 = vmatpush1.bf16.msra.mxu0 0
    %2980 = vmatprep.subr.bf16.mxu0 0
    %2981 = vmatpush1.bf16.msra.mxu0 0
    %2982 = vmatprep.subr.bf16.mxu0 0
    %2983 = vmatpush1.bf16.msra.mxu0 0
    %2984 = vmatprep.subr.bf16.mxu0 0
    %2985 = vmatpush1.bf16.msra.mxu0 0
    %2986 = vmatprep.subr.bf16.mxu0 0
    %2987 = vmatpush1.bf16.msra.mxu0 0
    %2988 = vmatprep.subr.bf16.mxu0 0
    %2989 = vmatpush1.bf16.msra.mxu0 0
    %2990 = vmatprep.subr.bf16.mxu0 0
    %2991 = vmatpush1.bf16.msra.mxu0 0
    %2992 = vmatprep.subr.bf16.mxu0 0
    %2993 = vmatpush1.bf16.msra.mxu0 0
    %2994 = vmatprep.mubr.bf16.mxu0 0
    %2995 = vmatmul.mubr.bf16.gmra.mrb[0].mxu0 %v2890
    %v2996 = vpop.f32.mrb[0].mxu0
    %v2997 = vadd.f32 %v2912, %v2996
    %v2998 = vpop.f32.mrb[0].mxu0
    %v2999 = vpop.f32.mrb[0].mxu0
    %v3000 = vpop.f32.mrb[0].mxu0
    %3001 = vdwg.mxu0
    %v3002 = vsub.f32 0.0, %v2997
    %v3003 = vmul.f32 %v3002, 1.442695
    %v3004 = vpow.pop %v3003
    %v3005 = vadd.f32 %v3004, 1.0
    %v3006 = vrcp.pop %v3005
    %3007 = vst [vmem:[#allocation20] sm:$0x3] %v3006
    // Predicated region
    $region158: #{tpu_custom_call.1} parent=1 // pred_check
      _
    $region159: #{tpu_custom_call.1} parent=1 // pred_check_branch
      %3009 = sbr.rel (0) target = $region161
    $region160: #{tpu_custom_call.1} parent=1 // pred_region
      %s3011 = ssub.s32 32, 32
      %3012 = vsyncadd [#allocation4], %s3011
      %s3014 = sshll.u32 [#allocation20], 4
      %s3015 = int_to_ptr.vmem [resolvable:$true] %s3014
      %3017 = dma.vmem_to_hbm [thread:$0]  %s3015, 32, %s28, [#allocation4]
    $region161: #{tpu_custom_call.1} parent=1 // pred_fallthru
      _
    // Predicated region
    $region162: #{tpu_custom_call.1} parent=1 // pred_check
      _
    $region163: #{tpu_custom_call.1} parent=1 // pred_check_branch
      %3019 = sbr.rel (0) target = $region165
    $region164: #{tpu_custom_call.1} parent=1 // pred_region
      %3020 = dma.done [#allocation4], 32
    $region165: #{tpu_custom_call.1} parent=1 // pred_fallthru
      _
    %3021 = vsyncpa [#allocation3], 1
    %3022 = vsyncpa [#allocation6], 1
    %3023 = vsyncpa [#allocation9], 1
    %3024 = vsyncpa [#allocation12], 1
    %3025 = vsyncpa [#allocation15], 1
    %3026 = vsyncpa [#allocation18], 1
    %3027 = vsyncpa [#allocation4], 1

</llo_original>
